<compile_context>
chip_gen: v7x
topology: tpu7x:2x2x1
jax: 0.10.0
libtpu: 0.0.40
codegen_flags: <defaults>
</compile_context>

<pallas_src>
import math

import jax
import jax.numpy as jnp
import numpy as np
from jax.experimental import pallas as pl
from jax.experimental.pallas import tpu as pltpu


# ----------------------------------------------------------------------------
# Pallas kernel: encoder layer + decoder head for a (Bt, S, E) batch tile.
# ----------------------------------------------------------------------------
def make_kernel(Bt, S, d_model, nhead, out_pad, compute_dtype, eps=1e-5):
    E = d_model
    H = nhead
    Dh = E // H
    R = Bt * S                                         # rows per grid step

    def kernel(x_ref,                                  # (Bt, S, E)
               wqkv_ref, bqkv_ref,                     # (E, 3E), (1, 3E)  (Q cols pre-scaled by 1/sqrt(Dh))
               wo_ref, bo_ref,                         # (E, E),  (1, E)
               w1_ref, b1_ref,                         # (E, F),  (1, F)
               w2_ref, b2_ref,                         # (F, E),  (1, E)
               g1_ref, be1_ref,                        # (1, E),  (1, E)
               g2_ref, be2_ref,                        # (1, E),  (1, E)
               wd_ref, bd_ref,                         # (E, out_pad), (1, out_pad)
               out_ref):                               # (Bt, S, out_pad)
        x = x_ref[...].reshape(R, E).astype(jnp.float32)          # (R, E)

        # --- fused QKV projection over all rows in the batch tile ------------
        qkv = jnp.dot(x.astype(compute_dtype), wqkv_ref[...],
                      preferred_element_type=jnp.float32) + bqkv_ref[...]
        qkv3 = qkv.reshape(Bt, S, 3 * E)                           # (Bt, S, 3E)

        # --- multi-head self-attention, batched over the Bt batch elements ---
        head_outs = []
        for h in range(H):                                         # static, H is tiny
            qh = qkv3[:, :, 0 * E + h * Dh:0 * E + (h + 1) * Dh].astype(compute_dtype)
            kh = qkv3[:, :, 1 * E + h * Dh:1 * E + (h + 1) * Dh].astype(compute_dtype)
            vh = qkv3[:, :, 2 * E + h * Dh:2 * E + (h + 1) * Dh].astype(compute_dtype)
            s = jnp.einsum('bqd,bkd->bqk', qh, kh,
                           preferred_element_type=jnp.float32)     # (Bt, S, S)
            s = s - jnp.max(s, axis=-1, keepdims=True)
            p = jnp.exp(s)
            p = p * pl.reciprocal(jnp.sum(p, axis=-1, keepdims=True), approx=True)
            head_outs.append(
                jnp.einsum('bqk,bkd->bqd', p.astype(compute_dtype), vh,
                           preferred_element_type=jnp.float32))    # (Bt, S, Dh)
        ctx = jnp.concatenate(head_outs, axis=-1).reshape(R, E)    # (R, E)
        attn = jnp.dot(ctx.astype(compute_dtype), wo_ref[...],
                       preferred_element_type=jnp.float32) + bo_ref[...]

        # --- residual + LayerNorm1 (post-norm, biased variance) --------------
        y = x + attn
        mu = jnp.mean(y, axis=-1, keepdims=True)
        var = jnp.mean(jnp.square(y - mu), axis=-1, keepdims=True)
        y = (y - mu) * jax.lax.rsqrt(var + eps) * g1_ref[...] + be1_ref[...]

        # --- feed-forward (ReLU) ----------------------------------------------
        h1 = jnp.dot(y.astype(compute_dtype), w1_ref[...],
                     preferred_element_type=jnp.float32) + b1_ref[...]
        h1 = jnp.maximum(h1, 0.0)
        ff = jnp.dot(h1.astype(compute_dtype), w2_ref[...],
                     preferred_element_type=jnp.float32) + b2_ref[...]

        # --- residual + LayerNorm2 --------------------------------------------
        z = y + ff
        mu2 = jnp.mean(z, axis=-1, keepdims=True)
        var2 = jnp.mean(jnp.square(z - mu2), axis=-1, keepdims=True)
        z = (z - mu2) * jax.lax.rsqrt(var2 + eps) * g2_ref[...] + be2_ref[...]

        # --- decoder: Linear(d_model, 6), lane-padded to out_pad ---------------
        dec = jnp.dot(z.astype(compute_dtype), wd_ref[...],
                      preferred_element_type=jnp.float32) + bd_ref[...]
        out_ref[...] = dec.reshape(Bt, S, out_pad).astype(out_ref.dtype)

    return kernel


# ----------------------------------------------------------------------------
# Batch-tile heuristics
# ----------------------------------------------------------------------------
def _dual_tensorcore():
    try:
        return 'v7' in jax.devices()[0].device_kind.lower()
    except Exception:
        return False


def _default_batch_tile(B, S, max_rows=1024):
    # Cap Bt*S so the (rows, dim_feedforward) f32 ReLU intermediate stays well
    # inside VMEM (v7x: 64 MiB physical / 32 MiB scoped default).
    bt = max(1, min(B, max_rows // max(S, 1)))
    # Keep >=2 grid steps when possible so both v7x TensorCores get work.
    if _dual_tensorcore() and B >= 2:
        bt = min(bt, -(-B // 2))
    return bt


# ----------------------------------------------------------------------------
# Wrapper: mirrors LIMUBertModel4Pretrain.forward(x, mask_pos=None)
# ----------------------------------------------------------------------------
def limu_bert_pretrain(x_sbe, params, hyper_params, mask_pos=None,
                       compute_dtype=jnp.float32, batch_tile=None):
    S, B, E = x_sbe.shape
    nhead = hyper_params['nhead']
    Dh = E // nhead
    out_dim = params['decoder_w'].shape[0]
    out_pad = ((out_dim + 127) // 128) * 128           # lane-dense output width

    # --- batch tiling / padding ------------------------------------------------
    bt = batch_tile if batch_tile is not None else _default_batch_tile(B, S)
    bt = max(1, min(bt, B))
    n_steps = -(-B // bt)
    B_pad = n_steps * bt

    x_bse = jnp.transpose(x_sbe, (1, 0, 2))            # (B, S, E)
    if B_pad != B:
        x_bse = jnp.pad(x_bse, ((0, B_pad - B), (0, 0), (0, 0)))

    # --- weight prep (nn.Linear: y = x @ W.T + b -> pre-transpose to x @ W) ----
    # Fold the 1/sqrt(Dh) attention scale into the Q rows of in_proj.
    scale = 1.0 / math.sqrt(Dh)
    q_scale = jnp.concatenate([jnp.full((E,), scale, jnp.float32),
                               jnp.ones((2 * E,), jnp.float32)])
    wqkv = (params['in_proj_w'] * q_scale[:, None]).T.astype(compute_dtype)   # (E, 3E)
    bqkv = (params['in_proj_b'] * q_scale)[None, :].astype(jnp.float32)       # (1, 3E)
    wo = params['out_proj_w'].T.astype(compute_dtype)                         # (E, E)
    bo = params['out_proj_b'][None, :].astype(jnp.float32)                    # (1, E)
    w1 = params['linear1_w'].T.astype(compute_dtype)                          # (E, F)
    b1 = params['linear1_b'][None, :].astype(jnp.float32)                     # (1, F)
    w2 = params['linear2_w'].T.astype(compute_dtype)                          # (F, E)
    b2 = params['linear2_b'][None, :].astype(jnp.float32)                     # (1, E)
    g1 = params['norm1_g'][None, :].astype(jnp.float32)
    be1 = params['norm1_b'][None, :].astype(jnp.float32)
    g2 = params['norm2_g'][None, :].astype(jnp.float32)
    be2 = params['norm2_b'][None, :].astype(jnp.float32)
    wd = jnp.zeros((E, out_pad), jnp.float32).at[:, :out_dim].set(
        params['decoder_w'].T).astype(compute_dtype)                          # (E, out_pad)
    bd = jnp.zeros((1, out_pad), jnp.float32).at[:, :out_dim].set(
        params['decoder_b'][None, :])                                         # (1, out_pad)

    weight_args = (wqkv, bqkv, wo, bo, w1, b1, w2, b2, g1, be1, g2, be2, wd, bd)
    full2d = lambda a: pl.BlockSpec(a.shape, lambda b: (0, 0))

    kernel = make_kernel(bt, S, E, nhead, out_pad, compute_dtype)

    out_full = pl.pallas_call(
        kernel,
        out_shape=jax.ShapeDtypeStruct((B_pad, S, out_pad), x_sbe.dtype),
        grid=(n_steps,),
        in_specs=[pl.BlockSpec((bt, S, E), lambda b: (b, 0, 0))]
                 + [full2d(a) for a in weight_args],
        out_specs=pl.BlockSpec((bt, S, out_pad), lambda b: (b, 0, 0)),
        compiler_params=pltpu.CompilerParams(
            dimension_semantics=("parallel",),
            vmem_limit_bytes=32 * 1024 * 1024),
    )(x_bse, *weight_args)

    out = jnp.transpose(out_full[:B, :, :out_dim], (1, 0, 2))   # (S, B, 6) -- PyTorch layout
    if mask_pos is not None:
        # Mirrors the module verbatim: `x[:, mask_pos, :]` indexes axis 1 of the
        # (S, B, E) encoder output; the position-wise decoder commutes with it.
        out = out[:, mask_pos, :]
    return out


# ----------------------------------------------------------------------------
# Deterministic parameter init (shapes follow nn.TransformerEncoderLayer / nn.Linear)
# ----------------------------------------------------------------------------
def init_params(key, d_model, dim_feedforward=2048, out_dim=6):
    ks = jax.random.split(key, 8)
    s = 0.05
    f32 = jnp.float32
    return {
        'in_proj_w': jax.random.normal(ks[0], (3 * d_model, d_model), f32) * s,
        'in_proj_b': jax.random.normal(ks[1], (3 * d_model,), f32) * s,
        'out_proj_w': jax.random.normal(ks[2], (d_model, d_model), f32) * s,
        'out_proj_b': jnp.zeros((d_model,), f32),
        'linear1_w': jax.random.normal(ks[3], (dim_feedforward, d_model), f32) * s,
        'linear1_b': jax.random.normal(ks[4], (dim_feedforward,), f32) * s,
        'linear2_w': jax.random.normal(ks[5], (d_model, dim_feedforward), f32) * s,
        'linear2_b': jax.random.normal(ks[6], (d_model,), f32) * s,
        'norm1_g': jnp.ones((d_model,), f32),
        'norm1_b': jnp.zeros((d_model,), f32),
        'norm2_g': jnp.ones((d_model,), f32),
        'norm2_b': jnp.zeros((d_model,), f32),
        'decoder_w': jax.random.normal(ks[7], (out_dim, d_model), f32) * s,
        'decoder_b': jnp.zeros((out_dim,), f32),
    }


# ----------------------------------------------------------------------------
# Pure-JAX reference (same math) for correctness check
# ----------------------------------------------------------------------------
def ref_forward(x_sbe, p, nhead, eps=1e-5):
    E = x_sbe.shape[-1]
    Dh = E // nhead
    scale = 1.0 / math.sqrt(Dh)

    def one_batch(x):                                  # x: (S, E)
        qkv = x @ p['in_proj_w'].T + p['in_proj_b']
        q, k, v = qkv[:, :E], qkv[:, E:2 * E], qkv[:, 2 * E:]
        outs = []
        for h in range(nhead):
            sl = slice(h * Dh, (h + 1) * Dh)
            s = (q[:, sl] @ k[:, sl].T) * scale
            pr = jax.nn.softmax(s, axis=-1)
            outs.append(pr @ v[:, sl])
        attn = jnp.concatenate(outs, axis=-1) @ p['out_proj_w'].T + p['out_proj_b']
        y = x + attn
        mu = y.mean(-1, keepdims=True)
        var = ((y - mu) ** 2).mean(-1, keepdims=True)
        y = (y - mu) / jnp.sqrt(var + eps) * p['norm1_g'] + p['norm1_b']
        ff = jnp.maximum(y @ p['linear1_w'].T + p['linear1_b'], 0.0) @ p['linear2_w'].T + p['linear2_b']
        z = y + ff
        mu2 = z.mean(-1, keepdims=True)
        var2 = ((z - mu2) ** 2).mean(-1, keepdims=True)
        z = (z - mu2) / jnp.sqrt(var2 + eps) * p['norm2_g'] + p['norm2_b']
        return z @ p['decoder_w'].T + p['decoder_b']

    return jax.vmap(one_batch, in_axes=1, out_axes=1)(x_sbe)


if __name__ == "__main__":
    hyper_params = {'d_model': 32, 'nhead': 4}
    S, B, E = 8, 2, hyper_params['d_model']

    key = jax.random.PRNGKey(0)
    kx, kp = jax.random.split(key)
    x = jax.random.normal(kx, (S, B, E), jnp.float32)   # (seq, batch, d_model)
    params = init_params(kp, E)

    ref = jax.block_until_ready(ref_forward(x, params, hyper_params['nhead']))

    # f32 matmul operands (default): tight tolerance (approx reciprocal in softmax
    # and folded Q-scale introduce only ~1e-4-level differences).
    out = jax.block_until_ready(limu_bert_pretrain(x, params, hyper_params, mask_pos=None))
    assert out.shape == (S, B, 6), out.shape
    np.testing.assert_allclose(np.asarray(out), np.asarray(ref), rtol=2e-3, atol=2e-3)

    # bf16 matmul operands (v6e/v7x weight-bandwidth optimization); accumulation and
    # all elementwise / LayerNorm / softmax math remain f32.
    out_bf16 = jax.block_until_ready(
        limu_bert_pretrain(x, params, hyper_params, mask_pos=None,
                           compute_dtype=jnp.bfloat16))
    np.testing.assert_allclose(np.asarray(out_bf16), np.asarray(ref), rtol=5e-2, atol=5e-2)

    # TODO(synk): dropout layers are treated as identity (eval mode); src_mask /
    # key_padding_mask of nn.TransformerEncoderLayer are not supported (unused here).
    print("KERNEL_OK")
</pallas_src>

<mosaic_0001>
module attributes {stable_mosaic.version = 11 : i64} {
  func.func @kernel(%arg0: i32, %arg1: memref<2x8x32xf32, #tpu.memory_space<vmem>>, %arg2: memref<32x96xf32, #tpu.memory_space<vmem>>, %arg3: memref<1x96xf32, #tpu.memory_space<vmem>>, %arg4: memref<32x32xf32, #tpu.memory_space<vmem>>, %arg5: memref<1x32xf32, #tpu.memory_space<vmem>>, %arg6: memref<32x2048xf32, #tpu.memory_space<vmem>>, %arg7: memref<1x2048xf32, #tpu.memory_space<vmem>>, %arg8: memref<2048x32xf32, #tpu.memory_space<vmem>>, %arg9: memref<1x32xf32, #tpu.memory_space<vmem>>, %arg10: memref<1x32xf32, #tpu.memory_space<vmem>>, %arg11: memref<1x32xf32, #tpu.memory_space<vmem>>, %arg12: memref<1x32xf32, #tpu.memory_space<vmem>>, %arg13: memref<1x32xf32, #tpu.memory_space<vmem>>, %arg14: memref<32x128xf32, #tpu.memory_space<vmem>>, %arg15: memref<1x128xf32, #tpu.memory_space<vmem>>, %arg16: memref<2x8x128xf32, #tpu.memory_space<vmem>>) attributes {dimension_semantics = [#tpu.dimension_semantics<parallel>], iteration_bounds = array<i64: 1>, scalar_prefetch = 0 : i64, scratch_operands = 0 : i64, tpu.core_type = #tpu.core_type<tc>, window_params = [{transform_indices = @transform_0, window_bounds = array<i64: 2, 8, 32>}, {pipeline_mode = #tpu.pipeline_mode<synchronous>, transform_indices = @transform_1, window_bounds = array<i64: 32, 96>}, {pipeline_mode = #tpu.pipeline_mode<synchronous>, transform_indices = @transform_2, window_bounds = array<i64: 1, 96>}, {pipeline_mode = #tpu.pipeline_mode<synchronous>, transform_indices = @transform_3, window_bounds = array<i64: 32, 32>}, {pipeline_mode = #tpu.pipeline_mode<synchronous>, transform_indices = @transform_4, window_bounds = array<i64: 1, 32>}, {pipeline_mode = #tpu.pipeline_mode<synchronous>, transform_indices = @transform_5, window_bounds = array<i64: 32, 2048>}, {pipeline_mode = #tpu.pipeline_mode<synchronous>, transform_indices = @transform_6, window_bounds = array<i64: 1, 2048>}, {pipeline_mode = #tpu.pipeline_mode<synchronous>, transform_indices = @transform_7, window_bounds = array<i64: 2048, 32>}, {pipeline_mode = #tpu.pipeline_mode<synchronous>, transform_indices = @transform_8, window_bounds = array<i64: 1, 32>}, {pipeline_mode = #tpu.pipeline_mode<synchronous>, transform_indices = @transform_9, window_bounds = array<i64: 1, 32>}, {pipeline_mode = #tpu.pipeline_mode<synchronous>, transform_indices = @transform_10, window_bounds = array<i64: 1, 32>}, {pipeline_mode = #tpu.pipeline_mode<synchronous>, transform_indices = @transform_11, window_bounds = array<i64: 1, 32>}, {pipeline_mode = #tpu.pipeline_mode<synchronous>, transform_indices = @transform_12, window_bounds = array<i64: 1, 32>}, {pipeline_mode = #tpu.pipeline_mode<synchronous>, transform_indices = @transform_13, window_bounds = array<i64: 32, 128>}, {pipeline_mode = #tpu.pipeline_mode<synchronous>, transform_indices = @transform_14, window_bounds = array<i64: 1, 128>}, {transform_indices = @transform_15, window_bounds = array<i64: 2, 8, 128>}]} {
    %c0 = arith.constant 0 : index
    %c0_0 = arith.constant 0 : index
    %c0_1 = arith.constant 0 : index
    %0 = vector.load %arg1[%c0, %c0_0, %c0_1] : memref<2x8x32xf32, #tpu.memory_space<vmem>>, vector<2x8x32xf32>
    %1 = vector.shape_cast %0 : vector<2x8x32xf32> to vector<16x32xf32>
    %c0_2 = arith.constant 0 : index
    %c0_3 = arith.constant 0 : index
    %2 = vector.load %arg2[%c0_2, %c0_3] : memref<32x96xf32, #tpu.memory_space<vmem>>, vector<32x96xf32>
    %cst = arith.constant dense<0.000000e+00> : vector<16x96xf32>
    %3 = tpu.matmul %1, %2, %cst {dimension_numbers = #tpu.dot_dimension_numbers<[1], [0], [0], [1], [0, 0, 1, 1], [], []>} : vector<16x32xf32>, vector<32x96xf32>, vector<16x96xf32> -> vector<16x96xf32>
    %c0_4 = arith.constant 0 : index
    %c0_5 = arith.constant 0 : index
    %4 = vector.load %arg3[%c0_4, %c0_5] : memref<1x96xf32, #tpu.memory_space<vmem>>, vector<1x96xf32>
    %5 = vector.broadcast %4 : vector<1x96xf32> to vector<16x96xf32>
    %6 = arith.addf %3, %5 : vector<16x96xf32>
    %7 = vector.shape_cast %6 : vector<16x96xf32> to vector<2x8x96xf32>
    %8 = vector.extract_strided_slice %7 {offsets = [0, 0, 0], sizes = [2, 8, 8], strides = [1, 1, 1]} : vector<2x8x96xf32> to vector<2x8x8xf32>
    %9 = vector.extract_strided_slice %7 {offsets = [0, 0, 32], sizes = [2, 8, 8], strides = [1, 1, 1]} : vector<2x8x96xf32> to vector<2x8x8xf32>
    %10 = vector.extract_strided_slice %7 {offsets = [0, 0, 64], sizes = [2, 8, 8], strides = [1, 1, 1]} : vector<2x8x96xf32> to vector<2x8x8xf32>
    "tpu.trace_start"() <{level = 10 : i32, message = "bqd,bkd->bqk"}> : () -> ()
    %cst_6 = arith.constant dense<0.000000e+00> : vector<2x8x8xf32>
    %11 = tpu.matmul %8, %9, %cst_6 {dimension_numbers = #tpu.dot_dimension_numbers<[2], [2], [1], [1], [0, 0, 0, 1, 1, 1], [0], [0]>} : vector<2x8x8xf32>, vector<2x8x8xf32>, vector<2x8x8xf32> -> vector<2x8x8xf32>
    "tpu.trace_stop"() : () -> ()
    %cst_7 = arith.constant dense<0xFF800000> : vector<2x8xf32>
    %12 = vector.multi_reduction <maximumf>, %11, %cst_7 [2] : vector<2x8x8xf32> to vector<2x8xf32>
    %13 = vector.shape_cast %12 : vector<2x8xf32> to vector<2x8x1xf32>
    %14 = vector.broadcast %13 : vector<2x8x1xf32> to vector<2x8x8xf32>
    %15 = arith.subf %11, %14 : vector<2x8x8xf32>
    %16 = math.exp %15 : vector<2x8x8xf32>
    %cst_8 = arith.constant dense<0.000000e+00> : vector<2x8xf32>
    %17 = vector.multi_reduction <add>, %16, %cst_8 [2] : vector<2x8x8xf32> to vector<2x8xf32>
    %18 = vector.shape_cast %17 : vector<2x8xf32> to vector<2x8x1xf32>
    %19 = tpu.reciprocal %18 {approx = true} : vector<2x8x1xf32> -> vector<2x8x1xf32>
    %20 = vector.broadcast %19 : vector<2x8x1xf32> to vector<2x8x8xf32>
    %21 = arith.mulf %16, %20 : vector<2x8x8xf32>
    "tpu.trace_start"() <{level = 10 : i32, message = "bqk,bkd->bqd"}> : () -> ()
    %cst_9 = arith.constant dense<0.000000e+00> : vector<2x8x8xf32>
    %22 = tpu.matmul %21, %10, %cst_9 {dimension_numbers = #tpu.dot_dimension_numbers<[2], [1], [1], [2], [0, 0, 0, 1, 1, 2], [0], [0]>} : vector<2x8x8xf32>, vector<2x8x8xf32>, vector<2x8x8xf32> -> vector<2x8x8xf32>
    "tpu.trace_stop"() : () -> ()
    %23 = vector.extract_strided_slice %7 {offsets = [0, 0, 8], sizes = [2, 8, 8], strides = [1, 1, 1]} : vector<2x8x96xf32> to vector<2x8x8xf32>
    %24 = vector.extract_strided_slice %7 {offsets = [0, 0, 40], sizes = [2, 8, 8], strides = [1, 1, 1]} : vector<2x8x96xf32> to vector<2x8x8xf32>
    %25 = vector.extract_strided_slice %7 {offsets = [0, 0, 72], sizes = [2, 8, 8], strides = [1, 1, 1]} : vector<2x8x96xf32> to vector<2x8x8xf32>
    "tpu.trace_start"() <{level = 10 : i32, message = "bqd,bkd->bqk"}> : () -> ()
    %cst_10 = arith.constant dense<0.000000e+00> : vector<2x8x8xf32>
    %26 = tpu.matmul %23, %24, %cst_10 {dimension_numbers = #tpu.dot_dimension_numbers<[2], [2], [1], [1], [0, 0, 0, 1, 1, 1], [0], [0]>} : vector<2x8x8xf32>, vector<2x8x8xf32>, vector<2x8x8xf32> -> vector<2x8x8xf32>
    "tpu.trace_stop"() : () -> ()
    %cst_11 = arith.constant dense<0xFF800000> : vector<2x8xf32>
    %27 = vector.multi_reduction <maximumf>, %26, %cst_11 [2] : vector<2x8x8xf32> to vector<2x8xf32>
    %28 = vector.shape_cast %27 : vector<2x8xf32> to vector<2x8x1xf32>
    %29 = vector.broadcast %28 : vector<2x8x1xf32> to vector<2x8x8xf32>
    %30 = arith.subf %26, %29 : vector<2x8x8xf32>
    %31 = math.exp %30 : vector<2x8x8xf32>
    %cst_12 = arith.constant dense<0.000000e+00> : vector<2x8xf32>
    %32 = vector.multi_reduction <add>, %31, %cst_12 [2] : vector<2x8x8xf32> to vector<2x8xf32>
    %33 = vector.shape_cast %32 : vector<2x8xf32> to vector<2x8x1xf32>
    %34 = tpu.reciprocal %33 {approx = true} : vector<2x8x1xf32> -> vector<2x8x1xf32>
    %35 = vector.broadcast %34 : vector<2x8x1xf32> to vector<2x8x8xf32>
    %36 = arith.mulf %31, %35 : vector<2x8x8xf32>
    "tpu.trace_start"() <{level = 10 : i32, message = "bqk,bkd->bqd"}> : () -> ()
    %cst_13 = arith.constant dense<0.000000e+00> : vector<2x8x8xf32>
    %37 = tpu.matmul %36, %25, %cst_13 {dimension_numbers = #tpu.dot_dimension_numbers<[2], [1], [1], [2], [0, 0, 0, 1, 1, 2], [0], [0]>} : vector<2x8x8xf32>, vector<2x8x8xf32>, vector<2x8x8xf32> -> vector<2x8x8xf32>
    "tpu.trace_stop"() : () -> ()
    %38 = vector.extract_strided_slice %7 {offsets = [0, 0, 16], sizes = [2, 8, 8], strides = [1, 1, 1]} : vector<2x8x96xf32> to vector<2x8x8xf32>
    %39 = vector.extract_strided_slice %7 {offsets = [0, 0, 48], sizes = [2, 8, 8], strides = [1, 1, 1]} : vector<2x8x96xf32> to vector<2x8x8xf32>
    %40 = vector.extract_strided_slice %7 {offsets = [0, 0, 80], sizes = [2, 8, 8], strides = [1, 1, 1]} : vector<2x8x96xf32> to vector<2x8x8xf32>
    "tpu.trace_start"() <{level = 10 : i32, message = "bqd,bkd->bqk"}> : () -> ()
    %cst_14 = arith.constant dense<0.000000e+00> : vector<2x8x8xf32>
    %41 = tpu.matmul %38, %39, %cst_14 {dimension_numbers = #tpu.dot_dimension_numbers<[2], [2], [1], [1], [0, 0, 0, 1, 1, 1], [0], [0]>} : vector<2x8x8xf32>, vector<2x8x8xf32>, vector<2x8x8xf32> -> vector<2x8x8xf32>
    "tpu.trace_stop"() : () -> ()
    %cst_15 = arith.constant dense<0xFF800000> : vector<2x8xf32>
    %42 = vector.multi_reduction <maximumf>, %41, %cst_15 [2] : vector<2x8x8xf32> to vector<2x8xf32>
    %43 = vector.shape_cast %42 : vector<2x8xf32> to vector<2x8x1xf32>
    %44 = vector.broadcast %43 : vector<2x8x1xf32> to vector<2x8x8xf32>
    %45 = arith.subf %41, %44 : vector<2x8x8xf32>
    %46 = math.exp %45 : vector<2x8x8xf32>
    %cst_16 = arith.constant dense<0.000000e+00> : vector<2x8xf32>
    %47 = vector.multi_reduction <add>, %46, %cst_16 [2] : vector<2x8x8xf32> to vector<2x8xf32>
    %48 = vector.shape_cast %47 : vector<2x8xf32> to vector<2x8x1xf32>
    %49 = tpu.reciprocal %48 {approx = true} : vector<2x8x1xf32> -> vector<2x8x1xf32>
    %50 = vector.broadcast %49 : vector<2x8x1xf32> to vector<2x8x8xf32>
    %51 = arith.mulf %46, %50 : vector<2x8x8xf32>
    "tpu.trace_start"() <{level = 10 : i32, message = "bqk,bkd->bqd"}> : () -> ()
    %cst_17 = arith.constant dense<0.000000e+00> : vector<2x8x8xf32>
    %52 = tpu.matmul %51, %40, %cst_17 {dimension_numbers = #tpu.dot_dimension_numbers<[2], [1], [1], [2], [0, 0, 0, 1, 1, 2], [0], [0]>} : vector<2x8x8xf32>, vector<2x8x8xf32>, vector<2x8x8xf32> -> vector<2x8x8xf32>
    "tpu.trace_stop"() : () -> ()
    %53 = vector.extract_strided_slice %7 {offsets = [0, 0, 24], sizes = [2, 8, 8], strides = [1, 1, 1]} : vector<2x8x96xf32> to vector<2x8x8xf32>
    %54 = vector.extract_strided_slice %7 {offsets = [0, 0, 56], sizes = [2, 8, 8], strides = [1, 1, 1]} : vector<2x8x96xf32> to vector<2x8x8xf32>
    %55 = vector.extract_strided_slice %7 {offsets = [0, 0, 88], sizes = [2, 8, 8], strides = [1, 1, 1]} : vector<2x8x96xf32> to vector<2x8x8xf32>
    "tpu.trace_start"() <{level = 10 : i32, message = "bqd,bkd->bqk"}> : () -> ()
    %cst_18 = arith.constant dense<0.000000e+00> : vector<2x8x8xf32>
    %56 = tpu.matmul %53, %54, %cst_18 {dimension_numbers = #tpu.dot_dimension_numbers<[2], [2], [1], [1], [0, 0, 0, 1, 1, 1], [0], [0]>} : vector<2x8x8xf32>, vector<2x8x8xf32>, vector<2x8x8xf32> -> vector<2x8x8xf32>
    "tpu.trace_stop"() : () -> ()
    %cst_19 = arith.constant dense<0xFF800000> : vector<2x8xf32>
    %57 = vector.multi_reduction <maximumf>, %56, %cst_19 [2] : vector<2x8x8xf32> to vector<2x8xf32>
    %58 = vector.shape_cast %57 : vector<2x8xf32> to vector<2x8x1xf32>
    %59 = vector.broadcast %58 : vector<2x8x1xf32> to vector<2x8x8xf32>
    %60 = arith.subf %56, %59 : vector<2x8x8xf32>
    %61 = math.exp %60 : vector<2x8x8xf32>
    %cst_20 = arith.constant dense<0.000000e+00> : vector<2x8xf32>
    %62 = vector.multi_reduction <add>, %61, %cst_20 [2] : vector<2x8x8xf32> to vector<2x8xf32>
    %63 = vector.shape_cast %62 : vector<2x8xf32> to vector<2x8x1xf32>
    %64 = tpu.reciprocal %63 {approx = true} : vector<2x8x1xf32> -> vector<2x8x1xf32>
    %65 = vector.broadcast %64 : vector<2x8x1xf32> to vector<2x8x8xf32>
    %66 = arith.mulf %61, %65 : vector<2x8x8xf32>
    "tpu.trace_start"() <{level = 10 : i32, message = "bqk,bkd->bqd"}> : () -> ()
    %cst_21 = arith.constant dense<0.000000e+00> : vector<2x8x8xf32>
    %67 = tpu.matmul %66, %55, %cst_21 {dimension_numbers = #tpu.dot_dimension_numbers<[2], [1], [1], [2], [0, 0, 0, 1, 1, 2], [0], [0]>} : vector<2x8x8xf32>, vector<2x8x8xf32>, vector<2x8x8xf32> -> vector<2x8x8xf32>
    "tpu.trace_stop"() : () -> ()
    %68 = tpu.concatenate %22, %37, %52, %67 in 2 : vector<2x8x8xf32>, vector<2x8x8xf32>, vector<2x8x8xf32>, vector<2x8x8xf32> -> vector<2x8x32xf32>
    %69 = vector.shape_cast %68 : vector<2x8x32xf32> to vector<16x32xf32>
    %c0_22 = arith.constant 0 : index
    %c0_23 = arith.constant 0 : index
    %70 = vector.load %arg4[%c0_22, %c0_23] : memref<32x32xf32, #tpu.memory_space<vmem>>, vector<32x32xf32>
    %cst_24 = arith.constant dense<0.000000e+00> : vector<16x32xf32>
    %71 = tpu.matmul %69, %70, %cst_24 {dimension_numbers = #tpu.dot_dimension_numbers<[1], [0], [0], [1], [0, 0, 1, 1], [], []>} : vector<16x32xf32>, vector<32x32xf32>, vector<16x32xf32> -> vector<16x32xf32>
    %c0_25 = arith.constant 0 : index
    %c0_26 = arith.constant 0 : index
    %72 = vector.load %arg5[%c0_25, %c0_26] : memref<1x32xf32, #tpu.memory_space<vmem>>, vector<1x32xf32>
    %73 = vector.broadcast %72 : vector<1x32xf32> to vector<16x32xf32>
    %74 = arith.addf %71, %73 : vector<16x32xf32>
    %75 = arith.addf %1, %74 : vector<16x32xf32>
    %cst_27 = arith.constant dense<0.000000e+00> : vector<16xf32>
    %76 = vector.multi_reduction <add>, %75, %cst_27 [1] : vector<16x32xf32> to vector<16xf32>
    %77 = vector.shape_cast %76 : vector<16xf32> to vector<16x1xf32>
    %cst_28 = arith.constant 3.200000e+01 : f32
    %78 = vector.broadcast %cst_28 : f32 to vector<16x1xf32>
    %79 = arith.divf %77, %78 : vector<16x1xf32>
    %80 = vector.broadcast %79 : vector<16x1xf32> to vector<16x32xf32>
    %81 = arith.subf %75, %80 : vector<16x32xf32>
    %82 = arith.mulf %81, %81 : vector<16x32xf32>
    %cst_29 = arith.constant dense<0.000000e+00> : vector<16xf32>
    %83 = vector.multi_reduction <add>, %82, %cst_29 [1] : vector<16x32xf32> to vector<16xf32>
    %84 = vector.shape_cast %83 : vector<16xf32> to vector<16x1xf32>
    %cst_30 = arith.constant 3.200000e+01 : f32
    %85 = vector.broadcast %cst_30 : f32 to vector<16x1xf32>
    %86 = arith.divf %84, %85 : vector<16x1xf32>
    %87 = vector.broadcast %79 : vector<16x1xf32> to vector<16x32xf32>
    %88 = arith.subf %75, %87 : vector<16x32xf32>
    %cst_31 = arith.constant 9.99999974E-6 : f32
    %89 = vector.broadcast %cst_31 : f32 to vector<16x1xf32>
    %90 = arith.addf %86, %89 : vector<16x1xf32>
    %91 = math.rsqrt %90 : vector<16x1xf32>
    %92 = vector.broadcast %91 : vector<16x1xf32> to vector<16x32xf32>
    %93 = arith.mulf %88, %92 : vector<16x32xf32>
    %c0_32 = arith.constant 0 : index
    %c0_33 = arith.constant 0 : index
    %94 = vector.load %arg10[%c0_32, %c0_33] : memref<1x32xf32, #tpu.memory_space<vmem>>, vector<1x32xf32>
    %95 = vector.broadcast %94 : vector<1x32xf32> to vector<16x32xf32>
    %96 = arith.mulf %93, %95 : vector<16x32xf32>
    %c0_34 = arith.constant 0 : index
    %c0_35 = arith.constant 0 : index
    %97 = vector.load %arg11[%c0_34, %c0_35] : memref<1x32xf32, #tpu.memory_space<vmem>>, vector<1x32xf32>
    %98 = vector.broadcast %97 : vector<1x32xf32> to vector<16x32xf32>
    %99 = arith.addf %96, %98 : vector<16x32xf32>
    %c0_36 = arith.constant 0 : index
    %c0_37 = arith.constant 0 : index
    %100 = vector.load %arg6[%c0_36, %c0_37] : memref<32x2048xf32, #tpu.memory_space<vmem>>, vector<32x2048xf32>
    %cst_38 = arith.constant dense<0.000000e+00> : vector<16x2048xf32>
    %101 = tpu.matmul %99, %100, %cst_38 {dimension_numbers = #tpu.dot_dimension_numbers<[1], [0], [0], [1], [0, 0, 1, 1], [], []>} : vector<16x32xf32>, vector<32x2048xf32>, vector<16x2048xf32> -> vector<16x2048xf32>
    %c0_39 = arith.constant 0 : index
    %c0_40 = arith.constant 0 : index
    %102 = vector.load %arg7[%c0_39, %c0_40] : memref<1x2048xf32, #tpu.memory_space<vmem>>, vector<1x2048xf32>
    %103 = vector.broadcast %102 : vector<1x2048xf32> to vector<16x2048xf32>
    %104 = arith.addf %101, %103 : vector<16x2048xf32>
    %cst_41 = arith.constant 0.000000e+00 : f32
    %105 = vector.broadcast %cst_41 : f32 to vector<16x2048xf32>
    %106 = arith.maximumf %104, %105 : vector<16x2048xf32>
    %c0_42 = arith.constant 0 : index
    %c0_43 = arith.constant 0 : index
    %107 = vector.load %arg8[%c0_42, %c0_43] : memref<2048x32xf32, #tpu.memory_space<vmem>>, vector<2048x32xf32>
    %cst_44 = arith.constant dense<0.000000e+00> : vector<16x32xf32>
    %108 = tpu.matmul %106, %107, %cst_44 {dimension_numbers = #tpu.dot_dimension_numbers<[1], [0], [0], [1], [0, 0, 1, 1], [], []>} : vector<16x2048xf32>, vector<2048x32xf32>, vector<16x32xf32> -> vector<16x32xf32>
    %c0_45 = arith.constant 0 : index
    %c0_46 = arith.constant 0 : index
    %109 = vector.load %arg9[%c0_45, %c0_46] : memref<1x32xf32, #tpu.memory_space<vmem>>, vector<1x32xf32>
    %110 = vector.broadcast %109 : vector<1x32xf32> to vector<16x32xf32>
    %111 = arith.addf %108, %110 : vector<16x32xf32>
    %112 = arith.addf %99, %111 : vector<16x32xf32>
    %cst_47 = arith.constant dense<0.000000e+00> : vector<16xf32>
    %113 = vector.multi_reduction <add>, %112, %cst_47 [1] : vector<16x32xf32> to vector<16xf32>
    %114 = vector.shape_cast %113 : vector<16xf32> to vector<16x1xf32>
    %cst_48 = arith.constant 3.200000e+01 : f32
    %115 = vector.broadcast %cst_48 : f32 to vector<16x1xf32>
    %116 = arith.divf %114, %115 : vector<16x1xf32>
    %117 = vector.broadcast %116 : vector<16x1xf32> to vector<16x32xf32>
    %118 = arith.subf %112, %117 : vector<16x32xf32>
    %119 = arith.mulf %118, %118 : vector<16x32xf32>
    %cst_49 = arith.constant dense<0.000000e+00> : vector<16xf32>
    %120 = vector.multi_reduction <add>, %119, %cst_49 [1] : vector<16x32xf32> to vector<16xf32>
    %121 = vector.shape_cast %120 : vector<16xf32> to vector<16x1xf32>
    %cst_50 = arith.constant 3.200000e+01 : f32
    %122 = vector.broadcast %cst_50 : f32 to vector<16x1xf32>
    %123 = arith.divf %121, %122 : vector<16x1xf32>
    %124 = vector.broadcast %116 : vector<16x1xf32> to vector<16x32xf32>
    %125 = arith.subf %112, %124 : vector<16x32xf32>
    %cst_51 = arith.constant 9.99999974E-6 : f32
    %126 = vector.broadcast %cst_51 : f32 to vector<16x1xf32>
    %127 = arith.addf %123, %126 : vector<16x1xf32>
    %128 = math.rsqrt %127 : vector<16x1xf32>
    %129 = vector.broadcast %128 : vector<16x1xf32> to vector<16x32xf32>
    %130 = arith.mulf %125, %129 : vector<16x32xf32>
    %c0_52 = arith.constant 0 : index
    %c0_53 = arith.constant 0 : index
    %131 = vector.load %arg12[%c0_52, %c0_53] : memref<1x32xf32, #tpu.memory_space<vmem>>, vector<1x32xf32>
    %132 = vector.broadcast %131 : vector<1x32xf32> to vector<16x32xf32>
    %133 = arith.mulf %130, %132 : vector<16x32xf32>
    %c0_54 = arith.constant 0 : index
    %c0_55 = arith.constant 0 : index
    %134 = vector.load %arg13[%c0_54, %c0_55] : memref<1x32xf32, #tpu.memory_space<vmem>>, vector<1x32xf32>
    %135 = vector.broadcast %134 : vector<1x32xf32> to vector<16x32xf32>
    %136 = arith.addf %133, %135 : vector<16x32xf32>
    %c0_56 = arith.constant 0 : index
    %c0_57 = arith.constant 0 : index
    %137 = vector.load %arg14[%c0_56, %c0_57] : memref<32x128xf32, #tpu.memory_space<vmem>>, vector<32x128xf32>
    %cst_58 = arith.constant dense<0.000000e+00> : vector<16x128xf32>
    %138 = tpu.matmul %136, %137, %cst_58 {dimension_numbers = #tpu.dot_dimension_numbers<[1], [0], [0], [1], [0, 0, 1, 1], [], []>} : vector<16x32xf32>, vector<32x128xf32>, vector<16x128xf32> -> vector<16x128xf32>
    %c0_59 = arith.constant 0 : index
    %c0_60 = arith.constant 0 : index
    %139 = vector.load %arg15[%c0_59, %c0_60] : memref<1x128xf32, #tpu.memory_space<vmem>>, vector<1x128xf32>
    %140 = vector.broadcast %139 : vector<1x128xf32> to vector<16x128xf32>
    %141 = arith.addf %138, %140 : vector<16x128xf32>
    %142 = vector.shape_cast %141 : vector<16x128xf32> to vector<2x8x128xf32>
    %c0_61 = arith.constant 0 : index
    %c0_62 = arith.constant 0 : index
    %c0_63 = arith.constant 0 : index
    %143 = vector.load %arg16[%c0_61, %c0_62, %c0_63] : memref<2x8x128xf32, #tpu.memory_space<vmem>>, vector<2x8x128xf32>
    tpu.vector_store %arg16[%c0_61, %c0_62, %c0_63], %142 {strides = array<i32>} : memref<2x8x128xf32, #tpu.memory_space<vmem>>, vector<2x8x128xf32>,
    return
  }
  func.func @transform_0(%arg0: i32) -> (i32, i32, i32) {
    %c0_i32 = arith.constant 0 : i32
    %c0_i32_0 = arith.constant 0 : i32
    %c0_i32_1 = arith.constant 0 : i32
    return %arg0, %c0_i32, %c0_i32_0 : i32, i32, i32
  }
  func.func @transform_1(%arg0: i32) -> (i32, i32) {
    %c0_i32 = arith.constant 0 : i32
    %c0_i32_0 = arith.constant 0 : i32
    %c0_i32_1 = arith.constant 0 : i32
    return %c0_i32, %c0_i32_0 : i32, i32
  }
  func.func @transform_2(%arg0: i32) -> (i32, i32) {
    %c0_i32 = arith.constant 0 : i32
    %c0_i32_0 = arith.constant 0 : i32
    %c0_i32_1 = arith.constant 0 : i32
    return %c0_i32, %c0_i32_0 : i32, i32
  }
  func.func @transform_3(%arg0: i32) -> (i32, i32) {
    %c0_i32 = arith.constant 0 : i32
    %c0_i32_0 = arith.constant 0 : i32
    %c0_i32_1 = arith.constant 0 : i32
    return %c0_i32, %c0_i32_0 : i32, i32
  }
  func.func @transform_4(%arg0: i32) -> (i32, i32) {
    %c0_i32 = arith.constant 0 : i32
    %c0_i32_0 = arith.constant 0 : i32
    %c0_i32_1 = arith.constant 0 : i32
    return %c0_i32, %c0_i32_0 : i32, i32
  }
  func.func @transform_5(%arg0: i32) -> (i32, i32) {
    %c0_i32 = arith.constant 0 : i32
    %c0_i32_0 = arith.constant 0 : i32
    %c0_i32_1 = arith.constant 0 : i32
    return %c0_i32, %c0_i32_0 : i32, i32
  }
  func.func @transform_6(%arg0: i32) -> (i32, i32) {
    %c0_i32 = arith.constant 0 : i32
    %c0_i32_0 = arith.constant 0 : i32
    %c0_i32_1 = arith.constant 0 : i32
    return %c0_i32, %c0_i32_0 : i32, i32
  }
  func.func @transform_7(%arg0: i32) -> (i32, i32) {
    %c0_i32 = arith.constant 0 : i32
    %c0_i32_0 = arith.constant 0 : i32
    %c0_i32_1 = arith.constant 0 : i32
    return %c0_i32, %c0_i32_0 : i32, i32
  }
  func.func @transform_8(%arg0: i32) -> (i32, i32) {
    %c0_i32 = arith.constant 0 : i32
    %c0_i32_0 = arith.constant 0 : i32
    %c0_i32_1 = arith.constant 0 : i32
    return %c0_i32, %c0_i32_0 : i32, i32
  }
  func.func @transform_9(%arg0: i32) -> (i32, i32) {
    %c0_i32 = arith.constant 0 : i32
    %c0_i32_0 = arith.constant 0 : i32
    %c0_i32_1 = arith.constant 0 : i32
    return %c0_i32, %c0_i32_0 : i32, i32
  }
  func.func @transform_10(%arg0: i32) -> (i32, i32) {
    %c0_i32 = arith.constant 0 : i32
    %c0_i32_0 = arith.constant 0 : i32
    %c0_i32_1 = arith.constant 0 : i32
    return %c0_i32, %c0_i32_0 : i32, i32
  }
  func.func @transform_11(%arg0: i32) -> (i32, i32) {
    %c0_i32 = arith.constant 0 : i32
    %c0_i32_0 = arith.constant 0 : i32
    %c0_i32_1 = arith.constant 0 : i32
    return %c0_i32, %c0_i32_0 : i32, i32
  }
  func.func @transform_12(%arg0: i32) -> (i32, i32) {
    %c0_i32 = arith.constant 0 : i32
    %c0_i32_0 = arith.constant 0 : i32
    %c0_i32_1 = arith.constant 0 : i32
    return %c0_i32, %c0_i32_0 : i32, i32
  }
  func.func @transform_13(%arg0: i32) -> (i32, i32) {
    %c0_i32 = arith.constant 0 : i32
    %c0_i32_0 = arith.constant 0 : i32
    %c0_i32_1 = arith.constant 0 : i32
    return %c0_i32, %c0_i32_0 : i32, i32
  }
  func.func @transform_14(%arg0: i32) -> (i32, i32) {
    %c0_i32 = arith.constant 0 : i32
    %c0_i32_0 = arith.constant 0 : i32
    %c0_i32_1 = arith.constant 0 : i32
    return %c0_i32, %c0_i32_0 : i32, i32
  }
  func.func @transform_15(%arg0: i32) -> (i32, i32, i32) {
    %c0_i32 = arith.constant 0 : i32
    %c0_i32_0 = arith.constant 0 : i32
    %c0_i32_1 = arith.constant 0 : i32
    return %arg0, %c0_i32, %c0_i32_0 : i32, i32, i32
  }
}

</mosaic_0001>

<llo_original>
// kernel: tpu_custom_call.1
$region0: #{tpu_custom_call.1}
  #allocation0 [shape = 'u32[]', space=smem, size = 0x4, offset = 0x4, fixed_abs, tag = 'smem constant byte address 0x4 - core index']
  #allocation1 [shape = 'u32[144,128]{1,0:T(1,128)}', space=vmem, size = 0x12000, scoped, tag = 'internal scratch']
  %s0 = inlined_call_operand.vmem [shape: f32[2,8,32], index: 0, kind: input, shape index: {}]
  %s1 = inlined_call_operand.vmem [shape: f32[32,96], index: 1, kind: input, shape index: {}]
  %s2 = inlined_call_operand.vmem [shape: f32[1,96], index: 2, kind: input, shape index: {}]
  %s3 = inlined_call_operand.vmem [shape: f32[32,32], index: 3, kind: input, shape index: {}]
  %s4 = inlined_call_operand.vmem [shape: f32[1,32], index: 4, kind: input, shape index: {}]
  %s5 = inlined_call_operand.vmem [shape: f32[32,2048], index: 5, kind: input, shape index: {}]
  %s6 = inlined_call_operand.vmem [shape: f32[1,2048], index: 6, kind: input, shape index: {}]
  %s7 = inlined_call_operand.vmem [shape: f32[2048,32], index: 7, kind: input, shape index: {}]
  %s8 = inlined_call_operand.vmem [shape: f32[1,32], index: 8, kind: input, shape index: {}]
  %s9 = inlined_call_operand.vmem [shape: f32[1,32], index: 9, kind: input, shape index: {}]
  %s10 = inlined_call_operand.vmem [shape: f32[1,32], index: 10, kind: input, shape index: {}]
  %s11 = inlined_call_operand.vmem [shape: f32[1,32], index: 11, kind: input, shape index: {}]
  %s12 = inlined_call_operand.vmem [shape: f32[1,32], index: 12, kind: input, shape index: {}]
  %s13 = inlined_call_operand.vmem [shape: f32[32,128], index: 13, kind: input, shape index: {}]
  %s14 = inlined_call_operand.vmem [shape: f32[1,128], index: 14, kind: input, shape index: {}]
  %s15 = inlined_call_operand.hbm [shape: f32[2,8,128], index: 15, kind: output, shape index: {}]
  %s16 = sld [smem:[#allocation0]]
  $region70: #{tpu_custom_call.1} parent=0
    _
  %s18 = ssub.s32 1, %s16
  %s19 = scalar_select 0, %s18, %s16
  $region1: #{tpu_custom_call.1} parent=0
    #allocation2 [shape = 'u8[8192]{0}', space=vmem, size = 0x2000, scoped, tag = 'output window, operand 0, single buffered']
    #allocation3 [shape = 's32[1]{0}', space=sflag, size = 0x4, scoped, tag = 'scoped memory for tpu_custom_call.1']
    %20 = vsyncpa [#allocation3], 0
    // Predicated region
    $region2: #{tpu_custom_call.1} parent=1 // pred_check
      _
    $region3: #{tpu_custom_call.1} parent=1 // pred_check_branch
      %22 = sbr.rel (0) target = $region5
    $region4: #{tpu_custom_call.1} parent=1 // pred_region
      _
    $region5: #{tpu_custom_call.1} parent=1 // pred_fallthru
      _
    // Predicated region
    $region6: #{tpu_custom_call.1} parent=1 // pred_check
      _
    $region7: #{tpu_custom_call.1} parent=1 // pred_check_branch
      %24 = sbr.rel (0) target = $region9
    $region8: #{tpu_custom_call.1} parent=1 // pred_region
      _
    $region9: #{tpu_custom_call.1} parent=1 // pred_fallthru
      _
    // Predicated region
    $region10: #{tpu_custom_call.1} parent=1 // pred_check
      _
    $region11: #{tpu_custom_call.1} parent=1 // pred_check_branch
      %26 = sbr.rel (0) target = $region13
    $region12: #{tpu_custom_call.1} parent=1 // pred_region
      _
    $region13: #{tpu_custom_call.1} parent=1 // pred_fallthru
      _
    // Predicated region
    $region14: #{tpu_custom_call.1} parent=1 // pred_check
      _
    $region15: #{tpu_custom_call.1} parent=1 // pred_check_branch
      %28 = sbr.rel (0) target = $region17
    $region16: #{tpu_custom_call.1} parent=1 // pred_region
      _
    $region17: #{tpu_custom_call.1} parent=1 // pred_fallthru
      _
    // Predicated region
    $region18: #{tpu_custom_call.1} parent=1 // pred_check
      _
    $region19: #{tpu_custom_call.1} parent=1 // pred_check_branch
      %30 = sbr.rel (0) target = $region21
    $region20: #{tpu_custom_call.1} parent=1 // pred_region
      _
    $region21: #{tpu_custom_call.1} parent=1 // pred_fallthru
      _
    // Predicated region
    $region22: #{tpu_custom_call.1} parent=1 // pred_check
      _
    $region23: #{tpu_custom_call.1} parent=1 // pred_check_branch
      %32 = sbr.rel (0) target = $region25
    $region24: #{tpu_custom_call.1} parent=1 // pred_region
      _
    $region25: #{tpu_custom_call.1} parent=1 // pred_fallthru
      _
    // Predicated region
    $region26: #{tpu_custom_call.1} parent=1 // pred_check
      _
    $region27: #{tpu_custom_call.1} parent=1 // pred_check_branch
      %34 = sbr.rel (0) target = $region29
    $region28: #{tpu_custom_call.1} parent=1 // pred_region
      _
    $region29: #{tpu_custom_call.1} parent=1 // pred_fallthru
      _
    // Predicated region
    $region30: #{tpu_custom_call.1} parent=1 // pred_check
      _
    $region31: #{tpu_custom_call.1} parent=1 // pred_check_branch
      %36 = sbr.rel (0) target = $region33
    $region32: #{tpu_custom_call.1} parent=1 // pred_region
      _
    $region33: #{tpu_custom_call.1} parent=1 // pred_fallthru
      _
    // Predicated region
    $region34: #{tpu_custom_call.1} parent=1 // pred_check
      _
    $region35: #{tpu_custom_call.1} parent=1 // pred_check_branch
      %38 = sbr.rel (0) target = $region37
    $region36: #{tpu_custom_call.1} parent=1 // pred_region
      _
    $region37: #{tpu_custom_call.1} parent=1 // pred_fallthru
      _
    // Predicated region
    $region38: #{tpu_custom_call.1} parent=1 // pred_check
      _
    $region39: #{tpu_custom_call.1} parent=1 // pred_check_branch
      %40 = sbr.rel (0) target = $region41
    $region40: #{tpu_custom_call.1} parent=1 // pred_region
      _
    $region41: #{tpu_custom_call.1} parent=1 // pred_fallthru
      _
    // Predicated region
    $region42: #{tpu_custom_call.1} parent=1 // pred_check
      _
    $region43: #{tpu_custom_call.1} parent=1 // pred_check_branch
      %42 = sbr.rel (0) target = $region45
    $region44: #{tpu_custom_call.1} parent=1 // pred_region
      _
    $region45: #{tpu_custom_call.1} parent=1 // pred_fallthru
      _
    // Predicated region
    $region46: #{tpu_custom_call.1} parent=1 // pred_check
      _
    $region47: #{tpu_custom_call.1} parent=1 // pred_check_branch
      %44 = sbr.rel (0) target = $region49
    $region48: #{tpu_custom_call.1} parent=1 // pred_region
      _
    $region49: #{tpu_custom_call.1} parent=1 // pred_fallthru
      _
    // Predicated region
    $region50: #{tpu_custom_call.1} parent=1 // pred_check
      _
    $region51: #{tpu_custom_call.1} parent=1 // pred_check_branch
      %46 = sbr.rel (0) target = $region53
    $region52: #{tpu_custom_call.1} parent=1 // pred_region
      _
    $region53: #{tpu_custom_call.1} parent=1 // pred_fallthru
      _
    // Predicated region
    $region54: #{tpu_custom_call.1} parent=1 // pred_check
      _
    $region55: #{tpu_custom_call.1} parent=1 // pred_check_branch
      %48 = sbr.rel (0) target = $region57
    $region56: #{tpu_custom_call.1} parent=1 // pred_region
      _
    $region57: #{tpu_custom_call.1} parent=1 // pred_fallthru
      _
    // Predicated region
    $region58: #{tpu_custom_call.1} parent=1 // pred_check
      _
    $region59: #{tpu_custom_call.1} parent=1 // pred_check_branch
      %50 = sbr.rel (0) target = $region61
    $region60: #{tpu_custom_call.1} parent=1 // pred_region
      _
    $region61: #{tpu_custom_call.1} parent=1 // pred_fallthru
      _
    %v51 = vld [vmem:[%s0] sm:$0xff]
    %v52 = vld [vmem:[%s0 + $0x8] sm:$0xff]
    %v53 = vld [vmem:[%s1] sm:$0xff]
    %v54 = vld [vmem:[%s1 + $0x8] sm:$0xff]
    %v55 = vld [vmem:[%s1 + $0x10] sm:$0xff]
    %v56 = vld [vmem:[%s1 + $0x18] sm:$0xff]
    %v57 = vld [vmem:[%s2] sm:$0x1]
    %v59 = vlaneseq
    %v60 = vshrl.u32 %v59, 7
    %v61 = vsub.s32 0, %v60
    %v62 = vrot.slane %v57, %v61
    %vm64 = vcmask 261120
    %v66 = vsel %vm64, %v51, 0
    %v69 = vsel %vm64, %v52, 0
    %71 = vmatprep.subr.mxu0 0.0
    %72 = vmatpush1.msra.mxu0 %v53
    %73 = vmatprep.subr.mxu0 0.0
    %74 = vmatpush1.msra.mxu0 %v54
    %75 = vmatprep.subr.mxu0 0.0
    %76 = vmatpush1.msra.mxu0 %v55
    %77 = vmatprep.subr.mxu0 0.0
    %78 = vmatpush1.msra.mxu0 %v56
    %79 = vmatprep.subr.mxu0 0.0
    %80 = vmatpush1.msra.mxu0 0.0
    %81 = vmatprep.subr.mxu0 0.0
    %82 = vmatpush1.msra.mxu0 0.0
    %83 = vmatprep.subr.mxu0 0.0
    %84 = vmatpush1.msra.mxu0 0.0
    %85 = vmatprep.subr.mxu0 0.0
    %86 = vmatpush1.msra.mxu0 0.0
    %87 = vmatprep.subr.mxu0 0.0
    %88 = vmatpush1.msra.mxu0 0.0
    %89 = vmatprep.subr.mxu0 0.0
    %90 = vmatpush1.msra.mxu0 0.0
    %91 = vmatprep.subr.mxu0 0.0
    %92 = vmatpush1.msra.mxu0 0.0
    %93 = vmatprep.subr.mxu0 0.0
    %94 = vmatpush1.msra.mxu0 0.0
    %95 = vmatprep.subr.mxu0 0.0
    %96 = vmatpush1.msra.mxu0 0.0
    %97 = vmatprep.subr.mxu0 0.0
    %98 = vmatpush1.msra.mxu0 0.0
    %99 = vmatprep.subr.mxu0 0.0
    %100 = vmatpush1.msra.mxu0 0.0
    %101 = vmatprep.subr.mxu0 0.0
    %102 = vmatpush1.msra.mxu0 0.0
    %103 = vmatprep.subr.mxu0 0.0
    %104 = vmatpush1.msra.mxu0 0.0
    %105 = vmatprep.subr.mxu0 0.0
    %106 = vmatpush1.msra.mxu0 0.0
    %107 = vmatprep.subr.mxu0 0.0
    %108 = vmatpush1.msra.mxu0 0.0
    %109 = vmatprep.subr.mxu0 0.0
    %110 = vmatpush1.msra.mxu0 0.0
    %111 = vmatprep.subr.mxu0 0.0
    %112 = vmatpush1.msra.mxu0 0.0
    %113 = vmatprep.subr.mxu0 0.0
    %114 = vmatpush1.msra.mxu0 0.0
    %115 = vmatprep.subr.mxu0 0.0
    %116 = vmatpush1.msra.mxu0 0.0
    %117 = vmatprep.subr.mxu0 0.0
    %118 = vmatpush1.msra.mxu0 0.0
    %119 = vmatprep.subr.mxu0 0.0
    %120 = vmatpush1.msra.mxu0 0.0
    %121 = vmatprep.subr.mxu0 0.0
    %122 = vmatpush1.msra.mxu0 0.0
    %123 = vmatprep.subr.mxu0 0.0
    %124 = vmatpush1.msra.mxu0 0.0
    %125 = vmatprep.subr.mxu0 0.0
    %126 = vmatpush1.msra.mxu0 0.0
    %127 = vmatprep.subr.mxu0 0.0
    %128 = vmatpush1.msra.mxu0 0.0
    %129 = vmatprep.subr.mxu0 0.0
    %130 = vmatpush1.msra.mxu0 0.0
    %131 = vmatprep.subr.mxu0 0.0
    %132 = vmatpush1.msra.mxu0 0.0
    %133 = vmatprep.subr.mxu0 0.0
    %134 = vmatpush1.msra.mxu0 0.0
    %135 = vmatprep.mubr.f32.mxu0 0.0
    %136 = vmatmul.mubr.f32.gmra.mrb[0].mxu0 %v66
    %v137 = vpop.f32.mrb[0].mxu0
    %v138 = vadd.f32 %v62, %v137
    %v139 = vpop.f32.mrb[0].mxu0
    %140 = vmatprep.mubr.f32.mxu0 0.0
    %141 = vmatmul.mubr.f32.gmra.mrb[0].mxu0 %v69
    %v142 = vpop.f32.mrb[0].mxu0
    %v143 = vadd.f32 %v62, %v142
    %v144 = vpop.f32.mrb[0].mxu0
    %145 = vdwg.mxu0
    %147 = vrot.lane.b32.xlu0 %v138, 96
    %v148 = vpop.permute.xlu0 %147
    %vm149 = vcmask 64512
    %v150 = vsel %vm149, %v138, 0
    %v152 = vsel %vm149, %v148, 0
    %154 = vmatprep.subr.mxu0 0.0
    %155 = vmatpush1.xpose.msra.mxu0 %v152
    %156 = vmatprep.subr.mxu0 0.0
    %157 = vmatpush1.xpose.msra.mxu0 0.0
    %158 = vmatprep.subr.mxu0 0.0
    %159 = vmatpush1.xpose.msra.mxu0 0.0
    %160 = vmatprep.subr.mxu0 0.0
    %161 = vmatpush1.xpose.msra.mxu0 0.0
    %162 = vmatprep.subr.mxu0 0.0
    %163 = vmatpush1.xpose.msra.mxu0 0.0
    %164 = vmatprep.subr.mxu0 0.0
    %165 = vmatpush1.xpose.msra.mxu0 0.0
    %166 = vmatprep.subr.mxu0 0.0
    %167 = vmatpush1.xpose.msra.mxu0 0.0
    %168 = vmatprep.subr.mxu0 0.0
    %169 = vmatpush1.xpose.msra.mxu0 0.0
    %170 = vmatprep.subr.mxu0 0.0
    %171 = vmatpush1.xpose.msra.mxu0 0.0
    %172 = vmatprep.subr.mxu0 0.0
    %173 = vmatpush1.xpose.msra.mxu0 0.0
    %174 = vmatprep.subr.mxu0 0.0
    %175 = vmatpush1.xpose.msra.mxu0 0.0
    %176 = vmatprep.subr.mxu0 0.0
    %177 = vmatpush1.xpose.msra.mxu0 0.0
    %178 = vmatprep.subr.mxu0 0.0
    %179 = vmatpush1.xpose.msra.mxu0 0.0
    %180 = vmatprep.subr.mxu0 0.0
    %181 = vmatpush1.xpose.msra.mxu0 0.0
    %182 = vmatprep.subr.mxu0 0.0
    %183 = vmatpush1.xpose.msra.mxu0 0.0
    %184 = vmatprep.subr.mxu0 0.0
    %185 = vmatpush1.xpose.msra.mxu0 0.0
    %186 = vmatprep.subr.mxu0 0.0
    %187 = vmatpush1.xpose.msra.mxu0 0.0
    %188 = vmatprep.subr.mxu0 0.0
    %189 = vmatpush1.xpose.msra.mxu0 0.0
    %190 = vmatprep.subr.mxu0 0.0
    %191 = vmatpush1.xpose.msra.mxu0 0.0
    %192 = vmatprep.subr.mxu0 0.0
    %193 = vmatpush1.xpose.msra.mxu0 0.0
    %194 = vmatprep.subr.mxu0 0.0
    %195 = vmatpush1.xpose.msra.mxu0 0.0
    %196 = vmatprep.subr.mxu0 0.0
    %197 = vmatpush1.xpose.msra.mxu0 0.0
    %198 = vmatprep.subr.mxu0 0.0
    %199 = vmatpush1.xpose.msra.mxu0 0.0
    %200 = vmatprep.subr.mxu0 0.0
    %201 = vmatpush1.xpose.msra.mxu0 0.0
    %202 = vmatprep.subr.mxu0 0.0
    %203 = vmatpush1.xpose.msra.mxu0 0.0
    %204 = vmatprep.subr.mxu0 0.0
    %205 = vmatpush1.xpose.msra.mxu0 0.0
    %206 = vmatprep.subr.mxu0 0.0
    %207 = vmatpush1.xpose.msra.mxu0 0.0
    %208 = vmatprep.subr.mxu0 0.0
    %209 = vmatpush1.xpose.msra.mxu0 0.0
    %210 = vmatprep.subr.mxu0 0.0
    %211 = vmatpush1.xpose.msra.mxu0 0.0
    %212 = vmatprep.subr.mxu0 0.0
    %213 = vmatpush1.xpose.msra.mxu0 0.0
    %214 = vmatprep.subr.mxu0 0.0
    %215 = vmatpush1.xpose.msra.mxu0 0.0
    %216 = vmatprep.subr.mxu0 0.0
    %217 = vmatpush1.xpose.msra.mxu0 0.0
    %218 = vmatprep.mubr.f32.mxu0 0.0
    %219 = vmatmul.mubr.f32.gmra.mrb[0].mxu0 %v150
    %v220 = vpop.f32.mrb[0].mxu0
    %v221 = vadd.f32 0.0, %v220
    %v222 = vpop.f32.mrb[0].mxu0
    %223 = vdwg.mxu0
    %225 = vrot.lane.b32.xlu0 %v143, 96
    %v226 = vpop.permute.xlu0 %225
    %v227 = vsel %vm149, %v143, 0
    %v229 = vsel %vm149, %v226, 0
    %231 = vmatprep.subr.mxu0 0.0
    %232 = vmatpush1.xpose.msra.mxu0 %v229
    %233 = vmatprep.subr.mxu0 0.0
    %234 = vmatpush1.xpose.msra.mxu0 0.0
    %235 = vmatprep.subr.mxu0 0.0
    %236 = vmatpush1.xpose.msra.mxu0 0.0
    %237 = vmatprep.subr.mxu0 0.0
    %238 = vmatpush1.xpose.msra.mxu0 0.0
    %239 = vmatprep.subr.mxu0 0.0
    %240 = vmatpush1.xpose.msra.mxu0 0.0
    %241 = vmatprep.subr.mxu0 0.0
    %242 = vmatpush1.xpose.msra.mxu0 0.0
    %243 = vmatprep.subr.mxu0 0.0
    %244 = vmatpush1.xpose.msra.mxu0 0.0
    %245 = vmatprep.subr.mxu0 0.0
    %246 = vmatpush1.xpose.msra.mxu0 0.0
    %247 = vmatprep.subr.mxu0 0.0
    %248 = vmatpush1.xpose.msra.mxu0 0.0
    %249 = vmatprep.subr.mxu0 0.0
    %250 = vmatpush1.xpose.msra.mxu0 0.0
    %251 = vmatprep.subr.mxu0 0.0
    %252 = vmatpush1.xpose.msra.mxu0 0.0
    %253 = vmatprep.subr.mxu0 0.0
    %254 = vmatpush1.xpose.msra.mxu0 0.0
    %255 = vmatprep.subr.mxu0 0.0
    %256 = vmatpush1.xpose.msra.mxu0 0.0
    %257 = vmatprep.subr.mxu0 0.0
    %258 = vmatpush1.xpose.msra.mxu0 0.0
    %259 = vmatprep.subr.mxu0 0.0
    %260 = vmatpush1.xpose.msra.mxu0 0.0
    %261 = vmatprep.subr.mxu0 0.0
    %262 = vmatpush1.xpose.msra.mxu0 0.0
    %263 = vmatprep.subr.mxu0 0.0
    %264 = vmatpush1.xpose.msra.mxu0 0.0
    %265 = vmatprep.subr.mxu0 0.0
    %266 = vmatpush1.xpose.msra.mxu0 0.0
    %267 = vmatprep.subr.mxu0 0.0
    %268 = vmatpush1.xpose.msra.mxu0 0.0
    %269 = vmatprep.subr.mxu0 0.0
    %270 = vmatpush1.xpose.msra.mxu0 0.0
    %271 = vmatprep.subr.mxu0 0.0
    %272 = vmatpush1.xpose.msra.mxu0 0.0
    %273 = vmatprep.subr.mxu0 0.0
    %274 = vmatpush1.xpose.msra.mxu0 0.0
    %275 = vmatprep.subr.mxu0 0.0
    %276 = vmatpush1.xpose.msra.mxu0 0.0
    %277 = vmatprep.subr.mxu0 0.0
    %278 = vmatpush1.xpose.msra.mxu0 0.0
    %279 = vmatprep.subr.mxu0 0.0
    %280 = vmatpush1.xpose.msra.mxu0 0.0
    %281 = vmatprep.subr.mxu0 0.0
    %282 = vmatpush1.xpose.msra.mxu0 0.0
    %283 = vmatprep.subr.mxu0 0.0
    %284 = vmatpush1.xpose.msra.mxu0 0.0
    %285 = vmatprep.subr.mxu0 0.0
    %286 = vmatpush1.xpose.msra.mxu0 0.0
    %287 = vmatprep.subr.mxu0 0.0
    %288 = vmatpush1.xpose.msra.mxu0 0.0
    %289 = vmatprep.subr.mxu0 0.0
    %290 = vmatpush1.xpose.msra.mxu0 0.0
    %291 = vmatprep.subr.mxu0 0.0
    %292 = vmatpush1.xpose.msra.mxu0 0.0
    %293 = vmatprep.subr.mxu0 0.0
    %294 = vmatpush1.xpose.msra.mxu0 0.0
    %295 = vmatprep.mubr.f32.mxu0 0.0
    %296 = vmatmul.mubr.f32.gmra.mrb[0].mxu0 %v227
    %v297 = vpop.f32.mrb[0].mxu0
    %v298 = vadd.f32 0.0, %v297
    %v299 = vpop.f32.mrb[0].mxu0
    %300 = vdwg.mxu0
    %v301 = vsel %vm149, %v221, -inf
    %302 = vmax.xlane.f32.xlu0 %v301
    %v303 = vpop.xlane.xlu0 %302
    %v304 = vsel %vm149, %v298, -inf
    %305 = vmax.xlane.f32.xlu0 %v304
    %v306 = vpop.xlane.xlu0 %305
    %v307 = vsub.f32 %v221, %v303
    %v308 = vsub.f32 %v298, %v306
    %v309 = vmul.f32 %v307, 1.442695
    %v310 = vpow.pop %v309
    %v311 = vmul.f32 %v308, 1.442695
    %v312 = vpow.pop %v311
    %v313 = vsel %vm149, %v310, 0.0
    %314 = vadd.xlane.f32.xlu0 %v313
    %v315 = vpop.xlane.xlu0 %314
    %v316 = vsel %vm149, %v312, 0.0
    %317 = vadd.xlane.f32.xlu0 %v316
    %v318 = vpop.xlane.xlu0 %317
    %v319 = vrcp.pop %v315
    %v320 = vrcp.pop %v318
    %v321 = vmul.f32 %v310, %v319
    %v322 = vmul.f32 %v312, %v320
    %323 = vrot.lane.b32.xlu0 %v138, 64
    %v324 = vpop.permute.xlu0 %323
    %v327 = vsel %vm149, %v321, 0
    %329 = vmatprep.subr.mxu0 0.0
    %330 = vmatpush1.msra.mxu0 %v324
    %331 = vmatprep.subr.mxu0 0.0
    %332 = vmatpush1.msra.mxu0 0.0
    %333 = vmatprep.subr.mxu0 0.0
    %334 = vmatpush1.msra.mxu0 0.0
    %335 = vmatprep.subr.mxu0 0.0
    %336 = vmatpush1.msra.mxu0 0.0
    %337 = vmatprep.subr.mxu0 0.0
    %338 = vmatpush1.msra.mxu0 0.0
    %339 = vmatprep.subr.mxu0 0.0
    %340 = vmatpush1.msra.mxu0 0.0
    %341 = vmatprep.subr.mxu0 0.0
    %342 = vmatpush1.msra.mxu0 0.0
    %343 = vmatprep.subr.mxu0 0.0
    %344 = vmatpush1.msra.mxu0 0.0
    %345 = vmatprep.subr.mxu0 0.0
    %346 = vmatpush1.msra.mxu0 0.0
    %347 = vmatprep.subr.mxu0 0.0
    %348 = vmatpush1.msra.mxu0 0.0
    %349 = vmatprep.subr.mxu0 0.0
    %350 = vmatpush1.msra.mxu0 0.0
    %351 = vmatprep.subr.mxu0 0.0
    %352 = vmatpush1.msra.mxu0 0.0
    %353 = vmatprep.subr.mxu0 0.0
    %354 = vmatpush1.msra.mxu0 0.0
    %355 = vmatprep.subr.mxu0 0.0
    %356 = vmatpush1.msra.mxu0 0.0
    %357 = vmatprep.subr.mxu0 0.0
    %358 = vmatpush1.msra.mxu0 0.0
    %359 = vmatprep.subr.mxu0 0.0
    %360 = vmatpush1.msra.mxu0 0.0
    %361 = vmatprep.subr.mxu0 0.0
    %362 = vmatpush1.msra.mxu0 0.0
    %363 = vmatprep.subr.mxu0 0.0
    %364 = vmatpush1.msra.mxu0 0.0
    %365 = vmatprep.subr.mxu0 0.0
    %366 = vmatpush1.msra.mxu0 0.0
    %367 = vmatprep.subr.mxu0 0.0
    %368 = vmatpush1.msra.mxu0 0.0
    %369 = vmatprep.subr.mxu0 0.0
    %370 = vmatpush1.msra.mxu0 0.0
    %371 = vmatprep.subr.mxu0 0.0
    %372 = vmatpush1.msra.mxu0 0.0
    %373 = vmatprep.subr.mxu0 0.0
    %374 = vmatpush1.msra.mxu0 0.0
    %375 = vmatprep.subr.mxu0 0.0
    %376 = vmatpush1.msra.mxu0 0.0
    %377 = vmatprep.subr.mxu0 0.0
    %378 = vmatpush1.msra.mxu0 0.0
    %379 = vmatprep.subr.mxu0 0.0
    %380 = vmatpush1.msra.mxu0 0.0
    %381 = vmatprep.subr.mxu0 0.0
    %382 = vmatpush1.msra.mxu0 0.0
    %383 = vmatprep.subr.mxu0 0.0
    %384 = vmatpush1.msra.mxu0 0.0
    %385 = vmatprep.subr.mxu0 0.0
    %386 = vmatpush1.msra.mxu0 0.0
    %387 = vmatprep.subr.mxu0 0.0
    %388 = vmatpush1.msra.mxu0 0.0
    %389 = vmatprep.subr.mxu0 0.0
    %390 = vmatpush1.msra.mxu0 0.0
    %391 = vmatprep.subr.mxu0 0.0
    %392 = vmatpush1.msra.mxu0 0.0
    %393 = vmatprep.mubr.f32.mxu0 0.0
    %394 = vmatmul.mubr.f32.gmra.mrb[0].mxu0 %v327
    %v395 = vpop.f32.mrb[0].mxu0
    %v396 = vadd.f32 0.0, %v395
    %v397 = vpop.f32.mrb[0].mxu0
    %398 = vdwg.mxu0
    %399 = vrot.lane.b32.xlu0 %v143, 64
    %v400 = vpop.permute.xlu0 %399
    %v403 = vsel %vm149, %v322, 0
    %405 = vmatprep.subr.mxu0 0.0
    %406 = vmatpush1.msra.mxu0 %v400
    %407 = vmatprep.subr.mxu0 0.0
    %408 = vmatpush1.msra.mxu0 0.0
    %409 = vmatprep.subr.mxu0 0.0
    %410 = vmatpush1.msra.mxu0 0.0
    %411 = vmatprep.subr.mxu0 0.0
    %412 = vmatpush1.msra.mxu0 0.0
    %413 = vmatprep.subr.mxu0 0.0
    %414 = vmatpush1.msra.mxu0 0.0
    %415 = vmatprep.subr.mxu0 0.0
    %416 = vmatpush1.msra.mxu0 0.0
    %417 = vmatprep.subr.mxu0 0.0
    %418 = vmatpush1.msra.mxu0 0.0
    %419 = vmatprep.subr.mxu0 0.0
    %420 = vmatpush1.msra.mxu0 0.0
    %421 = vmatprep.subr.mxu0 0.0
    %422 = vmatpush1.msra.mxu0 0.0
    %423 = vmatprep.subr.mxu0 0.0
    %424 = vmatpush1.msra.mxu0 0.0
    %425 = vmatprep.subr.mxu0 0.0
    %426 = vmatpush1.msra.mxu0 0.0
    %427 = vmatprep.subr.mxu0 0.0
    %428 = vmatpush1.msra.mxu0 0.0
    %429 = vmatprep.subr.mxu0 0.0
    %430 = vmatpush1.msra.mxu0 0.0
    %431 = vmatprep.subr.mxu0 0.0
    %432 = vmatpush1.msra.mxu0 0.0
    %433 = vmatprep.subr.mxu0 0.0
    %434 = vmatpush1.msra.mxu0 0.0
    %435 = vmatprep.subr.mxu0 0.0
    %436 = vmatpush1.msra.mxu0 0.0
    %437 = vmatprep.subr.mxu0 0.0
    %438 = vmatpush1.msra.mxu0 0.0
    %439 = vmatprep.subr.mxu0 0.0
    %440 = vmatpush1.msra.mxu0 0.0
    %441 = vmatprep.subr.mxu0 0.0
    %442 = vmatpush1.msra.mxu0 0.0
    %443 = vmatprep.subr.mxu0 0.0
    %444 = vmatpush1.msra.mxu0 0.0
    %445 = vmatprep.subr.mxu0 0.0
    %446 = vmatpush1.msra.mxu0 0.0
    %447 = vmatprep.subr.mxu0 0.0
    %448 = vmatpush1.msra.mxu0 0.0
    %449 = vmatprep.subr.mxu0 0.0
    %450 = vmatpush1.msra.mxu0 0.0
    %451 = vmatprep.subr.mxu0 0.0
    %452 = vmatpush1.msra.mxu0 0.0
    %453 = vmatprep.subr.mxu0 0.0
    %454 = vmatpush1.msra.mxu0 0.0
    %455 = vmatprep.subr.mxu0 0.0
    %456 = vmatpush1.msra.mxu0 0.0
    %457 = vmatprep.subr.mxu0 0.0
    %458 = vmatpush1.msra.mxu0 0.0
    %459 = vmatprep.subr.mxu0 0.0
    %460 = vmatpush1.msra.mxu0 0.0
    %461 = vmatprep.subr.mxu0 0.0
    %462 = vmatpush1.msra.mxu0 0.0
    %463 = vmatprep.subr.mxu0 0.0
    %464 = vmatpush1.msra.mxu0 0.0
    %465 = vmatprep.subr.mxu0 0.0
    %466 = vmatpush1.msra.mxu0 0.0
    %467 = vmatprep.subr.mxu0 0.0
    %468 = vmatpush1.msra.mxu0 0.0
    %469 = vmatprep.mubr.f32.mxu0 0.0
    %470 = vmatmul.mubr.f32.gmra.mrb[0].mxu0 %v403
    %v471 = vpop.f32.mrb[0].mxu0
    %v472 = vadd.f32 0.0, %v471
    %v473 = vpop.f32.mrb[0].mxu0
    %474 = vdwg.mxu0
    %475 = vrot.lane.b32.xlu0 %v138, 120
    %v476 = vpop.permute.xlu0 %475
    %477 = vrot.lane.b32.xlu0 %v138, 88
    %v478 = vpop.permute.xlu0 %477
    %v479 = vsel %vm149, %v476, 0
    %v481 = vsel %vm149, %v478, 0
    %483 = vmatprep.subr.mxu0 0.0
    %484 = vmatpush1.xpose.msra.mxu0 %v481
    %485 = vmatprep.subr.mxu0 0.0
    %486 = vmatpush1.xpose.msra.mxu0 0.0
    %487 = vmatprep.subr.mxu0 0.0
    %488 = vmatpush1.xpose.msra.mxu0 0.0
    %489 = vmatprep.subr.mxu0 0.0
    %490 = vmatpush1.xpose.msra.mxu0 0.0
    %491 = vmatprep.subr.mxu0 0.0
    %492 = vmatpush1.xpose.msra.mxu0 0.0
    %493 = vmatprep.subr.mxu0 0.0
    %494 = vmatpush1.xpose.msra.mxu0 0.0
    %495 = vmatprep.subr.mxu0 0.0
    %496 = vmatpush1.xpose.msra.mxu0 0.0
    %497 = vmatprep.subr.mxu0 0.0
    %498 = vmatpush1.xpose.msra.mxu0 0.0
    %499 = vmatprep.subr.mxu0 0.0
    %500 = vmatpush1.xpose.msra.mxu0 0.0
    %501 = vmatprep.subr.mxu0 0.0
    %502 = vmatpush1.xpose.msra.mxu0 0.0
    %503 = vmatprep.subr.mxu0 0.0
    %504 = vmatpush1.xpose.msra.mxu0 0.0
    %505 = vmatprep.subr.mxu0 0.0
    %506 = vmatpush1.xpose.msra.mxu0 0.0
    %507 = vmatprep.subr.mxu0 0.0
    %508 = vmatpush1.xpose.msra.mxu0 0.0
    %509 = vmatprep.subr.mxu0 0.0
    %510 = vmatpush1.xpose.msra.mxu0 0.0
    %511 = vmatprep.subr.mxu0 0.0
    %512 = vmatpush1.xpose.msra.mxu0 0.0
    %513 = vmatprep.subr.mxu0 0.0
    %514 = vmatpush1.xpose.msra.mxu0 0.0
    %515 = vmatprep.subr.mxu0 0.0
    %516 = vmatpush1.xpose.msra.mxu0 0.0
    %517 = vmatprep.subr.mxu0 0.0
    %518 = vmatpush1.xpose.msra.mxu0 0.0
    %519 = vmatprep.subr.mxu0 0.0
    %520 = vmatpush1.xpose.msra.mxu0 0.0
    %521 = vmatprep.subr.mxu0 0.0
    %522 = vmatpush1.xpose.msra.mxu0 0.0
    %523 = vmatprep.subr.mxu0 0.0
    %524 = vmatpush1.xpose.msra.mxu0 0.0
    %525 = vmatprep.subr.mxu0 0.0
    %526 = vmatpush1.xpose.msra.mxu0 0.0
    %527 = vmatprep.subr.mxu0 0.0
    %528 = vmatpush1.xpose.msra.mxu0 0.0
    %529 = vmatprep.subr.mxu0 0.0
    %530 = vmatpush1.xpose.msra.mxu0 0.0
    %531 = vmatprep.subr.mxu0 0.0
    %532 = vmatpush1.xpose.msra.mxu0 0.0
    %533 = vmatprep.subr.mxu0 0.0
    %534 = vmatpush1.xpose.msra.mxu0 0.0
    %535 = vmatprep.subr.mxu0 0.0
    %536 = vmatpush1.xpose.msra.mxu0 0.0
    %537 = vmatprep.subr.mxu0 0.0
    %538 = vmatpush1.xpose.msra.mxu0 0.0
    %539 = vmatprep.subr.mxu0 0.0
    %540 = vmatpush1.xpose.msra.mxu0 0.0
    %541 = vmatprep.subr.mxu0 0.0
    %542 = vmatpush1.xpose.msra.mxu0 0.0
    %543 = vmatprep.subr.mxu0 0.0
    %544 = vmatpush1.xpose.msra.mxu0 0.0
    %545 = vmatprep.subr.mxu0 0.0
    %546 = vmatpush1.xpose.msra.mxu0 0.0
    %547 = vmatprep.mubr.f32.mxu0 0.0
    %548 = vmatmul.mubr.f32.gmra.mrb[0].mxu0 %v479
    %v549 = vpop.f32.mrb[0].mxu0
    %v550 = vadd.f32 0.0, %v549
    %v551 = vpop.f32.mrb[0].mxu0
    %552 = vdwg.mxu0
    %553 = vrot.lane.b32.xlu0 %v143, 120
    %v554 = vpop.permute.xlu0 %553
    %555 = vrot.lane.b32.xlu0 %v143, 88
    %v556 = vpop.permute.xlu0 %555
    %v557 = vsel %vm149, %v554, 0
    %v559 = vsel %vm149, %v556, 0
    %561 = vmatprep.subr.mxu0 0.0
    %562 = vmatpush1.xpose.msra.mxu0 %v559
    %563 = vmatprep.subr.mxu0 0.0
    %564 = vmatpush1.xpose.msra.mxu0 0.0
    %565 = vmatprep.subr.mxu0 0.0
    %566 = vmatpush1.xpose.msra.mxu0 0.0
    %567 = vmatprep.subr.mxu0 0.0
    %568 = vmatpush1.xpose.msra.mxu0 0.0
    %569 = vmatprep.subr.mxu0 0.0
    %570 = vmatpush1.xpose.msra.mxu0 0.0
    %571 = vmatprep.subr.mxu0 0.0
    %572 = vmatpush1.xpose.msra.mxu0 0.0
    %573 = vmatprep.subr.mxu0 0.0
    %574 = vmatpush1.xpose.msra.mxu0 0.0
    %575 = vmatprep.subr.mxu0 0.0
    %576 = vmatpush1.xpose.msra.mxu0 0.0
    %577 = vmatprep.subr.mxu0 0.0
    %578 = vmatpush1.xpose.msra.mxu0 0.0
    %579 = vmatprep.subr.mxu0 0.0
    %580 = vmatpush1.xpose.msra.mxu0 0.0
    %581 = vmatprep.subr.mxu0 0.0
    %582 = vmatpush1.xpose.msra.mxu0 0.0
    %583 = vmatprep.subr.mxu0 0.0
    %584 = vmatpush1.xpose.msra.mxu0 0.0
    %585 = vmatprep.subr.mxu0 0.0
    %586 = vmatpush1.xpose.msra.mxu0 0.0
    %587 = vmatprep.subr.mxu0 0.0
    %588 = vmatpush1.xpose.msra.mxu0 0.0
    %589 = vmatprep.subr.mxu0 0.0
    %590 = vmatpush1.xpose.msra.mxu0 0.0
    %591 = vmatprep.subr.mxu0 0.0
    %592 = vmatpush1.xpose.msra.mxu0 0.0
    %593 = vmatprep.subr.mxu0 0.0
    %594 = vmatpush1.xpose.msra.mxu0 0.0
    %595 = vmatprep.subr.mxu0 0.0
    %596 = vmatpush1.xpose.msra.mxu0 0.0
    %597 = vmatprep.subr.mxu0 0.0
    %598 = vmatpush1.xpose.msra.mxu0 0.0
    %599 = vmatprep.subr.mxu0 0.0
    %600 = vmatpush1.xpose.msra.mxu0 0.0
    %601 = vmatprep.subr.mxu0 0.0
    %602 = vmatpush1.xpose.msra.mxu0 0.0
    %603 = vmatprep.subr.mxu0 0.0
    %604 = vmatpush1.xpose.msra.mxu0 0.0
    %605 = vmatprep.subr.mxu0 0.0
    %606 = vmatpush1.xpose.msra.mxu0 0.0
    %607 = vmatprep.subr.mxu0 0.0
    %608 = vmatpush1.xpose.msra.mxu0 0.0
    %609 = vmatprep.subr.mxu0 0.0
    %610 = vmatpush1.xpose.msra.mxu0 0.0
    %611 = vmatprep.subr.mxu0 0.0
    %612 = vmatpush1.xpose.msra.mxu0 0.0
    %613 = vmatprep.subr.mxu0 0.0
    %614 = vmatpush1.xpose.msra.mxu0 0.0
    %615 = vmatprep.subr.mxu0 0.0
    %616 = vmatpush1.xpose.msra.mxu0 0.0
    %617 = vmatprep.subr.mxu0 0.0
    %618 = vmatpush1.xpose.msra.mxu0 0.0
    %619 = vmatprep.subr.mxu0 0.0
    %620 = vmatpush1.xpose.msra.mxu0 0.0
    %621 = vmatprep.subr.mxu0 0.0
    %622 = vmatpush1.xpose.msra.mxu0 0.0
    %623 = vmatprep.subr.mxu0 0.0
    %624 = vmatpush1.xpose.msra.mxu0 0.0
    %625 = vmatprep.mubr.f32.mxu0 0.0
    %626 = vmatmul.mubr.f32.gmra.mrb[0].mxu0 %v557
    %v627 = vpop.f32.mrb[0].mxu0
    %v628 = vadd.f32 0.0, %v627
    %v629 = vpop.f32.mrb[0].mxu0
    %630 = vdwg.mxu0
    %v631 = vsel %vm149, %v550, -inf
    %632 = vmax.xlane.f32.xlu0 %v631
    %v633 = vpop.xlane.xlu0 %632
    %v634 = vsel %vm149, %v628, -inf
    %635 = vmax.xlane.f32.xlu0 %v634
    %v636 = vpop.xlane.xlu0 %635
    %v637 = vsub.f32 %v550, %v633
    %v638 = vsub.f32 %v628, %v636
    %v639 = vmul.f32 %v637, 1.442695
    %v640 = vpow.pop %v639
    %v641 = vmul.f32 %v638, 1.442695
    %v642 = vpow.pop %v641
    %v643 = vsel %vm149, %v640, 0.0
    %644 = vadd.xlane.f32.xlu0 %v643
    %v645 = vpop.xlane.xlu0 %644
    %v646 = vsel %vm149, %v642, 0.0
    %647 = vadd.xlane.f32.xlu0 %v646
    %v648 = vpop.xlane.xlu0 %647
    %v649 = vrcp.pop %v645
    %v650 = vrcp.pop %v648
    %v651 = vmul.f32 %v640, %v649
    %v652 = vmul.f32 %v642, %v650
    %653 = vrot.lane.b32.xlu0 %v138, 56
    %v654 = vpop.permute.xlu0 %653
    %v657 = vsel %vm149, %v651, 0
    %659 = vmatprep.subr.mxu0 0.0
    %660 = vmatpush1.msra.mxu0 %v654
    %661 = vmatprep.subr.mxu0 0.0
    %662 = vmatpush1.msra.mxu0 0.0
    %663 = vmatprep.subr.mxu0 0.0
    %664 = vmatpush1.msra.mxu0 0.0
    %665 = vmatprep.subr.mxu0 0.0
    %666 = vmatpush1.msra.mxu0 0.0
    %667 = vmatprep.subr.mxu0 0.0
    %668 = vmatpush1.msra.mxu0 0.0
    %669 = vmatprep.subr.mxu0 0.0
    %670 = vmatpush1.msra.mxu0 0.0
    %671 = vmatprep.subr.mxu0 0.0
    %672 = vmatpush1.msra.mxu0 0.0
    %673 = vmatprep.subr.mxu0 0.0
    %674 = vmatpush1.msra.mxu0 0.0
    %675 = vmatprep.subr.mxu0 0.0
    %676 = vmatpush1.msra.mxu0 0.0
    %677 = vmatprep.subr.mxu0 0.0
    %678 = vmatpush1.msra.mxu0 0.0
    %679 = vmatprep.subr.mxu0 0.0
    %680 = vmatpush1.msra.mxu0 0.0
    %681 = vmatprep.subr.mxu0 0.0
    %682 = vmatpush1.msra.mxu0 0.0
    %683 = vmatprep.subr.mxu0 0.0
    %684 = vmatpush1.msra.mxu0 0.0
    %685 = vmatprep.subr.mxu0 0.0
    %686 = vmatpush1.msra.mxu0 0.0
    %687 = vmatprep.subr.mxu0 0.0
    %688 = vmatpush1.msra.mxu0 0.0
    %689 = vmatprep.subr.mxu0 0.0
    %690 = vmatpush1.msra.mxu0 0.0
    %691 = vmatprep.subr.mxu0 0.0
    %692 = vmatpush1.msra.mxu0 0.0
    %693 = vmatprep.subr.mxu0 0.0
    %694 = vmatpush1.msra.mxu0 0.0
    %695 = vmatprep.subr.mxu0 0.0
    %696 = vmatpush1.msra.mxu0 0.0
    %697 = vmatprep.subr.mxu0 0.0
    %698 = vmatpush1.msra.mxu0 0.0
    %699 = vmatprep.subr.mxu0 0.0
    %700 = vmatpush1.msra.mxu0 0.0
    %701 = vmatprep.subr.mxu0 0.0
    %702 = vmatpush1.msra.mxu0 0.0
    %703 = vmatprep.subr.mxu0 0.0
    %704 = vmatpush1.msra.mxu0 0.0
    %705 = vmatprep.subr.mxu0 0.0
    %706 = vmatpush1.msra.mxu0 0.0
    %707 = vmatprep.subr.mxu0 0.0
    %708 = vmatpush1.msra.mxu0 0.0
    %709 = vmatprep.subr.mxu0 0.0
    %710 = vmatpush1.msra.mxu0 0.0
    %711 = vmatprep.subr.mxu0 0.0
    %712 = vmatpush1.msra.mxu0 0.0
    %713 = vmatprep.subr.mxu0 0.0
    %714 = vmatpush1.msra.mxu0 0.0
    %715 = vmatprep.subr.mxu0 0.0
    %716 = vmatpush1.msra.mxu0 0.0
    %717 = vmatprep.subr.mxu0 0.0
    %718 = vmatpush1.msra.mxu0 0.0
    %719 = vmatprep.subr.mxu0 0.0
    %720 = vmatpush1.msra.mxu0 0.0
    %721 = vmatprep.subr.mxu0 0.0
    %722 = vmatpush1.msra.mxu0 0.0
    %723 = vmatprep.mubr.f32.mxu0 0.0
    %724 = vmatmul.mubr.f32.gmra.mrb[0].mxu0 %v657
    %v725 = vpop.f32.mrb[0].mxu0
    %v726 = vadd.f32 0.0, %v725
    %v727 = vpop.f32.mrb[0].mxu0
    %728 = vdwg.mxu0
    %729 = vrot.lane.b32.xlu0 %v143, 56
    %v730 = vpop.permute.xlu0 %729
    %v733 = vsel %vm149, %v652, 0
    %735 = vmatprep.subr.mxu0 0.0
    %736 = vmatpush1.msra.mxu0 %v730
    %737 = vmatprep.subr.mxu0 0.0
    %738 = vmatpush1.msra.mxu0 0.0
    %739 = vmatprep.subr.mxu0 0.0
    %740 = vmatpush1.msra.mxu0 0.0
    %741 = vmatprep.subr.mxu0 0.0
    %742 = vmatpush1.msra.mxu0 0.0
    %743 = vmatprep.subr.mxu0 0.0
    %744 = vmatpush1.msra.mxu0 0.0
    %745 = vmatprep.subr.mxu0 0.0
    %746 = vmatpush1.msra.mxu0 0.0
    %747 = vmatprep.subr.mxu0 0.0
    %748 = vmatpush1.msra.mxu0 0.0
    %749 = vmatprep.subr.mxu0 0.0
    %750 = vmatpush1.msra.mxu0 0.0
    %751 = vmatprep.subr.mxu0 0.0
    %752 = vmatpush1.msra.mxu0 0.0
    %753 = vmatprep.subr.mxu0 0.0
    %754 = vmatpush1.msra.mxu0 0.0
    %755 = vmatprep.subr.mxu0 0.0
    %756 = vmatpush1.msra.mxu0 0.0
    %757 = vmatprep.subr.mxu0 0.0
    %758 = vmatpush1.msra.mxu0 0.0
    %759 = vmatprep.subr.mxu0 0.0
    %760 = vmatpush1.msra.mxu0 0.0
    %761 = vmatprep.subr.mxu0 0.0
    %762 = vmatpush1.msra.mxu0 0.0
    %763 = vmatprep.subr.mxu0 0.0
    %764 = vmatpush1.msra.mxu0 0.0
    %765 = vmatprep.subr.mxu0 0.0
    %766 = vmatpush1.msra.mxu0 0.0
    %767 = vmatprep.subr.mxu0 0.0
    %768 = vmatpush1.msra.mxu0 0.0
    %769 = vmatprep.subr.mxu0 0.0
    %770 = vmatpush1.msra.mxu0 0.0
    %771 = vmatprep.subr.mxu0 0.0
    %772 = vmatpush1.msra.mxu0 0.0
    %773 = vmatprep.subr.mxu0 0.0
    %774 = vmatpush1.msra.mxu0 0.0
    %775 = vmatprep.subr.mxu0 0.0
    %776 = vmatpush1.msra.mxu0 0.0
    %777 = vmatprep.subr.mxu0 0.0
    %778 = vmatpush1.msra.mxu0 0.0
    %779 = vmatprep.subr.mxu0 0.0
    %780 = vmatpush1.msra.mxu0 0.0
    %781 = vmatprep.subr.mxu0 0.0
    %782 = vmatpush1.msra.mxu0 0.0
    %783 = vmatprep.subr.mxu0 0.0
    %784 = vmatpush1.msra.mxu0 0.0
    %785 = vmatprep.subr.mxu0 0.0
    %786 = vmatpush1.msra.mxu0 0.0
    %787 = vmatprep.subr.mxu0 0.0
    %788 = vmatpush1.msra.mxu0 0.0
    %789 = vmatprep.subr.mxu0 0.0
    %790 = vmatpush1.msra.mxu0 0.0
    %791 = vmatprep.subr.mxu0 0.0
    %792 = vmatpush1.msra.mxu0 0.0
    %793 = vmatprep.subr.mxu0 0.0
    %794 = vmatpush1.msra.mxu0 0.0
    %795 = vmatprep.subr.mxu0 0.0
    %796 = vmatpush1.msra.mxu0 0.0
    %797 = vmatprep.subr.mxu0 0.0
    %798 = vmatpush1.msra.mxu0 0.0
    %799 = vmatprep.mubr.f32.mxu0 0.0
    %800 = vmatmul.mubr.f32.gmra.mrb[0].mxu0 %v733
    %v801 = vpop.f32.mrb[0].mxu0
    %v802 = vadd.f32 0.0, %v801
    %v803 = vpop.f32.mrb[0].mxu0
    %804 = vdwg.mxu0
    %805 = vrot.lane.b32.xlu0 %v138, 112
    %v806 = vpop.permute.xlu0 %805
    %807 = vrot.lane.b32.xlu0 %v138, 80
    %v808 = vpop.permute.xlu0 %807
    %v809 = vsel %vm149, %v806, 0
    %v811 = vsel %vm149, %v808, 0
    %813 = vmatprep.subr.mxu0 0.0
    %814 = vmatpush1.xpose.msra.mxu0 %v811
    %815 = vmatprep.subr.mxu0 0.0
    %816 = vmatpush1.xpose.msra.mxu0 0.0
    %817 = vmatprep.subr.mxu0 0.0
    %818 = vmatpush1.xpose.msra.mxu0 0.0
    %819 = vmatprep.subr.mxu0 0.0
    %820 = vmatpush1.xpose.msra.mxu0 0.0
    %821 = vmatprep.subr.mxu0 0.0
    %822 = vmatpush1.xpose.msra.mxu0 0.0
    %823 = vmatprep.subr.mxu0 0.0
    %824 = vmatpush1.xpose.msra.mxu0 0.0
    %825 = vmatprep.subr.mxu0 0.0
    %826 = vmatpush1.xpose.msra.mxu0 0.0
    %827 = vmatprep.subr.mxu0 0.0
    %828 = vmatpush1.xpose.msra.mxu0 0.0
    %829 = vmatprep.subr.mxu0 0.0
    %830 = vmatpush1.xpose.msra.mxu0 0.0
    %831 = vmatprep.subr.mxu0 0.0
    %832 = vmatpush1.xpose.msra.mxu0 0.0
    %833 = vmatprep.subr.mxu0 0.0
    %834 = vmatpush1.xpose.msra.mxu0 0.0
    %835 = vmatprep.subr.mxu0 0.0
    %836 = vmatpush1.xpose.msra.mxu0 0.0
    %837 = vmatprep.subr.mxu0 0.0
    %838 = vmatpush1.xpose.msra.mxu0 0.0
    %839 = vmatprep.subr.mxu0 0.0
    %840 = vmatpush1.xpose.msra.mxu0 0.0
    %841 = vmatprep.subr.mxu0 0.0
    %842 = vmatpush1.xpose.msra.mxu0 0.0
    %843 = vmatprep.subr.mxu0 0.0
    %844 = vmatpush1.xpose.msra.mxu0 0.0
    %845 = vmatprep.subr.mxu0 0.0
    %846 = vmatpush1.xpose.msra.mxu0 0.0
    %847 = vmatprep.subr.mxu0 0.0
    %848 = vmatpush1.xpose.msra.mxu0 0.0
    %849 = vmatprep.subr.mxu0 0.0
    %850 = vmatpush1.xpose.msra.mxu0 0.0
    %851 = vmatprep.subr.mxu0 0.0
    %852 = vmatpush1.xpose.msra.mxu0 0.0
    %853 = vmatprep.subr.mxu0 0.0
    %854 = vmatpush1.xpose.msra.mxu0 0.0
    %855 = vmatprep.subr.mxu0 0.0
    %856 = vmatpush1.xpose.msra.mxu0 0.0
    %857 = vmatprep.subr.mxu0 0.0
    %858 = vmatpush1.xpose.msra.mxu0 0.0
    %859 = vmatprep.subr.mxu0 0.0
    %860 = vmatpush1.xpose.msra.mxu0 0.0
    %861 = vmatprep.subr.mxu0 0.0
    %862 = vmatpush1.xpose.msra.mxu0 0.0
    %863 = vmatprep.subr.mxu0 0.0
    %864 = vmatpush1.xpose.msra.mxu0 0.0
    %865 = vmatprep.subr.mxu0 0.0
    %866 = vmatpush1.xpose.msra.mxu0 0.0
    %867 = vmatprep.subr.mxu0 0.0
    %868 = vmatpush1.xpose.msra.mxu0 0.0
    %869 = vmatprep.subr.mxu0 0.0
    %870 = vmatpush1.xpose.msra.mxu0 0.0
    %871 = vmatprep.subr.mxu0 0.0
    %872 = vmatpush1.xpose.msra.mxu0 0.0
    %873 = vmatprep.subr.mxu0 0.0
    %874 = vmatpush1.xpose.msra.mxu0 0.0
    %875 = vmatprep.subr.mxu0 0.0
    %876 = vmatpush1.xpose.msra.mxu0 0.0
    %877 = vmatprep.mubr.f32.mxu0 0.0
    %878 = vmatmul.mubr.f32.gmra.mrb[0].mxu0 %v809
    %v879 = vpop.f32.mrb[0].mxu0
    %v880 = vadd.f32 0.0, %v879
    %v881 = vpop.f32.mrb[0].mxu0
    %882 = vdwg.mxu0
    %883 = vrot.lane.b32.xlu0 %v143, 112
    %v884 = vpop.permute.xlu0 %883
    %885 = vrot.lane.b32.xlu0 %v143, 80
    %v886 = vpop.permute.xlu0 %885
    %v887 = vsel %vm149, %v884, 0
    %v889 = vsel %vm149, %v886, 0
    %891 = vmatprep.subr.mxu0 0.0
    %892 = vmatpush1.xpose.msra.mxu0 %v889
    %893 = vmatprep.subr.mxu0 0.0
    %894 = vmatpush1.xpose.msra.mxu0 0.0
    %895 = vmatprep.subr.mxu0 0.0
    %896 = vmatpush1.xpose.msra.mxu0 0.0
    %897 = vmatprep.subr.mxu0 0.0
    %898 = vmatpush1.xpose.msra.mxu0 0.0
    %899 = vmatprep.subr.mxu0 0.0
    %900 = vmatpush1.xpose.msra.mxu0 0.0
    %901 = vmatprep.subr.mxu0 0.0
    %902 = vmatpush1.xpose.msra.mxu0 0.0
    %903 = vmatprep.subr.mxu0 0.0
    %904 = vmatpush1.xpose.msra.mxu0 0.0
    %905 = vmatprep.subr.mxu0 0.0
    %906 = vmatpush1.xpose.msra.mxu0 0.0
    %907 = vmatprep.subr.mxu0 0.0
    %908 = vmatpush1.xpose.msra.mxu0 0.0
    %909 = vmatprep.subr.mxu0 0.0
    %910 = vmatpush1.xpose.msra.mxu0 0.0
    %911 = vmatprep.subr.mxu0 0.0
    %912 = vmatpush1.xpose.msra.mxu0 0.0
    %913 = vmatprep.subr.mxu0 0.0
    %914 = vmatpush1.xpose.msra.mxu0 0.0
    %915 = vmatprep.subr.mxu0 0.0
    %916 = vmatpush1.xpose.msra.mxu0 0.0
    %917 = vmatprep.subr.mxu0 0.0
    %918 = vmatpush1.xpose.msra.mxu0 0.0
    %919 = vmatprep.subr.mxu0 0.0
    %920 = vmatpush1.xpose.msra.mxu0 0.0
    %921 = vmatprep.subr.mxu0 0.0
    %922 = vmatpush1.xpose.msra.mxu0 0.0
    %923 = vmatprep.subr.mxu0 0.0
    %924 = vmatpush1.xpose.msra.mxu0 0.0
    %925 = vmatprep.subr.mxu0 0.0
    %926 = vmatpush1.xpose.msra.mxu0 0.0
    %927 = vmatprep.subr.mxu0 0.0
    %928 = vmatpush1.xpose.msra.mxu0 0.0
    %929 = vmatprep.subr.mxu0 0.0
    %930 = vmatpush1.xpose.msra.mxu0 0.0
    %931 = vmatprep.subr.mxu0 0.0
    %932 = vmatpush1.xpose.msra.mxu0 0.0
    %933 = vmatprep.subr.mxu0 0.0
    %934 = vmatpush1.xpose.msra.mxu0 0.0
    %935 = vmatprep.subr.mxu0 0.0
    %936 = vmatpush1.xpose.msra.mxu0 0.0
    %937 = vmatprep.subr.mxu0 0.0
    %938 = vmatpush1.xpose.msra.mxu0 0.0
    %939 = vmatprep.subr.mxu0 0.0
    %940 = vmatpush1.xpose.msra.mxu0 0.0
    %941 = vmatprep.subr.mxu0 0.0
    %942 = vmatpush1.xpose.msra.mxu0 0.0
    %943 = vmatprep.subr.mxu0 0.0
    %944 = vmatpush1.xpose.msra.mxu0 0.0
    %945 = vmatprep.subr.mxu0 0.0
    %946 = vmatpush1.xpose.msra.mxu0 0.0
    %947 = vmatprep.subr.mxu0 0.0
    %948 = vmatpush1.xpose.msra.mxu0 0.0
    %949 = vmatprep.subr.mxu0 0.0
    %950 = vmatpush1.xpose.msra.mxu0 0.0
    %951 = vmatprep.subr.mxu0 0.0
    %952 = vmatpush1.xpose.msra.mxu0 0.0
    %953 = vmatprep.subr.mxu0 0.0
    %954 = vmatpush1.xpose.msra.mxu0 0.0
    %955 = vmatprep.mubr.f32.mxu0 0.0
    %956 = vmatmul.mubr.f32.gmra.mrb[0].mxu0 %v887
    %v957 = vpop.f32.mrb[0].mxu0
    %v958 = vadd.f32 0.0, %v957
    %v959 = vpop.f32.mrb[0].mxu0
    %960 = vdwg.mxu0
    %v961 = vsel %vm149, %v880, -inf
    %962 = vmax.xlane.f32.xlu0 %v961
    %v963 = vpop.xlane.xlu0 %962
    %v964 = vsel %vm149, %v958, -inf
    %965 = vmax.xlane.f32.xlu0 %v964
    %v966 = vpop.xlane.xlu0 %965
    %v967 = vsub.f32 %v880, %v963
    %v968 = vsub.f32 %v958, %v966
    %v969 = vmul.f32 %v967, 1.442695
    %v970 = vpow.pop %v969
    %v971 = vmul.f32 %v968, 1.442695
    %v972 = vpow.pop %v971
    %v973 = vsel %vm149, %v970, 0.0
    %974 = vadd.xlane.f32.xlu0 %v973
    %v975 = vpop.xlane.xlu0 %974
    %v976 = vsel %vm149, %v972, 0.0
    %977 = vadd.xlane.f32.xlu0 %v976
    %v978 = vpop.xlane.xlu0 %977
    %v979 = vrcp.pop %v975
    %v980 = vrcp.pop %v978
    %v981 = vmul.f32 %v970, %v979
    %v982 = vmul.f32 %v972, %v980
    %983 = vrot.lane.b32.xlu0 %v138, 48
    %v984 = vpop.permute.xlu0 %983
    %v987 = vsel %vm149, %v981, 0
    %989 = vmatprep.subr.mxu0 0.0
    %990 = vmatpush1.msra.mxu0 %v984
    %991 = vmatprep.subr.mxu0 0.0
    %992 = vmatpush1.msra.mxu0 0.0
    %993 = vmatprep.subr.mxu0 0.0
    %994 = vmatpush1.msra.mxu0 0.0
    %995 = vmatprep.subr.mxu0 0.0
    %996 = vmatpush1.msra.mxu0 0.0
    %997 = vmatprep.subr.mxu0 0.0
    %998 = vmatpush1.msra.mxu0 0.0
    %999 = vmatprep.subr.mxu0 0.0
    %1000 = vmatpush1.msra.mxu0 0.0
    %1001 = vmatprep.subr.mxu0 0.0
    %1002 = vmatpush1.msra.mxu0 0.0
    %1003 = vmatprep.subr.mxu0 0.0
    %1004 = vmatpush1.msra.mxu0 0.0
    %1005 = vmatprep.subr.mxu0 0.0
    %1006 = vmatpush1.msra.mxu0 0.0
    %1007 = vmatprep.subr.mxu0 0.0
    %1008 = vmatpush1.msra.mxu0 0.0
    %1009 = vmatprep.subr.mxu0 0.0
    %1010 = vmatpush1.msra.mxu0 0.0
    %1011 = vmatprep.subr.mxu0 0.0
    %1012 = vmatpush1.msra.mxu0 0.0
    %1013 = vmatprep.subr.mxu0 0.0
    %1014 = vmatpush1.msra.mxu0 0.0
    %1015 = vmatprep.subr.mxu0 0.0
    %1016 = vmatpush1.msra.mxu0 0.0
    %1017 = vmatprep.subr.mxu0 0.0
    %1018 = vmatpush1.msra.mxu0 0.0
    %1019 = vmatprep.subr.mxu0 0.0
    %1020 = vmatpush1.msra.mxu0 0.0
    %1021 = vmatprep.subr.mxu0 0.0
    %1022 = vmatpush1.msra.mxu0 0.0
    %1023 = vmatprep.subr.mxu0 0.0
    %1024 = vmatpush1.msra.mxu0 0.0
    %1025 = vmatprep.subr.mxu0 0.0
    %1026 = vmatpush1.msra.mxu0 0.0
    %1027 = vmatprep.subr.mxu0 0.0
    %1028 = vmatpush1.msra.mxu0 0.0
    %1029 = vmatprep.subr.mxu0 0.0
    %1030 = vmatpush1.msra.mxu0 0.0
    %1031 = vmatprep.subr.mxu0 0.0
    %1032 = vmatpush1.msra.mxu0 0.0
    %1033 = vmatprep.subr.mxu0 0.0
    %1034 = vmatpush1.msra.mxu0 0.0
    %1035 = vmatprep.subr.mxu0 0.0
    %1036 = vmatpush1.msra.mxu0 0.0
    %1037 = vmatprep.subr.mxu0 0.0
    %1038 = vmatpush1.msra.mxu0 0.0
    %1039 = vmatprep.subr.mxu0 0.0
    %1040 = vmatpush1.msra.mxu0 0.0
    %1041 = vmatprep.subr.mxu0 0.0
    %1042 = vmatpush1.msra.mxu0 0.0
    %1043 = vmatprep.subr.mxu0 0.0
    %1044 = vmatpush1.msra.mxu0 0.0
    %1045 = vmatprep.subr.mxu0 0.0
    %1046 = vmatpush1.msra.mxu0 0.0
    %1047 = vmatprep.subr.mxu0 0.0
    %1048 = vmatpush1.msra.mxu0 0.0
    %1049 = vmatprep.subr.mxu0 0.0
    %1050 = vmatpush1.msra.mxu0 0.0
    %1051 = vmatprep.subr.mxu0 0.0
    %1052 = vmatpush1.msra.mxu0 0.0
    %1053 = vmatprep.mubr.f32.mxu0 0.0
    %1054 = vmatmul.mubr.f32.gmra.mrb[0].mxu0 %v987
    %v1055 = vpop.f32.mrb[0].mxu0
    %v1056 = vadd.f32 0.0, %v1055
    %v1057 = vpop.f32.mrb[0].mxu0
    %1058 = vdwg.mxu0
    %1059 = vrot.lane.b32.xlu0 %v143, 48
    %v1060 = vpop.permute.xlu0 %1059
    %v1063 = vsel %vm149, %v982, 0
    %1065 = vmatprep.subr.mxu0 0.0
    %1066 = vmatpush1.msra.mxu0 %v1060
    %1067 = vmatprep.subr.mxu0 0.0
    %1068 = vmatpush1.msra.mxu0 0.0
    %1069 = vmatprep.subr.mxu0 0.0
    %1070 = vmatpush1.msra.mxu0 0.0
    %1071 = vmatprep.subr.mxu0 0.0
    %1072 = vmatpush1.msra.mxu0 0.0
    %1073 = vmatprep.subr.mxu0 0.0
    %1074 = vmatpush1.msra.mxu0 0.0
    %1075 = vmatprep.subr.mxu0 0.0
    %1076 = vmatpush1.msra.mxu0 0.0
    %1077 = vmatprep.subr.mxu0 0.0
    %1078 = vmatpush1.msra.mxu0 0.0
    %1079 = vmatprep.subr.mxu0 0.0
    %1080 = vmatpush1.msra.mxu0 0.0
    %1081 = vmatprep.subr.mxu0 0.0
    %1082 = vmatpush1.msra.mxu0 0.0
    %1083 = vmatprep.subr.mxu0 0.0
    %1084 = vmatpush1.msra.mxu0 0.0
    %1085 = vmatprep.subr.mxu0 0.0
    %1086 = vmatpush1.msra.mxu0 0.0
    %1087 = vmatprep.subr.mxu0 0.0
    %1088 = vmatpush1.msra.mxu0 0.0
    %1089 = vmatprep.subr.mxu0 0.0
    %1090 = vmatpush1.msra.mxu0 0.0
    %1091 = vmatprep.subr.mxu0 0.0
    %1092 = vmatpush1.msra.mxu0 0.0
    %1093 = vmatprep.subr.mxu0 0.0
    %1094 = vmatpush1.msra.mxu0 0.0
    %1095 = vmatprep.subr.mxu0 0.0
    %1096 = vmatpush1.msra.mxu0 0.0
    %1097 = vmatprep.subr.mxu0 0.0
    %1098 = vmatpush1.msra.mxu0 0.0
    %1099 = vmatprep.subr.mxu0 0.0
    %1100 = vmatpush1.msra.mxu0 0.0
    %1101 = vmatprep.subr.mxu0 0.0
    %1102 = vmatpush1.msra.mxu0 0.0
    %1103 = vmatprep.subr.mxu0 0.0
    %1104 = vmatpush1.msra.mxu0 0.0
    %1105 = vmatprep.subr.mxu0 0.0
    %1106 = vmatpush1.msra.mxu0 0.0
    %1107 = vmatprep.subr.mxu0 0.0
    %1108 = vmatpush1.msra.mxu0 0.0
    %1109 = vmatprep.subr.mxu0 0.0
    %1110 = vmatpush1.msra.mxu0 0.0
    %1111 = vmatprep.subr.mxu0 0.0
    %1112 = vmatpush1.msra.mxu0 0.0
    %1113 = vmatprep.subr.mxu0 0.0
    %1114 = vmatpush1.msra.mxu0 0.0
    %1115 = vmatprep.subr.mxu0 0.0
    %1116 = vmatpush1.msra.mxu0 0.0
    %1117 = vmatprep.subr.mxu0 0.0
    %1118 = vmatpush1.msra.mxu0 0.0
    %1119 = vmatprep.subr.mxu0 0.0
    %1120 = vmatpush1.msra.mxu0 0.0
    %1121 = vmatprep.subr.mxu0 0.0
    %1122 = vmatpush1.msra.mxu0 0.0
    %1123 = vmatprep.subr.mxu0 0.0
    %1124 = vmatpush1.msra.mxu0 0.0
    %1125 = vmatprep.subr.mxu0 0.0
    %1126 = vmatpush1.msra.mxu0 0.0
    %1127 = vmatprep.subr.mxu0 0.0
    %1128 = vmatpush1.msra.mxu0 0.0
    %1129 = vmatprep.mubr.f32.mxu0 0.0
    %1130 = vmatmul.mubr.f32.gmra.mrb[0].mxu0 %v1063
    %v1131 = vpop.f32.mrb[0].mxu0
    %v1132 = vadd.f32 0.0, %v1131
    %v1133 = vpop.f32.mrb[0].mxu0
    %1134 = vdwg.mxu0
    %1135 = vrot.lane.b32.xlu0 %v138, 104
    %v1136 = vpop.permute.xlu0 %1135
    %1137 = vrot.lane.b32.xlu0 %v138, 72
    %v1138 = vpop.permute.xlu0 %1137
    %v1139 = vsel %vm149, %v1136, 0
    %v1141 = vsel %vm149, %v1138, 0
    %1143 = vmatprep.subr.mxu0 0.0
    %1144 = vmatpush1.xpose.msra.mxu0 %v1141
    %1145 = vmatprep.subr.mxu0 0.0
    %1146 = vmatpush1.xpose.msra.mxu0 0.0
    %1147 = vmatprep.subr.mxu0 0.0
    %1148 = vmatpush1.xpose.msra.mxu0 0.0
    %1149 = vmatprep.subr.mxu0 0.0
    %1150 = vmatpush1.xpose.msra.mxu0 0.0
    %1151 = vmatprep.subr.mxu0 0.0
    %1152 = vmatpush1.xpose.msra.mxu0 0.0
    %1153 = vmatprep.subr.mxu0 0.0
    %1154 = vmatpush1.xpose.msra.mxu0 0.0
    %1155 = vmatprep.subr.mxu0 0.0
    %1156 = vmatpush1.xpose.msra.mxu0 0.0
    %1157 = vmatprep.subr.mxu0 0.0
    %1158 = vmatpush1.xpose.msra.mxu0 0.0
    %1159 = vmatprep.subr.mxu0 0.0
    %1160 = vmatpush1.xpose.msra.mxu0 0.0
    %1161 = vmatprep.subr.mxu0 0.0
    %1162 = vmatpush1.xpose.msra.mxu0 0.0
    %1163 = vmatprep.subr.mxu0 0.0
    %1164 = vmatpush1.xpose.msra.mxu0 0.0
    %1165 = vmatprep.subr.mxu0 0.0
    %1166 = vmatpush1.xpose.msra.mxu0 0.0
    %1167 = vmatprep.subr.mxu0 0.0
    %1168 = vmatpush1.xpose.msra.mxu0 0.0
    %1169 = vmatprep.subr.mxu0 0.0
    %1170 = vmatpush1.xpose.msra.mxu0 0.0
    %1171 = vmatprep.subr.mxu0 0.0
    %1172 = vmatpush1.xpose.msra.mxu0 0.0
    %1173 = vmatprep.subr.mxu0 0.0
    %1174 = vmatpush1.xpose.msra.mxu0 0.0
    %1175 = vmatprep.subr.mxu0 0.0
    %1176 = vmatpush1.xpose.msra.mxu0 0.0
    %1177 = vmatprep.subr.mxu0 0.0
    %1178 = vmatpush1.xpose.msra.mxu0 0.0
    %1179 = vmatprep.subr.mxu0 0.0
    %1180 = vmatpush1.xpose.msra.mxu0 0.0
    %1181 = vmatprep.subr.mxu0 0.0
    %1182 = vmatpush1.xpose.msra.mxu0 0.0
    %1183 = vmatprep.subr.mxu0 0.0
    %1184 = vmatpush1.xpose.msra.mxu0 0.0
    %1185 = vmatprep.subr.mxu0 0.0
    %1186 = vmatpush1.xpose.msra.mxu0 0.0
    %1187 = vmatprep.subr.mxu0 0.0
    %1188 = vmatpush1.xpose.msra.mxu0 0.0
    %1189 = vmatprep.subr.mxu0 0.0
    %1190 = vmatpush1.xpose.msra.mxu0 0.0
    %1191 = vmatprep.subr.mxu0 0.0
    %1192 = vmatpush1.xpose.msra.mxu0 0.0
    %1193 = vmatprep.subr.mxu0 0.0
    %1194 = vmatpush1.xpose.msra.mxu0 0.0
    %1195 = vmatprep.subr.mxu0 0.0
    %1196 = vmatpush1.xpose.msra.mxu0 0.0
    %1197 = vmatprep.subr.mxu0 0.0
    %1198 = vmatpush1.xpose.msra.mxu0 0.0
    %1199 = vmatprep.subr.mxu0 0.0
    %1200 = vmatpush1.xpose.msra.mxu0 0.0
    %1201 = vmatprep.subr.mxu0 0.0
    %1202 = vmatpush1.xpose.msra.mxu0 0.0
    %1203 = vmatprep.subr.mxu0 0.0
    %1204 = vmatpush1.xpose.msra.mxu0 0.0
    %1205 = vmatprep.subr.mxu0 0.0
    %1206 = vmatpush1.xpose.msra.mxu0 0.0
    %1207 = vmatprep.mubr.f32.mxu0 0.0
    %1208 = vmatmul.mubr.f32.gmra.mrb[0].mxu0 %v1139
    %v1209 = vpop.f32.mrb[0].mxu0
    %v1210 = vadd.f32 0.0, %v1209
    %v1211 = vpop.f32.mrb[0].mxu0
    %1212 = vdwg.mxu0
    %1213 = vrot.lane.b32.xlu0 %v143, 104
    %v1214 = vpop.permute.xlu0 %1213
    %1215 = vrot.lane.b32.xlu0 %v143, 72
    %v1216 = vpop.permute.xlu0 %1215
    %v1217 = vsel %vm149, %v1214, 0
    %v1219 = vsel %vm149, %v1216, 0
    %1221 = vmatprep.subr.mxu0 0.0
    %1222 = vmatpush1.xpose.msra.mxu0 %v1219
    %1223 = vmatprep.subr.mxu0 0.0
    %1224 = vmatpush1.xpose.msra.mxu0 0.0
    %1225 = vmatprep.subr.mxu0 0.0
    %1226 = vmatpush1.xpose.msra.mxu0 0.0
    %1227 = vmatprep.subr.mxu0 0.0
    %1228 = vmatpush1.xpose.msra.mxu0 0.0
    %1229 = vmatprep.subr.mxu0 0.0
    %1230 = vmatpush1.xpose.msra.mxu0 0.0
    %1231 = vmatprep.subr.mxu0 0.0
    %1232 = vmatpush1.xpose.msra.mxu0 0.0
    %1233 = vmatprep.subr.mxu0 0.0
    %1234 = vmatpush1.xpose.msra.mxu0 0.0
    %1235 = vmatprep.subr.mxu0 0.0
    %1236 = vmatpush1.xpose.msra.mxu0 0.0
    %1237 = vmatprep.subr.mxu0 0.0
    %1238 = vmatpush1.xpose.msra.mxu0 0.0
    %1239 = vmatprep.subr.mxu0 0.0
    %1240 = vmatpush1.xpose.msra.mxu0 0.0
    %1241 = vmatprep.subr.mxu0 0.0
    %1242 = vmatpush1.xpose.msra.mxu0 0.0
    %1243 = vmatprep.subr.mxu0 0.0
    %1244 = vmatpush1.xpose.msra.mxu0 0.0
    %1245 = vmatprep.subr.mxu0 0.0
    %1246 = vmatpush1.xpose.msra.mxu0 0.0
    %1247 = vmatprep.subr.mxu0 0.0
    %1248 = vmatpush1.xpose.msra.mxu0 0.0
    %1249 = vmatprep.subr.mxu0 0.0
    %1250 = vmatpush1.xpose.msra.mxu0 0.0
    %1251 = vmatprep.subr.mxu0 0.0
    %1252 = vmatpush1.xpose.msra.mxu0 0.0
    %1253 = vmatprep.subr.mxu0 0.0
    %1254 = vmatpush1.xpose.msra.mxu0 0.0
    %1255 = vmatprep.subr.mxu0 0.0
    %1256 = vmatpush1.xpose.msra.mxu0 0.0
    %1257 = vmatprep.subr.mxu0 0.0
    %1258 = vmatpush1.xpose.msra.mxu0 0.0
    %1259 = vmatprep.subr.mxu0 0.0
    %1260 = vmatpush1.xpose.msra.mxu0 0.0
    %1261 = vmatprep.subr.mxu0 0.0
    %1262 = vmatpush1.xpose.msra.mxu0 0.0
    %1263 = vmatprep.subr.mxu0 0.0
    %1264 = vmatpush1.xpose.msra.mxu0 0.0
    %1265 = vmatprep.subr.mxu0 0.0
    %1266 = vmatpush1.xpose.msra.mxu0 0.0
    %1267 = vmatprep.subr.mxu0 0.0
    %1268 = vmatpush1.xpose.msra.mxu0 0.0
    %1269 = vmatprep.subr.mxu0 0.0
    %1270 = vmatpush1.xpose.msra.mxu0 0.0
    %1271 = vmatprep.subr.mxu0 0.0
    %1272 = vmatpush1.xpose.msra.mxu0 0.0
    %1273 = vmatprep.subr.mxu0 0.0
    %1274 = vmatpush1.xpose.msra.mxu0 0.0
    %1275 = vmatprep.subr.mxu0 0.0
    %1276 = vmatpush1.xpose.msra.mxu0 0.0
    %1277 = vmatprep.subr.mxu0 0.0
    %1278 = vmatpush1.xpose.msra.mxu0 0.0
    %1279 = vmatprep.subr.mxu0 0.0
    %1280 = vmatpush1.xpose.msra.mxu0 0.0
    %1281 = vmatprep.subr.mxu0 0.0
    %1282 = vmatpush1.xpose.msra.mxu0 0.0
    %1283 = vmatprep.subr.mxu0 0.0
    %1284 = vmatpush1.xpose.msra.mxu0 0.0
    %1285 = vmatprep.mubr.f32.mxu0 0.0
    %1286 = vmatmul.mubr.f32.gmra.mrb[0].mxu0 %v1217
    %v1287 = vpop.f32.mrb[0].mxu0
    %v1288 = vadd.f32 0.0, %v1287
    %v1289 = vpop.f32.mrb[0].mxu0
    %1290 = vdwg.mxu0
    %v1291 = vsel %vm149, %v1210, -inf
    %1292 = vmax.xlane.f32.xlu0 %v1291
    %v1293 = vpop.xlane.xlu0 %1292
    %v1294 = vsel %vm149, %v1288, -inf
    %1295 = vmax.xlane.f32.xlu0 %v1294
    %v1296 = vpop.xlane.xlu0 %1295
    %v1297 = vsub.f32 %v1210, %v1293
    %v1298 = vsub.f32 %v1288, %v1296
    %v1299 = vmul.f32 %v1297, 1.442695
    %v1300 = vpow.pop %v1299
    %v1301 = vmul.f32 %v1298, 1.442695
    %v1302 = vpow.pop %v1301
    %v1303 = vsel %vm149, %v1300, 0.0
    %1304 = vadd.xlane.f32.xlu0 %v1303
    %v1305 = vpop.xlane.xlu0 %1304
    %v1306 = vsel %vm149, %v1302, 0.0
    %1307 = vadd.xlane.f32.xlu0 %v1306
    %v1308 = vpop.xlane.xlu0 %1307
    %v1309 = vrcp.pop %v1305
    %v1310 = vrcp.pop %v1308
    %v1311 = vmul.f32 %v1300, %v1309
    %v1312 = vmul.f32 %v1302, %v1310
    %1313 = vrot.lane.b32.xlu0 %v138, 40
    %v1314 = vpop.permute.xlu0 %1313
    %v1317 = vsel %vm149, %v1311, 0
    %1319 = vmatprep.subr.mxu0 0.0
    %1320 = vmatpush1.msra.mxu0 %v1314
    %1321 = vmatprep.subr.mxu0 0.0
    %1322 = vmatpush1.msra.mxu0 0.0
    %1323 = vmatprep.subr.mxu0 0.0
    %1324 = vmatpush1.msra.mxu0 0.0
    %1325 = vmatprep.subr.mxu0 0.0
    %1326 = vmatpush1.msra.mxu0 0.0
    %1327 = vmatprep.subr.mxu0 0.0
    %1328 = vmatpush1.msra.mxu0 0.0
    %1329 = vmatprep.subr.mxu0 0.0
    %1330 = vmatpush1.msra.mxu0 0.0
    %1331 = vmatprep.subr.mxu0 0.0
    %1332 = vmatpush1.msra.mxu0 0.0
    %1333 = vmatprep.subr.mxu0 0.0
    %1334 = vmatpush1.msra.mxu0 0.0
    %1335 = vmatprep.subr.mxu0 0.0
    %1336 = vmatpush1.msra.mxu0 0.0
    %1337 = vmatprep.subr.mxu0 0.0
    %1338 = vmatpush1.msra.mxu0 0.0
    %1339 = vmatprep.subr.mxu0 0.0
    %1340 = vmatpush1.msra.mxu0 0.0
    %1341 = vmatprep.subr.mxu0 0.0
    %1342 = vmatpush1.msra.mxu0 0.0
    %1343 = vmatprep.subr.mxu0 0.0
    %1344 = vmatpush1.msra.mxu0 0.0
    %1345 = vmatprep.subr.mxu0 0.0
    %1346 = vmatpush1.msra.mxu0 0.0
    %1347 = vmatprep.subr.mxu0 0.0
    %1348 = vmatpush1.msra.mxu0 0.0
    %1349 = vmatprep.subr.mxu0 0.0
    %1350 = vmatpush1.msra.mxu0 0.0
    %1351 = vmatprep.subr.mxu0 0.0
    %1352 = vmatpush1.msra.mxu0 0.0
    %1353 = vmatprep.subr.mxu0 0.0
    %1354 = vmatpush1.msra.mxu0 0.0
    %1355 = vmatprep.subr.mxu0 0.0
    %1356 = vmatpush1.msra.mxu0 0.0
    %1357 = vmatprep.subr.mxu0 0.0
    %1358 = vmatpush1.msra.mxu0 0.0
    %1359 = vmatprep.subr.mxu0 0.0
    %1360 = vmatpush1.msra.mxu0 0.0
    %1361 = vmatprep.subr.mxu0 0.0
    %1362 = vmatpush1.msra.mxu0 0.0
    %1363 = vmatprep.subr.mxu0 0.0
    %1364 = vmatpush1.msra.mxu0 0.0
    %1365 = vmatprep.subr.mxu0 0.0
    %1366 = vmatpush1.msra.mxu0 0.0
    %1367 = vmatprep.subr.mxu0 0.0
    %1368 = vmatpush1.msra.mxu0 0.0
    %1369 = vmatprep.subr.mxu0 0.0
    %1370 = vmatpush1.msra.mxu0 0.0
    %1371 = vmatprep.subr.mxu0 0.0
    %1372 = vmatpush1.msra.mxu0 0.0
    %1373 = vmatprep.subr.mxu0 0.0
    %1374 = vmatpush1.msra.mxu0 0.0
    %1375 = vmatprep.subr.mxu0 0.0
    %1376 = vmatpush1.msra.mxu0 0.0
    %1377 = vmatprep.subr.mxu0 0.0
    %1378 = vmatpush1.msra.mxu0 0.0
    %1379 = vmatprep.subr.mxu0 0.0
    %1380 = vmatpush1.msra.mxu0 0.0
    %1381 = vmatprep.subr.mxu0 0.0
    %1382 = vmatpush1.msra.mxu0 0.0
    %1383 = vmatprep.mubr.f32.mxu0 0.0
    %1384 = vmatmul.mubr.f32.gmra.mrb[0].mxu0 %v1317
    %v1385 = vpop.f32.mrb[0].mxu0
    %v1386 = vadd.f32 0.0, %v1385
    %v1387 = vpop.f32.mrb[0].mxu0
    %1388 = vdwg.mxu0
    %1389 = vrot.lane.b32.xlu0 %v143, 40
    %v1390 = vpop.permute.xlu0 %1389
    %v1393 = vsel %vm149, %v1312, 0
    %1395 = vmatprep.subr.mxu0 0.0
    %1396 = vmatpush1.msra.mxu0 %v1390
    %1397 = vmatprep.subr.mxu0 0.0
    %1398 = vmatpush1.msra.mxu0 0.0
    %1399 = vmatprep.subr.mxu0 0.0
    %1400 = vmatpush1.msra.mxu0 0.0
    %1401 = vmatprep.subr.mxu0 0.0
    %1402 = vmatpush1.msra.mxu0 0.0
    %1403 = vmatprep.subr.mxu0 0.0
    %1404 = vmatpush1.msra.mxu0 0.0
    %1405 = vmatprep.subr.mxu0 0.0
    %1406 = vmatpush1.msra.mxu0 0.0
    %1407 = vmatprep.subr.mxu0 0.0
    %1408 = vmatpush1.msra.mxu0 0.0
    %1409 = vmatprep.subr.mxu0 0.0
    %1410 = vmatpush1.msra.mxu0 0.0
    %1411 = vmatprep.subr.mxu0 0.0
    %1412 = vmatpush1.msra.mxu0 0.0
    %1413 = vmatprep.subr.mxu0 0.0
    %1414 = vmatpush1.msra.mxu0 0.0
    %1415 = vmatprep.subr.mxu0 0.0
    %1416 = vmatpush1.msra.mxu0 0.0
    %1417 = vmatprep.subr.mxu0 0.0
    %1418 = vmatpush1.msra.mxu0 0.0
    %1419 = vmatprep.subr.mxu0 0.0
    %1420 = vmatpush1.msra.mxu0 0.0
    %1421 = vmatprep.subr.mxu0 0.0
    %1422 = vmatpush1.msra.mxu0 0.0
    %1423 = vmatprep.subr.mxu0 0.0
    %1424 = vmatpush1.msra.mxu0 0.0
    %1425 = vmatprep.subr.mxu0 0.0
    %1426 = vmatpush1.msra.mxu0 0.0
    %1427 = vmatprep.subr.mxu0 0.0
    %1428 = vmatpush1.msra.mxu0 0.0
    %1429 = vmatprep.subr.mxu0 0.0
    %1430 = vmatpush1.msra.mxu0 0.0
    %1431 = vmatprep.subr.mxu0 0.0
    %1432 = vmatpush1.msra.mxu0 0.0
    %1433 = vmatprep.subr.mxu0 0.0
    %1434 = vmatpush1.msra.mxu0 0.0
    %1435 = vmatprep.subr.mxu0 0.0
    %1436 = vmatpush1.msra.mxu0 0.0
    %1437 = vmatprep.subr.mxu0 0.0
    %1438 = vmatpush1.msra.mxu0 0.0
    %1439 = vmatprep.subr.mxu0 0.0
    %1440 = vmatpush1.msra.mxu0 0.0
    %1441 = vmatprep.subr.mxu0 0.0
    %1442 = vmatpush1.msra.mxu0 0.0
    %1443 = vmatprep.subr.mxu0 0.0
    %1444 = vmatpush1.msra.mxu0 0.0
    %1445 = vmatprep.subr.mxu0 0.0
    %1446 = vmatpush1.msra.mxu0 0.0
    %1447 = vmatprep.subr.mxu0 0.0
    %1448 = vmatpush1.msra.mxu0 0.0
    %1449 = vmatprep.subr.mxu0 0.0
    %1450 = vmatpush1.msra.mxu0 0.0
    %1451 = vmatprep.subr.mxu0 0.0
    %1452 = vmatpush1.msra.mxu0 0.0
    %1453 = vmatprep.subr.mxu0 0.0
    %1454 = vmatpush1.msra.mxu0 0.0
    %1455 = vmatprep.subr.mxu0 0.0
    %1456 = vmatpush1.msra.mxu0 0.0
    %1457 = vmatprep.subr.mxu0 0.0
    %1458 = vmatpush1.msra.mxu0 0.0
    %1459 = vmatprep.mubr.f32.mxu0 0.0
    %1460 = vmatmul.mubr.f32.gmra.mrb[0].mxu0 %v1393
    %v1461 = vpop.f32.mrb[0].mxu0
    %v1462 = vadd.f32 0.0, %v1461
    %v1463 = vpop.f32.mrb[0].mxu0
    %1464 = vdwg.mxu0
    %1467 = vrot.lane.b32.xlu0 %v726, 8
    %v1468 = vpop.permute.xlu0 %1467
    %1469 = vrot.lane.b32.xlu0 %v802, 8
    %v1470 = vpop.permute.xlu0 %1469
    %1475 = vrot.lane.b32.xlu0 %v1056, 16
    %v1476 = vpop.permute.xlu0 %1475
    %1477 = vrot.lane.b32.xlu0 %v1132, 16
    %v1478 = vpop.permute.xlu0 %1477
    %1483 = vrot.lane.b32.xlu0 %v1386, 24
    %v1484 = vpop.permute.xlu0 %1483
    %1485 = vrot.lane.b32.xlu0 %v1462, 24
    %v1486 = vpop.permute.xlu0 %1485
    %v1489 = vsel %vm149, %v396, %v1468
    %v1490 = vsel %vm149, %v472, %v1470
    %vm1491 = vcmask 130048
    %v1492 = vsel %vm1491, %v1489, %v1476
    %v1493 = vsel %vm1491, %v1490, %v1478
    %vm1494 = vcmask 195584
    %v1495 = vsel %vm1494, %v1492, %v1484
    %v1496 = vsel %vm1494, %v1493, %v1486
    %v1497 = vld [vmem:[%s3] sm:$0xff]
    %v1498 = vld [vmem:[%s3 + $0x8] sm:$0xff]
    %v1499 = vld [vmem:[%s3 + $0x10] sm:$0xff]
    %v1500 = vld [vmem:[%s3 + $0x18] sm:$0xff]
    %v1501 = vld [vmem:[%s4] sm:$0x1]
    %v1503 = vlaneseq
    %v1504 = vshrl.u32 %v1503, 7
    %v1505 = vsub.s32 0, %v1504
    %v1506 = vrot.slane %v1501, %v1505
    %v1509 = vsel %vm64, %v1495, 0
    %v1512 = vsel %vm64, %v1496, 0
    %1514 = vmatprep.subr.mxu0 0.0
    %1515 = vmatpush1.msra.mxu0 %v1497
    %1516 = vmatprep.subr.mxu0 0.0
    %1517 = vmatpush1.msra.mxu0 %v1498
    %1518 = vmatprep.subr.mxu0 0.0
    %1519 = vmatpush1.msra.mxu0 %v1499
    %1520 = vmatprep.subr.mxu0 0.0
    %1521 = vmatpush1.msra.mxu0 %v1500
    %1522 = vmatprep.subr.mxu0 0.0
    %1523 = vmatpush1.msra.mxu0 0.0
    %1524 = vmatprep.subr.mxu0 0.0
    %1525 = vmatpush1.msra.mxu0 0.0
    %1526 = vmatprep.subr.mxu0 0.0
    %1527 = vmatpush1.msra.mxu0 0.0
    %1528 = vmatprep.subr.mxu0 0.0
    %1529 = vmatpush1.msra.mxu0 0.0
    %1530 = vmatprep.subr.mxu0 0.0
    %1531 = vmatpush1.msra.mxu0 0.0
    %1532 = vmatprep.subr.mxu0 0.0
    %1533 = vmatpush1.msra.mxu0 0.0
    %1534 = vmatprep.subr.mxu0 0.0
    %1535 = vmatpush1.msra.mxu0 0.0
    %1536 = vmatprep.subr.mxu0 0.0
    %1537 = vmatpush1.msra.mxu0 0.0
    %1538 = vmatprep.subr.mxu0 0.0
    %1539 = vmatpush1.msra.mxu0 0.0
    %1540 = vmatprep.subr.mxu0 0.0
    %1541 = vmatpush1.msra.mxu0 0.0
    %1542 = vmatprep.subr.mxu0 0.0
    %1543 = vmatpush1.msra.mxu0 0.0
    %1544 = vmatprep.subr.mxu0 0.0
    %1545 = vmatpush1.msra.mxu0 0.0
    %1546 = vmatprep.subr.mxu0 0.0
    %1547 = vmatpush1.msra.mxu0 0.0
    %1548 = vmatprep.subr.mxu0 0.0
    %1549 = vmatpush1.msra.mxu0 0.0
    %1550 = vmatprep.subr.mxu0 0.0
    %1551 = vmatpush1.msra.mxu0 0.0
    %1552 = vmatprep.subr.mxu0 0.0
    %1553 = vmatpush1.msra.mxu0 0.0
    %1554 = vmatprep.subr.mxu0 0.0
    %1555 = vmatpush1.msra.mxu0 0.0
    %1556 = vmatprep.subr.mxu0 0.0
    %1557 = vmatpush1.msra.mxu0 0.0
    %1558 = vmatprep.subr.mxu0 0.0
    %1559 = vmatpush1.msra.mxu0 0.0
    %1560 = vmatprep.subr.mxu0 0.0
    %1561 = vmatpush1.msra.mxu0 0.0
    %1562 = vmatprep.subr.mxu0 0.0
    %1563 = vmatpush1.msra.mxu0 0.0
    %1564 = vmatprep.subr.mxu0 0.0
    %1565 = vmatpush1.msra.mxu0 0.0
    %1566 = vmatprep.subr.mxu0 0.0
    %1567 = vmatpush1.msra.mxu0 0.0
    %1568 = vmatprep.subr.mxu0 0.0
    %1569 = vmatpush1.msra.mxu0 0.0
    %1570 = vmatprep.subr.mxu0 0.0
    %1571 = vmatpush1.msra.mxu0 0.0
    %1572 = vmatprep.subr.mxu0 0.0
    %1573 = vmatpush1.msra.mxu0 0.0
    %1574 = vmatprep.subr.mxu0 0.0
    %1575 = vmatpush1.msra.mxu0 0.0
    %1576 = vmatprep.subr.mxu0 0.0
    %1577 = vmatpush1.msra.mxu0 0.0
    %1578 = vmatprep.mubr.f32.mxu0 0.0
    %1579 = vmatmul.mubr.f32.gmra.mrb[0].mxu0 %v1509
    %v1580 = vpop.f32.mrb[0].mxu0
    %v1581 = vadd.f32 %v1506, %v1580
    %v1582 = vpop.f32.mrb[0].mxu0
    %1583 = vmatprep.mubr.f32.mxu0 0.0
    %1584 = vmatmul.mubr.f32.gmra.mrb[0].mxu0 %v1512
    %v1585 = vpop.f32.mrb[0].mxu0
    %v1586 = vadd.f32 %v1506, %v1585
    %v1587 = vpop.f32.mrb[0].mxu0
    %1588 = vdwg.mxu0
    %v1589 = vadd.f32 %v51, %v1581
    %v1590 = vadd.f32 %v52, %v1586
    %v1591 = vsel %vm64, %v1589, 0.0
    %1592 = vadd.xlane.f32.xlu0 %v1591
    %v1593 = vpop.xlane.xlu0 %1592
    %v1594 = vsel %vm64, %v1590, 0.0
    %1595 = vadd.xlane.f32.xlu0 %v1594
    %v1596 = vpop.xlane.xlu0 %1595
    %v1597 = vrcp.pop 32.0
    %v1598 = vmul.f32 %v1593, %v1597
    %v1599 = vmul.f32 %v1596, %v1597
    %v1600 = vsub.f32 %v1589, %v1598
    %v1601 = vsub.f32 %v1590, %v1599
    %v1602 = vmul.f32 %v1600, %v1600
    %v1603 = vmul.f32 %v1601, %v1601
    %v1604 = vsel %vm64, %v1602, 0.0
    %1605 = vadd.xlane.f32.xlu0 %v1604
    %v1606 = vpop.xlane.xlu0 %1605
    %v1607 = vsel %vm64, %v1603, 0.0
    %1608 = vadd.xlane.f32.xlu0 %v1607
    %v1609 = vpop.xlane.xlu0 %1608
    %v1610 = vmul.f32 %v1606, %v1597
    %v1611 = vmul.f32 %v1609, %v1597
    %v1612 = vadd.f32 %v1610, 1e-05
    %v1613 = vadd.f32 %v1611, 1e-05
    %v1614 = vrsqrt.pop %v1612
    %v1615 = vrsqrt.pop %v1613
    %v1616 = vmul.f32 %v1600, %v1614
    %v1617 = vmul.f32 %v1601, %v1615
    %v1618 = vld [vmem:[%s9] sm:$0x1]
    %v1620 = vlaneseq
    %v1621 = vshrl.u32 %v1620, 7
    %v1622 = vsub.s32 0, %v1621
    %v1623 = vrot.slane %v1618, %v1622
    %v1625 = vmul.f32 %v1616, %v1623
    %v1626 = vmul.f32 %v1617, %v1623
    %v1627 = vld [vmem:[%s10] sm:$0x1]
    %v1629 = vlaneseq
    %v1630 = vshrl.u32 %v1629, 7
    %v1631 = vsub.s32 0, %v1630
    %v1632 = vrot.slane %v1627, %v1631
    %v1634 = vadd.f32 %v1625, %v1632
    %v1635 = vadd.f32 %v1626, %v1632
    %v1636 = vld [vmem:[%s5] sm:$0xff]
    %v1637 = vld [vmem:[%s5 + $0x8] sm:$0xff]
    %v1638 = vld [vmem:[%s5 + $0x10] sm:$0xff]
    %v1639 = vld [vmem:[%s5 + $0x18] sm:$0xff]
    %v1640 = vld [vmem:[%s5 + $0x20] sm:$0xff]
    %v1641 = vld [vmem:[%s5 + $0x28] sm:$0xff]
    %v1642 = vld [vmem:[%s5 + $0x30] sm:$0xff]
    %v1643 = vld [vmem:[%s5 + $0x38] sm:$0xff]
    %v1644 = vld [vmem:[%s5 + $0x40] sm:$0xff]
    %v1645 = vld [vmem:[%s5 + $0x48] sm:$0xff]
    %v1646 = vld [vmem:[%s5 + $0x50] sm:$0xff]
    %v1647 = vld [vmem:[%s5 + $0x58] sm:$0xff]
    %v1648 = vld [vmem:[%s5 + $0x60] sm:$0xff]
    %v1649 = vld [vmem:[%s5 + $0x68] sm:$0xff]
    %v1650 = vld [vmem:[%s5 + $0x70] sm:$0xff]
    %v1651 = vld [vmem:[%s5 + $0x78] sm:$0xff]
    %v1652 = vld [vmem:[%s5 + $0x80] sm:$0xff]
    %v1653 = vld [vmem:[%s5 + $0x88] sm:$0xff]
    %v1654 = vld [vmem:[%s5 + $0x90] sm:$0xff]
    %v1655 = vld [vmem:[%s5 + $0x98] sm:$0xff]
    %v1656 = vld [vmem:[%s5 + $0xa0] sm:$0xff]
    %v1657 = vld [vmem:[%s5 + $0xa8] sm:$0xff]
    %v1658 = vld [vmem:[%s5 + $0xb0] sm:$0xff]
    %v1659 = vld [vmem:[%s5 + $0xb8] sm:$0xff]
    %v1660 = vld [vmem:[%s5 + $0xc0] sm:$0xff]
    %v1661 = vld [vmem:[%s5 + $0xc8] sm:$0xff]
    %v1662 = vld [vmem:[%s5 + $0xd0] sm:$0xff]
    %v1663 = vld [vmem:[%s5 + $0xd8] sm:$0xff]
    %v1664 = vld [vmem:[%s5 + $0xe0] sm:$0xff]
    %v1665 = vld [vmem:[%s5 + $0xe8] sm:$0xff]
    %v1666 = vld [vmem:[%s5 + $0xf0] sm:$0xff]
    %v1667 = vld [vmem:[%s5 + $0xf8] sm:$0xff]
    %v1668 = vld [vmem:[%s5 + $0x100] sm:$0xff]
    %v1669 = vld [vmem:[%s5 + $0x108] sm:$0xff]
    %v1670 = vld [vmem:[%s5 + $0x110] sm:$0xff]
    %v1671 = vld [vmem:[%s5 + $0x118] sm:$0xff]
    %v1672 = vld [vmem:[%s5 + $0x120] sm:$0xff]
    %v1673 = vld [vmem:[%s5 + $0x128] sm:$0xff]
    %v1674 = vld [vmem:[%s5 + $0x130] sm:$0xff]
    %v1675 = vld [vmem:[%s5 + $0x138] sm:$0xff]
    %v1676 = vld [vmem:[%s5 + $0x140] sm:$0xff]
    %v1677 = vld [vmem:[%s5 + $0x148] sm:$0xff]
    %v1678 = vld [vmem:[%s5 + $0x150] sm:$0xff]
    %v1679 = vld [vmem:[%s5 + $0x158] sm:$0xff]
    %v1680 = vld [vmem:[%s5 + $0x160] sm:$0xff]
    %v1681 = vld [vmem:[%s5 + $0x168] sm:$0xff]
    %v1682 = vld [vmem:[%s5 + $0x170] sm:$0xff]
    %v1683 = vld [vmem:[%s5 + $0x178] sm:$0xff]
    %v1684 = vld [vmem:[%s5 + $0x180] sm:$0xff]
    %v1685 = vld [vmem:[%s5 + $0x188] sm:$0xff]
    %v1686 = vld [vmem:[%s5 + $0x190] sm:$0xff]
    %v1687 = vld [vmem:[%s5 + $0x198] sm:$0xff]
    %v1688 = vld [vmem:[%s5 + $0x1a0] sm:$0xff]
    %v1689 = vld [vmem:[%s5 + $0x1a8] sm:$0xff]
    %v1690 = vld [vmem:[%s5 + $0x1b0] sm:$0xff]
    %v1691 = vld [vmem:[%s5 + $0x1b8] sm:$0xff]
    %v1692 = vld [vmem:[%s5 + $0x1c0] sm:$0xff]
    %v1693 = vld [vmem:[%s5 + $0x1c8] sm:$0xff]
    %v1694 = vld [vmem:[%s5 + $0x1d0] sm:$0xff]
    %v1695 = vld [vmem:[%s5 + $0x1d8] sm:$0xff]
    %v1696 = vld [vmem:[%s5 + $0x1e0] sm:$0xff]
    %v1697 = vld [vmem:[%s5 + $0x1e8] sm:$0xff]
    %v1698 = vld [vmem:[%s5 + $0x1f0] sm:$0xff]
    %v1699 = vld [vmem:[%s5 + $0x1f8] sm:$0xff]
    %v1700 = vld [vmem:[%s6] sm:$0xff]
    %v1701 = vld [vmem:[%s6 + $0x8] sm:$0xff]
    %v1704 = vlaneseq
    %v1705 = vshrl.u32 %v1704, 7
    %v1706 = vsub.s32 0, %v1705
    %v1707 = vrot.slane %v1700, %v1706
    %v1708 = vlaneseq
    %v1709 = vshrl.u32 %v1708, 7
    %v1710 = vsub.s32 1, %v1709
    %v1711 = vrot.slane %v1700, %v1710
    %v1712 = vlaneseq
    %v1713 = vshrl.u32 %v1712, 7
    %v1714 = vsub.s32 2, %v1713
    %v1715 = vrot.slane %v1700, %v1714
    %v1716 = vlaneseq
    %v1717 = vshrl.u32 %v1716, 7
    %v1718 = vsub.s32 3, %v1717
    %v1719 = vrot.slane %v1700, %v1718
    %v1720 = vlaneseq
    %v1721 = vshrl.u32 %v1720, 7
    %v1722 = vsub.s32 4, %v1721
    %v1723 = vrot.slane %v1700, %v1722
    %v1724 = vlaneseq
    %v1725 = vshrl.u32 %v1724, 7
    %v1726 = vsub.s32 5, %v1725
    %v1727 = vrot.slane %v1700, %v1726
    %v1728 = vlaneseq
    %v1729 = vshrl.u32 %v1728, 7
    %v1730 = vsub.s32 6, %v1729
    %v1731 = vrot.slane %v1700, %v1730
    %v1732 = vlaneseq
    %v1733 = vshrl.u32 %v1732, 7
    %v1734 = vsub.s32 7, %v1733
    %v1735 = vrot.slane %v1700, %v1734
    %v1736 = vlaneseq
    %v1737 = vshrl.u32 %v1736, 7
    %v1738 = vsub.s32 0, %v1737
    %v1739 = vrot.slane %v1701, %v1738
    %v1740 = vlaneseq
    %v1741 = vshrl.u32 %v1740, 7
    %v1742 = vsub.s32 1, %v1741
    %v1743 = vrot.slane %v1701, %v1742
    %v1744 = vlaneseq
    %v1745 = vshrl.u32 %v1744, 7
    %v1746 = vsub.s32 2, %v1745
    %v1747 = vrot.slane %v1701, %v1746
    %v1748 = vlaneseq
    %v1749 = vshrl.u32 %v1748, 7
    %v1750 = vsub.s32 3, %v1749
    %v1751 = vrot.slane %v1701, %v1750
    %v1752 = vlaneseq
    %v1753 = vshrl.u32 %v1752, 7
    %v1754 = vsub.s32 4, %v1753
    %v1755 = vrot.slane %v1701, %v1754
    %v1756 = vlaneseq
    %v1757 = vshrl.u32 %v1756, 7
    %v1758 = vsub.s32 5, %v1757
    %v1759 = vrot.slane %v1701, %v1758
    %v1760 = vlaneseq
    %v1761 = vshrl.u32 %v1760, 7
    %v1762 = vsub.s32 6, %v1761
    %v1763 = vrot.slane %v1701, %v1762
    %v1764 = vlaneseq
    %v1765 = vshrl.u32 %v1764, 7
    %v1766 = vsub.s32 7, %v1765
    %v1767 = vrot.slane %v1701, %v1766
    %v1785 = vsel %vm64, %v1634, 0
    %v1788 = vsel %vm64, %v1635, 0
    %1790 = vmatprep.subr.mxu0 %v1637
    %1791 = vmatpush1.msra.mxu0 %v1636
    %1792 = vmatprep.subr.mxu0 %v1653
    %1793 = vmatpush1.msra.mxu0 %v1652
    %1794 = vmatprep.subr.mxu0 %v1669
    %1795 = vmatpush1.msra.mxu0 %v1668
    %1796 = vmatprep.subr.mxu0 %v1685
    %1797 = vmatpush1.msra.mxu0 %v1684
    %1798 = vmatprep.subr.mxu0 0.0
    %1799 = vmatpush1.msra.mxu0 0.0
    %1800 = vmatprep.subr.mxu0 0.0
    %1801 = vmatpush1.msra.mxu0 0.0
    %1802 = vmatprep.subr.mxu0 0.0
    %1803 = vmatpush1.msra.mxu0 0.0
    %1804 = vmatprep.subr.mxu0 0.0
    %1805 = vmatpush1.msra.mxu0 0.0
    %1806 = vmatprep.subr.mxu0 0.0
    %1807 = vmatpush1.msra.mxu0 0.0
    %1808 = vmatprep.subr.mxu0 0.0
    %1809 = vmatpush1.msra.mxu0 0.0
    %1810 = vmatprep.subr.mxu0 0.0
    %1811 = vmatpush1.msra.mxu0 0.0
    %1812 = vmatprep.subr.mxu0 0.0
    %1813 = vmatpush1.msra.mxu0 0.0
    %1814 = vmatprep.subr.mxu0 0.0
    %1815 = vmatpush1.msra.mxu0 0.0
    %1816 = vmatprep.subr.mxu0 0.0
    %1817 = vmatpush1.msra.mxu0 0.0
    %1818 = vmatprep.subr.mxu0 0.0
    %1819 = vmatpush1.msra.mxu0 0.0
    %1820 = vmatprep.subr.mxu0 0.0
    %1821 = vmatpush1.msra.mxu0 0.0
    %1822 = vmatprep.subr.mxu0 0.0
    %1823 = vmatpush1.msra.mxu0 0.0
    %1824 = vmatprep.subr.mxu0 0.0
    %1825 = vmatpush1.msra.mxu0 0.0
    %1826 = vmatprep.subr.mxu0 0.0
    %1827 = vmatpush1.msra.mxu0 0.0
    %1828 = vmatprep.subr.mxu0 0.0
    %1829 = vmatpush1.msra.mxu0 0.0
    %1830 = vmatprep.subr.mxu0 0.0
    %1831 = vmatpush1.msra.mxu0 0.0
    %1832 = vmatprep.subr.mxu0 0.0
    %1833 = vmatpush1.msra.mxu0 0.0
    %1834 = vmatprep.subr.mxu0 0.0
    %1835 = vmatpush1.msra.mxu0 0.0
    %1836 = vmatprep.subr.mxu0 0.0
    %1837 = vmatpush1.msra.mxu0 0.0
    %1838 = vmatprep.subr.mxu0 0.0
    %1839 = vmatpush1.msra.mxu0 0.0
    %1840 = vmatprep.subr.mxu0 0.0
    %1841 = vmatpush1.msra.mxu0 0.0
    %1842 = vmatprep.subr.mxu0 0.0
    %1843 = vmatpush1.msra.mxu0 0.0
    %1844 = vmatprep.subr.mxu0 0.0
    %1845 = vmatpush1.msra.mxu0 0.0
    %1846 = vmatprep.subr.mxu0 0.0
    %1847 = vmatpush1.msra.mxu0 0.0
    %1848 = vmatprep.subr.mxu0 0.0
    %1849 = vmatpush1.msra.mxu0 0.0
    %1850 = vmatprep.subr.mxu0 0.0
    %1851 = vmatpush1.msra.mxu0 0.0
    %1852 = vmatprep.subr.mxu0 0.0
    %1853 = vmatpush1.msra.mxu0 0.0
    %1854 = vmatprep.mubr.f32.mxu0 0.0
    %1855 = vmatmul.mubr.f32.gmra.mrb[0].mxu0 %v1785
    %v1856 = vpop.f32.mrb[0].mxu0
    %v1857 = vadd.f32 %v1707, %v1856
    %v1858 = vpop.f32.mrb[0].mxu0
    %v1859 = vadd.f32 %v1711, %v1858
    %1860 = vmatprep.mubr.f32.mxu0 0.0
    %1861 = vmatmul.mubr.f32.gmra.mrb[0].mxu0 %v1788
    %v1862 = vpop.f32.mrb[0].mxu0
    %v1863 = vadd.f32 %v1707, %v1862
    %v1864 = vpop.f32.mrb[0].mxu0
    %v1865 = vadd.f32 %v1711, %v1864
    %1866 = vdwg.mxu0
    %1867 = vmatprep.subr.mxu0 %v1639
    %1868 = vmatpush1.msra.mxu0 %v1638
    %1869 = vmatprep.subr.mxu0 %v1655
    %1870 = vmatpush1.msra.mxu0 %v1654
    %1871 = vmatprep.subr.mxu0 %v1671
    %1872 = vmatpush1.msra.mxu0 %v1670
    %1873 = vmatprep.subr.mxu0 %v1687
    %1874 = vmatpush1.msra.mxu0 %v1686
    %1875 = vmatprep.subr.mxu0 0.0
    %1876 = vmatpush1.msra.mxu0 0.0
    %1877 = vmatprep.subr.mxu0 0.0
    %1878 = vmatpush1.msra.mxu0 0.0
    %1879 = vmatprep.subr.mxu0 0.0
    %1880 = vmatpush1.msra.mxu0 0.0
    %1881 = vmatprep.subr.mxu0 0.0
    %1882 = vmatpush1.msra.mxu0 0.0
    %1883 = vmatprep.subr.mxu0 0.0
    %1884 = vmatpush1.msra.mxu0 0.0
    %1885 = vmatprep.subr.mxu0 0.0
    %1886 = vmatpush1.msra.mxu0 0.0
    %1887 = vmatprep.subr.mxu0 0.0
    %1888 = vmatpush1.msra.mxu0 0.0
    %1889 = vmatprep.subr.mxu0 0.0
    %1890 = vmatpush1.msra.mxu0 0.0
    %1891 = vmatprep.subr.mxu0 0.0
    %1892 = vmatpush1.msra.mxu0 0.0
    %1893 = vmatprep.subr.mxu0 0.0
    %1894 = vmatpush1.msra.mxu0 0.0
    %1895 = vmatprep.subr.mxu0 0.0
    %1896 = vmatpush1.msra.mxu0 0.0
    %1897 = vmatprep.subr.mxu0 0.0
    %1898 = vmatpush1.msra.mxu0 0.0
    %1899 = vmatprep.subr.mxu0 0.0
    %1900 = vmatpush1.msra.mxu0 0.0
    %1901 = vmatprep.subr.mxu0 0.0
    %1902 = vmatpush1.msra.mxu0 0.0
    %1903 = vmatprep.subr.mxu0 0.0
    %1904 = vmatpush1.msra.mxu0 0.0
    %1905 = vmatprep.subr.mxu0 0.0
    %1906 = vmatpush1.msra.mxu0 0.0
    %1907 = vmatprep.subr.mxu0 0.0
    %1908 = vmatpush1.msra.mxu0 0.0
    %1909 = vmatprep.subr.mxu0 0.0
    %1910 = vmatpush1.msra.mxu0 0.0
    %1911 = vmatprep.subr.mxu0 0.0
    %1912 = vmatpush1.msra.mxu0 0.0
    %1913 = vmatprep.subr.mxu0 0.0
    %1914 = vmatpush1.msra.mxu0 0.0
    %1915 = vmatprep.subr.mxu0 0.0
    %1916 = vmatpush1.msra.mxu0 0.0
    %1917 = vmatprep.subr.mxu0 0.0
    %1918 = vmatpush1.msra.mxu0 0.0
    %1919 = vmatprep.subr.mxu0 0.0
    %1920 = vmatpush1.msra.mxu0 0.0
    %1921 = vmatprep.subr.mxu0 0.0
    %1922 = vmatpush1.msra.mxu0 0.0
    %1923 = vmatprep.subr.mxu0 0.0
    %1924 = vmatpush1.msra.mxu0 0.0
    %1925 = vmatprep.subr.mxu0 0.0
    %1926 = vmatpush1.msra.mxu0 0.0
    %1927 = vmatprep.subr.mxu0 0.0
    %1928 = vmatpush1.msra.mxu0 0.0
    %1929 = vmatprep.subr.mxu0 0.0
    %1930 = vmatpush1.msra.mxu0 0.0
    %1931 = vmatprep.mubr.f32.mxu0 0.0
    %1932 = vmatmul.mubr.f32.gmra.mrb[0].mxu0 %v1785
    %v1933 = vpop.f32.mrb[0].mxu0
    %v1934 = vadd.f32 %v1715, %v1933
    %v1935 = vpop.f32.mrb[0].mxu0
    %v1936 = vadd.f32 %v1719, %v1935
    %1937 = vmatprep.mubr.f32.mxu0 0.0
    %1938 = vmatmul.mubr.f32.gmra.mrb[0].mxu0 %v1788
    %v1939 = vpop.f32.mrb[0].mxu0
    %v1940 = vadd.f32 %v1715, %v1939
    %v1941 = vpop.f32.mrb[0].mxu0
    %v1942 = vadd.f32 %v1719, %v1941
    %1943 = vdwg.mxu0
    %1944 = vmatprep.subr.mxu0 %v1641
    %1945 = vmatpush1.msra.mxu0 %v1640
    %1946 = vmatprep.subr.mxu0 %v1657
    %1947 = vmatpush1.msra.mxu0 %v1656
    %1948 = vmatprep.subr.mxu0 %v1673
    %1949 = vmatpush1.msra.mxu0 %v1672
    %1950 = vmatprep.subr.mxu0 %v1689
    %1951 = vmatpush1.msra.mxu0 %v1688
    %1952 = vmatprep.subr.mxu0 0.0
    %1953 = vmatpush1.msra.mxu0 0.0
    %1954 = vmatprep.subr.mxu0 0.0
    %1955 = vmatpush1.msra.mxu0 0.0
    %1956 = vmatprep.subr.mxu0 0.0
    %1957 = vmatpush1.msra.mxu0 0.0
    %1958 = vmatprep.subr.mxu0 0.0
    %1959 = vmatpush1.msra.mxu0 0.0
    %1960 = vmatprep.subr.mxu0 0.0
    %1961 = vmatpush1.msra.mxu0 0.0
    %1962 = vmatprep.subr.mxu0 0.0
    %1963 = vmatpush1.msra.mxu0 0.0
    %1964 = vmatprep.subr.mxu0 0.0
    %1965 = vmatpush1.msra.mxu0 0.0
    %1966 = vmatprep.subr.mxu0 0.0
    %1967 = vmatpush1.msra.mxu0 0.0
    %1968 = vmatprep.subr.mxu0 0.0
    %1969 = vmatpush1.msra.mxu0 0.0
    %1970 = vmatprep.subr.mxu0 0.0
    %1971 = vmatpush1.msra.mxu0 0.0
    %1972 = vmatprep.subr.mxu0 0.0
    %1973 = vmatpush1.msra.mxu0 0.0
    %1974 = vmatprep.subr.mxu0 0.0
    %1975 = vmatpush1.msra.mxu0 0.0
    %1976 = vmatprep.subr.mxu0 0.0
    %1977 = vmatpush1.msra.mxu0 0.0
    %1978 = vmatprep.subr.mxu0 0.0
    %1979 = vmatpush1.msra.mxu0 0.0
    %1980 = vmatprep.subr.mxu0 0.0
    %1981 = vmatpush1.msra.mxu0 0.0
    %1982 = vmatprep.subr.mxu0 0.0
    %1983 = vmatpush1.msra.mxu0 0.0
    %1984 = vmatprep.subr.mxu0 0.0
    %1985 = vmatpush1.msra.mxu0 0.0
    %1986 = vmatprep.subr.mxu0 0.0
    %1987 = vmatpush1.msra.mxu0 0.0
    %1988 = vmatprep.subr.mxu0 0.0
    %1989 = vmatpush1.msra.mxu0 0.0
    %1990 = vmatprep.subr.mxu0 0.0
    %1991 = vmatpush1.msra.mxu0 0.0
    %1992 = vmatprep.subr.mxu0 0.0
    %1993 = vmatpush1.msra.mxu0 0.0
    %1994 = vmatprep.subr.mxu0 0.0
    %1995 = vmatpush1.msra.mxu0 0.0
    %1996 = vmatprep.subr.mxu0 0.0
    %1997 = vmatpush1.msra.mxu0 0.0
    %1998 = vmatprep.subr.mxu0 0.0
    %1999 = vmatpush1.msra.mxu0 0.0
    %2000 = vmatprep.subr.mxu0 0.0
    %2001 = vmatpush1.msra.mxu0 0.0
    %2002 = vmatprep.subr.mxu0 0.0
    %2003 = vmatpush1.msra.mxu0 0.0
    %2004 = vmatprep.subr.mxu0 0.0
    %2005 = vmatpush1.msra.mxu0 0.0
    %2006 = vmatprep.subr.mxu0 0.0
    %2007 = vmatpush1.msra.mxu0 0.0
    %2008 = vmatprep.mubr.f32.mxu0 0.0
    %2009 = vmatmul.mubr.f32.gmra.mrb[0].mxu0 %v1785
    %v2010 = vpop.f32.mrb[0].mxu0
    %v2011 = vadd.f32 %v1723, %v2010
    %v2012 = vpop.f32.mrb[0].mxu0
    %v2013 = vadd.f32 %v1727, %v2012
    %2014 = vmatprep.mubr.f32.mxu0 0.0
    %2015 = vmatmul.mubr.f32.gmra.mrb[0].mxu0 %v1788
    %v2016 = vpop.f32.mrb[0].mxu0
    %v2017 = vadd.f32 %v1723, %v2016
    %v2018 = vpop.f32.mrb[0].mxu0
    %v2019 = vadd.f32 %v1727, %v2018
    %2020 = vdwg.mxu0
    %2021 = vmatprep.subr.mxu0 %v1643
    %2022 = vmatpush1.msra.mxu0 %v1642
    %2023 = vmatprep.subr.mxu0 %v1659
    %2024 = vmatpush1.msra.mxu0 %v1658
    %2025 = vmatprep.subr.mxu0 %v1675
    %2026 = vmatpush1.msra.mxu0 %v1674
    %2027 = vmatprep.subr.mxu0 %v1691
    %2028 = vmatpush1.msra.mxu0 %v1690
    %2029 = vmatprep.subr.mxu0 0.0
    %2030 = vmatpush1.msra.mxu0 0.0
    %2031 = vmatprep.subr.mxu0 0.0
    %2032 = vmatpush1.msra.mxu0 0.0
    %2033 = vmatprep.subr.mxu0 0.0
    %2034 = vmatpush1.msra.mxu0 0.0
    %2035 = vmatprep.subr.mxu0 0.0
    %2036 = vmatpush1.msra.mxu0 0.0
    %2037 = vmatprep.subr.mxu0 0.0
    %2038 = vmatpush1.msra.mxu0 0.0
    %2039 = vmatprep.subr.mxu0 0.0
    %2040 = vmatpush1.msra.mxu0 0.0
    %2041 = vmatprep.subr.mxu0 0.0
    %2042 = vmatpush1.msra.mxu0 0.0
    %2043 = vmatprep.subr.mxu0 0.0
    %2044 = vmatpush1.msra.mxu0 0.0
    %2045 = vmatprep.subr.mxu0 0.0
    %2046 = vmatpush1.msra.mxu0 0.0
    %2047 = vmatprep.subr.mxu0 0.0
    %2048 = vmatpush1.msra.mxu0 0.0
    %2049 = vmatprep.subr.mxu0 0.0
    %2050 = vmatpush1.msra.mxu0 0.0
    %2051 = vmatprep.subr.mxu0 0.0
    %2052 = vmatpush1.msra.mxu0 0.0
    %2053 = vmatprep.subr.mxu0 0.0
    %2054 = vmatpush1.msra.mxu0 0.0
    %2055 = vmatprep.subr.mxu0 0.0
    %2056 = vmatpush1.msra.mxu0 0.0
    %2057 = vmatprep.subr.mxu0 0.0
    %2058 = vmatpush1.msra.mxu0 0.0
    %2059 = vmatprep.subr.mxu0 0.0
    %2060 = vmatpush1.msra.mxu0 0.0
    %2061 = vmatprep.subr.mxu0 0.0
    %2062 = vmatpush1.msra.mxu0 0.0
    %2063 = vmatprep.subr.mxu0 0.0
    %2064 = vmatpush1.msra.mxu0 0.0
    %2065 = vmatprep.subr.mxu0 0.0
    %2066 = vmatpush1.msra.mxu0 0.0
    %2067 = vmatprep.subr.mxu0 0.0
    %2068 = vmatpush1.msra.mxu0 0.0
    %2069 = vmatprep.subr.mxu0 0.0
    %2070 = vmatpush1.msra.mxu0 0.0
    %2071 = vmatprep.subr.mxu0 0.0
    %2072 = vmatpush1.msra.mxu0 0.0
    %2073 = vmatprep.subr.mxu0 0.0
    %2074 = vmatpush1.msra.mxu0 0.0
    %2075 = vmatprep.subr.mxu0 0.0
    %2076 = vmatpush1.msra.mxu0 0.0
    %2077 = vmatprep.subr.mxu0 0.0
    %2078 = vmatpush1.msra.mxu0 0.0
    %2079 = vmatprep.subr.mxu0 0.0
    %2080 = vmatpush1.msra.mxu0 0.0
    %2081 = vmatprep.subr.mxu0 0.0
    %2082 = vmatpush1.msra.mxu0 0.0
    %2083 = vmatprep.subr.mxu0 0.0
    %2084 = vmatpush1.msra.mxu0 0.0
    %2085 = vmatprep.mubr.f32.mxu0 0.0
    %2086 = vmatmul.mubr.f32.gmra.mrb[0].mxu0 %v1785
    %v2087 = vpop.f32.mrb[0].mxu0
    %v2088 = vadd.f32 %v1731, %v2087
    %v2089 = vpop.f32.mrb[0].mxu0
    %v2090 = vadd.f32 %v1735, %v2089
    %2091 = vmatprep.mubr.f32.mxu0 0.0
    %2092 = vmatmul.mubr.f32.gmra.mrb[0].mxu0 %v1788
    %v2093 = vpop.f32.mrb[0].mxu0
    %v2094 = vadd.f32 %v1731, %v2093
    %v2095 = vpop.f32.mrb[0].mxu0
    %v2096 = vadd.f32 %v1735, %v2095
    %2097 = vdwg.mxu0
    %2098 = vmatprep.subr.mxu0 %v1645
    %2099 = vmatpush1.msra.mxu0 %v1644
    %2100 = vmatprep.subr.mxu0 %v1661
    %2101 = vmatpush1.msra.mxu0 %v1660
    %2102 = vmatprep.subr.mxu0 %v1677
    %2103 = vmatpush1.msra.mxu0 %v1676
    %2104 = vmatprep.subr.mxu0 %v1693
    %2105 = vmatpush1.msra.mxu0 %v1692
    %2106 = vmatprep.subr.mxu0 0.0
    %2107 = vmatpush1.msra.mxu0 0.0
    %2108 = vmatprep.subr.mxu0 0.0
    %2109 = vmatpush1.msra.mxu0 0.0
    %2110 = vmatprep.subr.mxu0 0.0
    %2111 = vmatpush1.msra.mxu0 0.0
    %2112 = vmatprep.subr.mxu0 0.0
    %2113 = vmatpush1.msra.mxu0 0.0
    %2114 = vmatprep.subr.mxu0 0.0
    %2115 = vmatpush1.msra.mxu0 0.0
    %2116 = vmatprep.subr.mxu0 0.0
    %2117 = vmatpush1.msra.mxu0 0.0
    %2118 = vmatprep.subr.mxu0 0.0
    %2119 = vmatpush1.msra.mxu0 0.0
    %2120 = vmatprep.subr.mxu0 0.0
    %2121 = vmatpush1.msra.mxu0 0.0
    %2122 = vmatprep.subr.mxu0 0.0
    %2123 = vmatpush1.msra.mxu0 0.0
    %2124 = vmatprep.subr.mxu0 0.0
    %2125 = vmatpush1.msra.mxu0 0.0
    %2126 = vmatprep.subr.mxu0 0.0
    %2127 = vmatpush1.msra.mxu0 0.0
    %2128 = vmatprep.subr.mxu0 0.0
    %2129 = vmatpush1.msra.mxu0 0.0
    %2130 = vmatprep.subr.mxu0 0.0
    %2131 = vmatpush1.msra.mxu0 0.0
    %2132 = vmatprep.subr.mxu0 0.0
    %2133 = vmatpush1.msra.mxu0 0.0
    %2134 = vmatprep.subr.mxu0 0.0
    %2135 = vmatpush1.msra.mxu0 0.0
    %2136 = vmatprep.subr.mxu0 0.0
    %2137 = vmatpush1.msra.mxu0 0.0
    %2138 = vmatprep.subr.mxu0 0.0
    %2139 = vmatpush1.msra.mxu0 0.0
    %2140 = vmatprep.subr.mxu0 0.0
    %2141 = vmatpush1.msra.mxu0 0.0
    %2142 = vmatprep.subr.mxu0 0.0
    %2143 = vmatpush1.msra.mxu0 0.0
    %2144 = vmatprep.subr.mxu0 0.0
    %2145 = vmatpush1.msra.mxu0 0.0
    %2146 = vmatprep.subr.mxu0 0.0
    %2147 = vmatpush1.msra.mxu0 0.0
    %2148 = vmatprep.subr.mxu0 0.0
    %2149 = vmatpush1.msra.mxu0 0.0
    %2150 = vmatprep.subr.mxu0 0.0
    %2151 = vmatpush1.msra.mxu0 0.0
    %2152 = vmatprep.subr.mxu0 0.0
    %2153 = vmatpush1.msra.mxu0 0.0
    %2154 = vmatprep.subr.mxu0 0.0
    %2155 = vmatpush1.msra.mxu0 0.0
    %2156 = vmatprep.subr.mxu0 0.0
    %2157 = vmatpush1.msra.mxu0 0.0
    %2158 = vmatprep.subr.mxu0 0.0
    %2159 = vmatpush1.msra.mxu0 0.0
    %2160 = vmatprep.subr.mxu0 0.0
    %2161 = vmatpush1.msra.mxu0 0.0
    %2162 = vmatprep.mubr.f32.mxu0 0.0
    %2163 = vmatmul.mubr.f32.gmra.mrb[0].mxu0 %v1785
    %v2164 = vpop.f32.mrb[0].mxu0
    %v2165 = vadd.f32 %v1739, %v2164
    %v2166 = vpop.f32.mrb[0].mxu0
    %v2167 = vadd.f32 %v1743, %v2166
    %2168 = vmatprep.mubr.f32.mxu0 0.0
    %2169 = vmatmul.mubr.f32.gmra.mrb[0].mxu0 %v1788
    %v2170 = vpop.f32.mrb[0].mxu0
    %v2171 = vadd.f32 %v1739, %v2170
    %v2172 = vpop.f32.mrb[0].mxu0
    %v2173 = vadd.f32 %v1743, %v2172
    %2174 = vdwg.mxu0
    %2175 = vmatprep.subr.mxu0 %v1647
    %2176 = vmatpush1.msra.mxu0 %v1646
    %2177 = vmatprep.subr.mxu0 %v1663
    %2178 = vmatpush1.msra.mxu0 %v1662
    %2179 = vmatprep.subr.mxu0 %v1679
    %2180 = vmatpush1.msra.mxu0 %v1678
    %2181 = vmatprep.subr.mxu0 %v1695
    %2182 = vmatpush1.msra.mxu0 %v1694
    %2183 = vmatprep.subr.mxu0 0.0
    %2184 = vmatpush1.msra.mxu0 0.0
    %2185 = vmatprep.subr.mxu0 0.0
    %2186 = vmatpush1.msra.mxu0 0.0
    %2187 = vmatprep.subr.mxu0 0.0
    %2188 = vmatpush1.msra.mxu0 0.0
    %2189 = vmatprep.subr.mxu0 0.0
    %2190 = vmatpush1.msra.mxu0 0.0
    %2191 = vmatprep.subr.mxu0 0.0
    %2192 = vmatpush1.msra.mxu0 0.0
    %2193 = vmatprep.subr.mxu0 0.0
    %2194 = vmatpush1.msra.mxu0 0.0
    %2195 = vmatprep.subr.mxu0 0.0
    %2196 = vmatpush1.msra.mxu0 0.0
    %2197 = vmatprep.subr.mxu0 0.0
    %2198 = vmatpush1.msra.mxu0 0.0
    %2199 = vmatprep.subr.mxu0 0.0
    %2200 = vmatpush1.msra.mxu0 0.0
    %2201 = vmatprep.subr.mxu0 0.0
    %2202 = vmatpush1.msra.mxu0 0.0
    %2203 = vmatprep.subr.mxu0 0.0
    %2204 = vmatpush1.msra.mxu0 0.0
    %2205 = vmatprep.subr.mxu0 0.0
    %2206 = vmatpush1.msra.mxu0 0.0
    %2207 = vmatprep.subr.mxu0 0.0
    %2208 = vmatpush1.msra.mxu0 0.0
    %2209 = vmatprep.subr.mxu0 0.0
    %2210 = vmatpush1.msra.mxu0 0.0
    %2211 = vmatprep.subr.mxu0 0.0
    %2212 = vmatpush1.msra.mxu0 0.0
    %2213 = vmatprep.subr.mxu0 0.0
    %2214 = vmatpush1.msra.mxu0 0.0
    %2215 = vmatprep.subr.mxu0 0.0
    %2216 = vmatpush1.msra.mxu0 0.0
    %2217 = vmatprep.subr.mxu0 0.0
    %2218 = vmatpush1.msra.mxu0 0.0
    %2219 = vmatprep.subr.mxu0 0.0
    %2220 = vmatpush1.msra.mxu0 0.0
    %2221 = vmatprep.subr.mxu0 0.0
    %2222 = vmatpush1.msra.mxu0 0.0
    %2223 = vmatprep.subr.mxu0 0.0
    %2224 = vmatpush1.msra.mxu0 0.0
    %2225 = vmatprep.subr.mxu0 0.0
    %2226 = vmatpush1.msra.mxu0 0.0
    %2227 = vmatprep.subr.mxu0 0.0
    %2228 = vmatpush1.msra.mxu0 0.0
    %2229 = vmatprep.subr.mxu0 0.0
    %2230 = vmatpush1.msra.mxu0 0.0
    %2231 = vmatprep.subr.mxu0 0.0
    %2232 = vmatpush1.msra.mxu0 0.0
    %2233 = vmatprep.subr.mxu0 0.0
    %2234 = vmatpush1.msra.mxu0 0.0
    %2235 = vmatprep.subr.mxu0 0.0
    %2236 = vmatpush1.msra.mxu0 0.0
    %2237 = vmatprep.subr.mxu0 0.0
    %2238 = vmatpush1.msra.mxu0 0.0
    %2239 = vmatprep.mubr.f32.mxu0 0.0
    %2240 = vmatmul.mubr.f32.gmra.mrb[0].mxu0 %v1785
    %v2241 = vpop.f32.mrb[0].mxu0
    %v2242 = vadd.f32 %v1747, %v2241
    %v2243 = vpop.f32.mrb[0].mxu0
    %v2244 = vadd.f32 %v1751, %v2243
    %2245 = vmatprep.mubr.f32.mxu0 0.0
    %2246 = vmatmul.mubr.f32.gmra.mrb[0].mxu0 %v1788
    %v2247 = vpop.f32.mrb[0].mxu0
    %v2248 = vadd.f32 %v1747, %v2247
    %v2249 = vpop.f32.mrb[0].mxu0
    %v2250 = vadd.f32 %v1751, %v2249
    %2251 = vdwg.mxu0
    %2252 = vmatprep.subr.mxu0 %v1649
    %2253 = vmatpush1.msra.mxu0 %v1648
    %2254 = vmatprep.subr.mxu0 %v1665
    %2255 = vmatpush1.msra.mxu0 %v1664
    %2256 = vmatprep.subr.mxu0 %v1681
    %2257 = vmatpush1.msra.mxu0 %v1680
    %2258 = vmatprep.subr.mxu0 %v1697
    %2259 = vmatpush1.msra.mxu0 %v1696
    %2260 = vmatprep.subr.mxu0 0.0
    %2261 = vmatpush1.msra.mxu0 0.0
    %2262 = vmatprep.subr.mxu0 0.0
    %2263 = vmatpush1.msra.mxu0 0.0
    %2264 = vmatprep.subr.mxu0 0.0
    %2265 = vmatpush1.msra.mxu0 0.0
    %2266 = vmatprep.subr.mxu0 0.0
    %2267 = vmatpush1.msra.mxu0 0.0
    %2268 = vmatprep.subr.mxu0 0.0
    %2269 = vmatpush1.msra.mxu0 0.0
    %2270 = vmatprep.subr.mxu0 0.0
    %2271 = vmatpush1.msra.mxu0 0.0
    %2272 = vmatprep.subr.mxu0 0.0
    %2273 = vmatpush1.msra.mxu0 0.0
    %2274 = vmatprep.subr.mxu0 0.0
    %2275 = vmatpush1.msra.mxu0 0.0
    %2276 = vmatprep.subr.mxu0 0.0
    %2277 = vmatpush1.msra.mxu0 0.0
    %2278 = vmatprep.subr.mxu0 0.0
    %2279 = vmatpush1.msra.mxu0 0.0
    %2280 = vmatprep.subr.mxu0 0.0
    %2281 = vmatpush1.msra.mxu0 0.0
    %2282 = vmatprep.subr.mxu0 0.0
    %2283 = vmatpush1.msra.mxu0 0.0
    %2284 = vmatprep.subr.mxu0 0.0
    %2285 = vmatpush1.msra.mxu0 0.0
    %2286 = vmatprep.subr.mxu0 0.0
    %2287 = vmatpush1.msra.mxu0 0.0
    %2288 = vmatprep.subr.mxu0 0.0
    %2289 = vmatpush1.msra.mxu0 0.0
    %2290 = vmatprep.subr.mxu0 0.0
    %2291 = vmatpush1.msra.mxu0 0.0
    %2292 = vmatprep.subr.mxu0 0.0
    %2293 = vmatpush1.msra.mxu0 0.0
    %2294 = vmatprep.subr.mxu0 0.0
    %2295 = vmatpush1.msra.mxu0 0.0
    %2296 = vmatprep.subr.mxu0 0.0
    %2297 = vmatpush1.msra.mxu0 0.0
    %2298 = vmatprep.subr.mxu0 0.0
    %2299 = vmatpush1.msra.mxu0 0.0
    %2300 = vmatprep.subr.mxu0 0.0
    %2301 = vmatpush1.msra.mxu0 0.0
    %2302 = vmatprep.subr.mxu0 0.0
    %2303 = vmatpush1.msra.mxu0 0.0
    %2304 = vmatprep.subr.mxu0 0.0
    %2305 = vmatpush1.msra.mxu0 0.0
    %2306 = vmatprep.subr.mxu0 0.0
    %2307 = vmatpush1.msra.mxu0 0.0
    %2308 = vmatprep.subr.mxu0 0.0
    %2309 = vmatpush1.msra.mxu0 0.0
    %2310 = vmatprep.subr.mxu0 0.0
    %2311 = vmatpush1.msra.mxu0 0.0
    %2312 = vmatprep.subr.mxu0 0.0
    %2313 = vmatpush1.msra.mxu0 0.0
    %2314 = vmatprep.subr.mxu0 0.0
    %2315 = vmatpush1.msra.mxu0 0.0
    %2316 = vmatprep.mubr.f32.mxu0 0.0
    %2317 = vmatmul.mubr.f32.gmra.mrb[0].mxu0 %v1785
    %v2318 = vpop.f32.mrb[0].mxu0
    %v2319 = vadd.f32 %v1755, %v2318
    %v2320 = vpop.f32.mrb[0].mxu0
    %v2321 = vadd.f32 %v1759, %v2320
    %2322 = vmatprep.mubr.f32.mxu0 0.0
    %2323 = vmatmul.mubr.f32.gmra.mrb[0].mxu0 %v1788
    %v2324 = vpop.f32.mrb[0].mxu0
    %v2325 = vadd.f32 %v1755, %v2324
    %v2326 = vpop.f32.mrb[0].mxu0
    %v2327 = vadd.f32 %v1759, %v2326
    %2328 = vdwg.mxu0
    %2329 = vmatprep.subr.mxu0 %v1651
    %2330 = vmatpush1.msra.mxu0 %v1650
    %2331 = vmatprep.subr.mxu0 %v1667
    %2332 = vmatpush1.msra.mxu0 %v1666
    %2333 = vmatprep.subr.mxu0 %v1683
    %2334 = vmatpush1.msra.mxu0 %v1682
    %2335 = vmatprep.subr.mxu0 %v1699
    %2336 = vmatpush1.msra.mxu0 %v1698
    %2337 = vmatprep.subr.mxu0 0.0
    %2338 = vmatpush1.msra.mxu0 0.0
    %2339 = vmatprep.subr.mxu0 0.0
    %2340 = vmatpush1.msra.mxu0 0.0
    %2341 = vmatprep.subr.mxu0 0.0
    %2342 = vmatpush1.msra.mxu0 0.0
    %2343 = vmatprep.subr.mxu0 0.0
    %2344 = vmatpush1.msra.mxu0 0.0
    %2345 = vmatprep.subr.mxu0 0.0
    %2346 = vmatpush1.msra.mxu0 0.0
    %2347 = vmatprep.subr.mxu0 0.0
    %2348 = vmatpush1.msra.mxu0 0.0
    %2349 = vmatprep.subr.mxu0 0.0
    %2350 = vmatpush1.msra.mxu0 0.0
    %2351 = vmatprep.subr.mxu0 0.0
    %2352 = vmatpush1.msra.mxu0 0.0
    %2353 = vmatprep.subr.mxu0 0.0
    %2354 = vmatpush1.msra.mxu0 0.0
    %2355 = vmatprep.subr.mxu0 0.0
    %2356 = vmatpush1.msra.mxu0 0.0
    %2357 = vmatprep.subr.mxu0 0.0
    %2358 = vmatpush1.msra.mxu0 0.0
    %2359 = vmatprep.subr.mxu0 0.0
    %2360 = vmatpush1.msra.mxu0 0.0
    %2361 = vmatprep.subr.mxu0 0.0
    %2362 = vmatpush1.msra.mxu0 0.0
    %2363 = vmatprep.subr.mxu0 0.0
    %2364 = vmatpush1.msra.mxu0 0.0
    %2365 = vmatprep.subr.mxu0 0.0
    %2366 = vmatpush1.msra.mxu0 0.0
    %2367 = vmatprep.subr.mxu0 0.0
    %2368 = vmatpush1.msra.mxu0 0.0
    %2369 = vmatprep.subr.mxu0 0.0
    %2370 = vmatpush1.msra.mxu0 0.0
    %2371 = vmatprep.subr.mxu0 0.0
    %2372 = vmatpush1.msra.mxu0 0.0
    %2373 = vmatprep.subr.mxu0 0.0
    %2374 = vmatpush1.msra.mxu0 0.0
    %2375 = vmatprep.subr.mxu0 0.0
    %2376 = vmatpush1.msra.mxu0 0.0
    %2377 = vmatprep.subr.mxu0 0.0
    %2378 = vmatpush1.msra.mxu0 0.0
    %2379 = vmatprep.subr.mxu0 0.0
    %2380 = vmatpush1.msra.mxu0 0.0
    %2381 = vmatprep.subr.mxu0 0.0
    %2382 = vmatpush1.msra.mxu0 0.0
    %2383 = vmatprep.subr.mxu0 0.0
    %2384 = vmatpush1.msra.mxu0 0.0
    %2385 = vmatprep.subr.mxu0 0.0
    %2386 = vmatpush1.msra.mxu0 0.0
    %2387 = vmatprep.subr.mxu0 0.0
    %2388 = vmatpush1.msra.mxu0 0.0
    %2389 = vmatprep.subr.mxu0 0.0
    %2390 = vmatpush1.msra.mxu0 0.0
    %2391 = vmatprep.subr.mxu0 0.0
    %2392 = vmatpush1.msra.mxu0 0.0
    %2393 = vmatprep.mubr.f32.mxu0 0.0
    %2394 = vmatmul.mubr.f32.gmra.mrb[0].mxu0 %v1785
    %v2395 = vpop.f32.mrb[0].mxu0
    %v2396 = vadd.f32 %v1763, %v2395
    %v2397 = vpop.f32.mrb[0].mxu0
    %v2398 = vadd.f32 %v1767, %v2397
    %2399 = vmatprep.mubr.f32.mxu0 0.0
    %2400 = vmatmul.mubr.f32.gmra.mrb[0].mxu0 %v1788
    %v2401 = vpop.f32.mrb[0].mxu0
    %v2402 = vadd.f32 %v1763, %v2401
    %v2403 = vpop.f32.mrb[0].mxu0
    %v2404 = vadd.f32 %v1767, %v2403
    %2405 = vdwg.mxu0
    %v2406 = vmax.f32 %v1857, 0.0
    %v2407 = vmax.f32 %v1859, 0.0
    %v2408 = vmax.f32 %v1934, 0.0
    %v2409 = vmax.f32 %v1936, 0.0
    %v2410 = vmax.f32 %v2011, 0.0
    %v2411 = vmax.f32 %v2013, 0.0
    %v2412 = vmax.f32 %v2088, 0.0
    %v2413 = vmax.f32 %v2090, 0.0
    %v2414 = vmax.f32 %v2165, 0.0
    %v2415 = vmax.f32 %v2167, 0.0
    %v2416 = vmax.f32 %v2242, 0.0
    %v2417 = vmax.f32 %v2244, 0.0
    %v2418 = vmax.f32 %v2319, 0.0
    %v2419 = vmax.f32 %v2321, 0.0
    %v2420 = vmax.f32 %v2396, 0.0
    %v2421 = vmax.f32 %v2398, 0.0
    %v2422 = vmax.f32 %v1863, 0.0
    %v2423 = vmax.f32 %v1865, 0.0
    %v2424 = vmax.f32 %v1940, 0.0
    %v2425 = vmax.f32 %v1942, 0.0
    %v2426 = vmax.f32 %v2017, 0.0
    %v2427 = vmax.f32 %v2019, 0.0
    %v2428 = vmax.f32 %v2094, 0.0
    %v2429 = vmax.f32 %v2096, 0.0
    %v2430 = vmax.f32 %v2171, 0.0
    %v2431 = vmax.f32 %v2173, 0.0
    %v2432 = vmax.f32 %v2248, 0.0
    %v2433 = vmax.f32 %v2250, 0.0
    %v2434 = vmax.f32 %v2325, 0.0
    %v2435 = vmax.f32 %v2327, 0.0
    %v2436 = vmax.f32 %v2402, 0.0
    %v2437 = vmax.f32 %v2404, 0.0
    %v2438 = vld [vmem:[%s7] sm:$0xff]
    %v2439 = vld [vmem:[%s7 + $0x8] sm:$0xff]
    %v2440 = vld [vmem:[%s7 + $0x10] sm:$0xff]
    %v2441 = vld [vmem:[%s7 + $0x18] sm:$0xff]
    %v2442 = vld [vmem:[%s7 + $0x20] sm:$0xff]
    %v2443 = vld [vmem:[%s7 + $0x28] sm:$0xff]
    %v2444 = vld [vmem:[%s7 + $0x30] sm:$0xff]
    %v2445 = vld [vmem:[%s7 + $0x38] sm:$0xff]
    %v2446 = vld [vmem:[%s7 + $0x40] sm:$0xff]
    %v2447 = vld [vmem:[%s7 + $0x48] sm:$0xff]
    %v2448 = vld [vmem:[%s7 + $0x50] sm:$0xff]
    %v2449 = vld [vmem:[%s7 + $0x58] sm:$0xff]
    %v2450 = vld [vmem:[%s7 + $0x60] sm:$0xff]
    %v2451 = vld [vmem:[%s7 + $0x68] sm:$0xff]
    %v2452 = vld [vmem:[%s7 + $0x70] sm:$0xff]
    %v2453 = vld [vmem:[%s7 + $0x78] sm:$0xff]
    %v2454 = vld [vmem:[%s7 + $0x80] sm:$0xff]
    %v2455 = vld [vmem:[%s7 + $0x88] sm:$0xff]
    %v2456 = vld [vmem:[%s7 + $0x90] sm:$0xff]
    %v2457 = vld [vmem:[%s7 + $0x98] sm:$0xff]
    %v2458 = vld [vmem:[%s7 + $0xa0] sm:$0xff]
    %v2459 = vld [vmem:[%s7 + $0xa8] sm:$0xff]
    %v2460 = vld [vmem:[%s7 + $0xb0] sm:$0xff]
    %v2461 = vld [vmem:[%s7 + $0xb8] sm:$0xff]
    %v2462 = vld [vmem:[%s7 + $0xc0] sm:$0xff]
    %v2463 = vld [vmem:[%s7 + $0xc8] sm:$0xff]
    %v2464 = vld [vmem:[%s7 + $0xd0] sm:$0xff]
    %v2465 = vld [vmem:[%s7 + $0xd8] sm:$0xff]
    %v2466 = vld [vmem:[%s7 + $0xe0] sm:$0xff]
    %v2467 = vld [vmem:[%s7 + $0xe8] sm:$0xff]
    %v2468 = vld [vmem:[%s7 + $0xf0] sm:$0xff]
    %v2469 = vld [vmem:[%s7 + $0xf8] sm:$0xff]
    %v2470 = vld [vmem:[%s7 + $0x100] sm:$0xff]
    %v2471 = vld [vmem:[%s7 + $0x108] sm:$0xff]
    %v2472 = vld [vmem:[%s7 + $0x110] sm:$0xff]
    %v2473 = vld [vmem:[%s7 + $0x118] sm:$0xff]
    %v2474 = vld [vmem:[%s7 + $0x120] sm:$0xff]
    %v2475 = vld [vmem:[%s7 + $0x128] sm:$0xff]
    %v2476 = vld [vmem:[%s7 + $0x130] sm:$0xff]
    %v2477 = vld [vmem:[%s7 + $0x138] sm:$0xff]
    %v2478 = vld [vmem:[%s7 + $0x140] sm:$0xff]
    %v2479 = vld [vmem:[%s7 + $0x148] sm:$0xff]
    %v2480 = vld [vmem:[%s7 + $0x150] sm:$0xff]
    %v2481 = vld [vmem:[%s7 + $0x158] sm:$0xff]
    %v2482 = vld [vmem:[%s7 + $0x160] sm:$0xff]
    %v2483 = vld [vmem:[%s7 + $0x168] sm:$0xff]
    %v2484 = vld [vmem:[%s7 + $0x170] sm:$0xff]
    %v2485 = vld [vmem:[%s7 + $0x178] sm:$0xff]
    %v2486 = vld [vmem:[%s7 + $0x180] sm:$0xff]
    %v2487 = vld [vmem:[%s7 + $0x188] sm:$0xff]
    %v2488 = vld [vmem:[%s7 + $0x190] sm:$0xff]
    %v2489 = vld [vmem:[%s7 + $0x198] sm:$0xff]
    %v2490 = vld [vmem:[%s7 + $0x1a0] sm:$0xff]
    %v2491 = vld [vmem:[%s7 + $0x1a8] sm:$0xff]
    %v2492 = vld [vmem:[%s7 + $0x1b0] sm:$0xff]
    %v2493 = vld [vmem:[%s7 + $0x1b8] sm:$0xff]
    %v2494 = vld [vmem:[%s7 + $0x1c0] sm:$0xff]
    %v2495 = vld [vmem:[%s7 + $0x1c8] sm:$0xff]
    %v2496 = vld [vmem:[%s7 + $0x1d0] sm:$0xff]
    %v2497 = vld [vmem:[%s7 + $0x1d8] sm:$0xff]
    %v2498 = vld [vmem:[%s7 + $0x1e0] sm:$0xff]
    %v2499 = vld [vmem:[%s7 + $0x1e8] sm:$0xff]
    %v2500 = vld [vmem:[%s7 + $0x1f0] sm:$0xff]
    %v2501 = vld [vmem:[%s7 + $0x1f8] sm:$0xff]
    %v2502 = vld [vmem:[%s7 + $0x200] sm:$0xff]
    %v2503 = vld [vmem:[%s7 + $0x208] sm:$0xff]
    %v2504 = vld [vmem:[%s7 + $0x210] sm:$0xff]
    %v2505 = vld [vmem:[%s7 + $0x218] sm:$0xff]
    %v2506 = vld [vmem:[%s7 + $0x220] sm:$0xff]
    %v2507 = vld [vmem:[%s7 + $0x228] sm:$0xff]
    %v2508 = vld [vmem:[%s7 + $0x230] sm:$0xff]
    %v2509 = vld [vmem:[%s7 + $0x238] sm:$0xff]
    %v2510 = vld [vmem:[%s7 + $0x240] sm:$0xff]
    %v2511 = vld [vmem:[%s7 + $0x248] sm:$0xff]
    %v2512 = vld [vmem:[%s7 + $0x250] sm:$0xff]
    %v2513 = vld [vmem:[%s7 + $0x258] sm:$0xff]
    %v2514 = vld [vmem:[%s7 + $0x260] sm:$0xff]
    %v2515 = vld [vmem:[%s7 + $0x268] sm:$0xff]
    %v2516 = vld [vmem:[%s7 + $0x270] sm:$0xff]
    %v2517 = vld [vmem:[%s7 + $0x278] sm:$0xff]
    %v2518 = vld [vmem:[%s7 + $0x280] sm:$0xff]
    %v2519 = vld [vmem:[%s7 + $0x288] sm:$0xff]
    %v2520 = vld [vmem:[%s7 + $0x290] sm:$0xff]
    %v2521 = vld [vmem:[%s7 + $0x298] sm:$0xff]
    %v2522 = vld [vmem:[%s7 + $0x2a0] sm:$0xff]
    %v2523 = vld [vmem:[%s7 + $0x2a8] sm:$0xff]
    %v2524 = vld [vmem:[%s7 + $0x2b0] sm:$0xff]
    %v2525 = vld [vmem:[%s7 + $0x2b8] sm:$0xff]
    %v2526 = vld [vmem:[%s7 + $0x2c0] sm:$0xff]
    %v2527 = vld [vmem:[%s7 + $0x2c8] sm:$0xff]
    %v2528 = vld [vmem:[%s7 + $0x2d0] sm:$0xff]
    %v2529 = vld [vmem:[%s7 + $0x2d8] sm:$0xff]
    %v2530 = vld [vmem:[%s7 + $0x2e0] sm:$0xff]
    %v2531 = vld [vmem:[%s7 + $0x2e8] sm:$0xff]
    %v2532 = vld [vmem:[%s7 + $0x2f0] sm:$0xff]
    %v2533 = vld [vmem:[%s7 + $0x2f8] sm:$0xff]
    %v2534 = vld [vmem:[%s7 + $0x300] sm:$0xff]
    %v2535 = vld [vmem:[%s7 + $0x308] sm:$0xff]
    %v2536 = vld [vmem:[%s7 + $0x310] sm:$0xff]
    %v2537 = vld [vmem:[%s7 + $0x318] sm:$0xff]
    %v2538 = vld [vmem:[%s7 + $0x320] sm:$0xff]
    %v2539 = vld [vmem:[%s7 + $0x328] sm:$0xff]
    %v2540 = vld [vmem:[%s7 + $0x330] sm:$0xff]
    %v2541 = vld [vmem:[%s7 + $0x338] sm:$0xff]
    %v2542 = vld [vmem:[%s7 + $0x340] sm:$0xff]
    %v2543 = vld [vmem:[%s7 + $0x348] sm:$0xff]
    %v2544 = vld [vmem:[%s7 + $0x350] sm:$0xff]
    %v2545 = vld [vmem:[%s7 + $0x358] sm:$0xff]
    %v2546 = vld [vmem:[%s7 + $0x360] sm:$0xff]
    %v2547 = vld [vmem:[%s7 + $0x368] sm:$0xff]
    %v2548 = vld [vmem:[%s7 + $0x370] sm:$0xff]
    %v2549 = vld [vmem:[%s7 + $0x378] sm:$0xff]
    %v2550 = vld [vmem:[%s7 + $0x380] sm:$0xff]
    %v2551 = vld [vmem:[%s7 + $0x388] sm:$0xff]
    %v2552 = vld [vmem:[%s7 + $0x390] sm:$0xff]
    %v2553 = vld [vmem:[%s7 + $0x398] sm:$0xff]
    %v2554 = vld [vmem:[%s7 + $0x3a0] sm:$0xff]
    %v2555 = vld [vmem:[%s7 + $0x3a8] sm:$0xff]
    %v2556 = vld [vmem:[%s7 + $0x3b0] sm:$0xff]
    %v2557 = vld [vmem:[%s7 + $0x3b8] sm:$0xff]
    %v2558 = vld [vmem:[%s7 + $0x3c0] sm:$0xff]
    %v2559 = vld [vmem:[%s7 + $0x3c8] sm:$0xff]
    %v2560 = vld [vmem:[%s7 + $0x3d0] sm:$0xff]
    %v2561 = vld [vmem:[%s7 + $0x3d8] sm:$0xff]
    %v2562 = vld [vmem:[%s7 + $0x3e0] sm:$0xff]
    %v2563 = vld [vmem:[%s7 + $0x3e8] sm:$0xff]
    %v2564 = vld [vmem:[%s7 + $0x3f0] sm:$0xff]
    %v2565 = vld [vmem:[%s7 + $0x3f8] sm:$0xff]
    %v2566 = vld [vmem:[%s7 + $0x400] sm:$0xff]
    %v2567 = vld [vmem:[%s7 + $0x408] sm:$0xff]
    %v2568 = vld [vmem:[%s7 + $0x410] sm:$0xff]
    %v2569 = vld [vmem:[%s7 + $0x418] sm:$0xff]
    %v2570 = vld [vmem:[%s7 + $0x420] sm:$0xff]
    %v2571 = vld [vmem:[%s7 + $0x428] sm:$0xff]
    %v2572 = vld [vmem:[%s7 + $0x430] sm:$0xff]
    %v2573 = vld [vmem:[%s7 + $0x438] sm:$0xff]
    %v2574 = vld [vmem:[%s7 + $0x440] sm:$0xff]
    %v2575 = vld [vmem:[%s7 + $0x448] sm:$0xff]
    %v2576 = vld [vmem:[%s7 + $0x450] sm:$0xff]
    %v2577 = vld [vmem:[%s7 + $0x458] sm:$0xff]
    %v2578 = vld [vmem:[%s7 + $0x460] sm:$0xff]
    %v2579 = vld [vmem:[%s7 + $0x468] sm:$0xff]
    %v2580 = vld [vmem:[%s7 + $0x470] sm:$0xff]
    %v2581 = vld [vmem:[%s7 + $0x478] sm:$0xff]
    %v2582 = vld [vmem:[%s7 + $0x480] sm:$0xff]
    %v2583 = vld [vmem:[%s7 + $0x488] sm:$0xff]
    %v2584 = vld [vmem:[%s7 + $0x490] sm:$0xff]
    %v2585 = vld [vmem:[%s7 + $0x498] sm:$0xff]
    %v2586 = vld [vmem:[%s7 + $0x4a0] sm:$0xff]
    %v2587 = vld [vmem:[%s7 + $0x4a8] sm:$0xff]
    %v2588 = vld [vmem:[%s7 + $0x4b0] sm:$0xff]
    %v2589 = vld [vmem:[%s7 + $0x4b8] sm:$0xff]
    %v2590 = vld [vmem:[%s7 + $0x4c0] sm:$0xff]
    %v2591 = vld [vmem:[%s7 + $0x4c8] sm:$0xff]
    %v2592 = vld [vmem:[%s7 + $0x4d0] sm:$0xff]
    %v2593 = vld [vmem:[%s7 + $0x4d8] sm:$0xff]
    %v2594 = vld [vmem:[%s7 + $0x4e0] sm:$0xff]
    %v2595 = vld [vmem:[%s7 + $0x4e8] sm:$0xff]
    %v2596 = vld [vmem:[%s7 + $0x4f0] sm:$0xff]
    %v2597 = vld [vmem:[%s7 + $0x4f8] sm:$0xff]
    %v2598 = vld [vmem:[%s7 + $0x500] sm:$0xff]
    %v2599 = vld [vmem:[%s7 + $0x508] sm:$0xff]
    %v2600 = vld [vmem:[%s7 + $0x510] sm:$0xff]
    %v2601 = vld [vmem:[%s7 + $0x518] sm:$0xff]
    %v2602 = vld [vmem:[%s7 + $0x520] sm:$0xff]
    %v2603 = vld [vmem:[%s7 + $0x528] sm:$0xff]
    %v2604 = vld [vmem:[%s7 + $0x530] sm:$0xff]
    %v2605 = vld [vmem:[%s7 + $0x538] sm:$0xff]
    %v2606 = vld [vmem:[%s7 + $0x540] sm:$0xff]
    %v2607 = vld [vmem:[%s7 + $0x548] sm:$0xff]
    %v2608 = vld [vmem:[%s7 + $0x550] sm:$0xff]
    %v2609 = vld [vmem:[%s7 + $0x558] sm:$0xff]
    %v2610 = vld [vmem:[%s7 + $0x560] sm:$0xff]
    %v2611 = vld [vmem:[%s7 + $0x568] sm:$0xff]
    %v2612 = vld [vmem:[%s7 + $0x570] sm:$0xff]
    %v2613 = vld [vmem:[%s7 + $0x578] sm:$0xff]
    %v2614 = vld [vmem:[%s7 + $0x580] sm:$0xff]
    %v2615 = vld [vmem:[%s7 + $0x588] sm:$0xff]
    %v2616 = vld [vmem:[%s7 + $0x590] sm:$0xff]
    %v2617 = vld [vmem:[%s7 + $0x598] sm:$0xff]
    %v2618 = vld [vmem:[%s7 + $0x5a0] sm:$0xff]
    %v2619 = vld [vmem:[%s7 + $0x5a8] sm:$0xff]
    %v2620 = vld [vmem:[%s7 + $0x5b0] sm:$0xff]
    %v2621 = vld [vmem:[%s7 + $0x5b8] sm:$0xff]
    %v2622 = vld [vmem:[%s7 + $0x5c0] sm:$0xff]
    %v2623 = vld [vmem:[%s7 + $0x5c8] sm:$0xff]
    %v2624 = vld [vmem:[%s7 + $0x5d0] sm:$0xff]
    %v2625 = vld [vmem:[%s7 + $0x5d8] sm:$0xff]
    %v2626 = vld [vmem:[%s7 + $0x5e0] sm:$0xff]
    %v2627 = vld [vmem:[%s7 + $0x5e8] sm:$0xff]
    %v2628 = vld [vmem:[%s7 + $0x5f0] sm:$0xff]
    %v2629 = vld [vmem:[%s7 + $0x5f8] sm:$0xff]
    %v2630 = vld [vmem:[%s7 + $0x600] sm:$0xff]
    %v2631 = vld [vmem:[%s7 + $0x608] sm:$0xff]
    %v2632 = vld [vmem:[%s7 + $0x610] sm:$0xff]
    %v2633 = vld [vmem:[%s7 + $0x618] sm:$0xff]
    %v2634 = vld [vmem:[%s7 + $0x620] sm:$0xff]
    %v2635 = vld [vmem:[%s7 + $0x628] sm:$0xff]
    %v2636 = vld [vmem:[%s7 + $0x630] sm:$0xff]
    %v2637 = vld [vmem:[%s7 + $0x638] sm:$0xff]
    %v2638 = vld [vmem:[%s7 + $0x640] sm:$0xff]
    %v2639 = vld [vmem:[%s7 + $0x648] sm:$0xff]
    %v2640 = vld [vmem:[%s7 + $0x650] sm:$0xff]
    %v2641 = vld [vmem:[%s7 + $0x658] sm:$0xff]
    %v2642 = vld [vmem:[%s7 + $0x660] sm:$0xff]
    %v2643 = vld [vmem:[%s7 + $0x668] sm:$0xff]
    %v2644 = vld [vmem:[%s7 + $0x670] sm:$0xff]
    %v2645 = vld [vmem:[%s7 + $0x678] sm:$0xff]
    %v2646 = vld [vmem:[%s7 + $0x680] sm:$0xff]
    %v2647 = vld [vmem:[%s7 + $0x688] sm:$0xff]
    %v2648 = vld [vmem:[%s7 + $0x690] sm:$0xff]
    %v2649 = vld [vmem:[%s7 + $0x698] sm:$0xff]
    %v2650 = vld [vmem:[%s7 + $0x6a0] sm:$0xff]
    %v2651 = vld [vmem:[%s7 + $0x6a8] sm:$0xff]
    %v2652 = vld [vmem:[%s7 + $0x6b0] sm:$0xff]
    %v2653 = vld [vmem:[%s7 + $0x6b8] sm:$0xff]
    %v2654 = vld [vmem:[%s7 + $0x6c0] sm:$0xff]
    %v2655 = vld [vmem:[%s7 + $0x6c8] sm:$0xff]
    %v2656 = vld [vmem:[%s7 + $0x6d0] sm:$0xff]
    %v2657 = vld [vmem:[%s7 + $0x6d8] sm:$0xff]
    %v2658 = vld [vmem:[%s7 + $0x6e0] sm:$0xff]
    %v2659 = vld [vmem:[%s7 + $0x6e8] sm:$0xff]
    %v2660 = vld [vmem:[%s7 + $0x6f0] sm:$0xff]
    %v2661 = vld [vmem:[%s7 + $0x6f8] sm:$0xff]
    %v2662 = vld [vmem:[%s7 + $0x700] sm:$0xff]
    %v2663 = vld [vmem:[%s7 + $0x708] sm:$0xff]
    %v2664 = vld [vmem:[%s7 + $0x710] sm:$0xff]
    %v2665 = vld [vmem:[%s7 + $0x718] sm:$0xff]
    %v2666 = vld [vmem:[%s7 + $0x720] sm:$0xff]
    %v2667 = vld [vmem:[%s7 + $0x728] sm:$0xff]
    %v2668 = vld [vmem:[%s7 + $0x730] sm:$0xff]
    %v2669 = vld [vmem:[%s7 + $0x738] sm:$0xff]
    %v2670 = vld [vmem:[%s7 + $0x740] sm:$0xff]
    %v2671 = vld [vmem:[%s7 + $0x748] sm:$0xff]
    %v2672 = vld [vmem:[%s7 + $0x750] sm:$0xff]
    %v2673 = vld [vmem:[%s7 + $0x758] sm:$0xff]
    %v2674 = vld [vmem:[%s7 + $0x760] sm:$0xff]
    %v2675 = vld [vmem:[%s7 + $0x768] sm:$0xff]
    %v2676 = vld [vmem:[%s7 + $0x770] sm:$0xff]
    %v2677 = vld [vmem:[%s7 + $0x778] sm:$0xff]
    %v2678 = vld [vmem:[%s7 + $0x780] sm:$0xff]
    %v2679 = vld [vmem:[%s7 + $0x788] sm:$0xff]
    %v2680 = vld [vmem:[%s7 + $0x790] sm:$0xff]
    %v2681 = vld [vmem:[%s7 + $0x798] sm:$0xff]
    %v2682 = vld [vmem:[%s7 + $0x7a0] sm:$0xff]
    %v2683 = vld [vmem:[%s7 + $0x7a8] sm:$0xff]
    %v2684 = vld [vmem:[%s7 + $0x7b0] sm:$0xff]
    %v2685 = vld [vmem:[%s7 + $0x7b8] sm:$0xff]
    %v2686 = vld [vmem:[%s7 + $0x7c0] sm:$0xff]
    %v2687 = vld [vmem:[%s7 + $0x7c8] sm:$0xff]
    %v2688 = vld [vmem:[%s7 + $0x7d0] sm:$0xff]
    %v2689 = vld [vmem:[%s7 + $0x7d8] sm:$0xff]
    %v2690 = vld [vmem:[%s7 + $0x7e0] sm:$0xff]
    %v2691 = vld [vmem:[%s7 + $0x7e8] sm:$0xff]
    %v2692 = vld [vmem:[%s7 + $0x7f0] sm:$0xff]
    %v2693 = vld [vmem:[%s7 + $0x7f8] sm:$0xff]
    %v2694 = vld [vmem:[%s8] sm:$0x1]
    %v2696 = vlaneseq
    %v2697 = vshrl.u32 %v2696, 7
    %v2698 = vsub.s32 0, %v2697
    %v2699 = vrot.slane %v2694, %v2698
    %2701 = vmatprep.subr.mxu0 0.0
    %2702 = vmatpush1.msra.mxu0 %v2438
    %2703 = vmatprep.subr.mxu0 0.0
    %2704 = vmatpush1.msra.mxu0 %v2439
    %2705 = vmatprep.subr.mxu0 0.0
    %2706 = vmatpush1.msra.mxu0 %v2440
    %2707 = vmatprep.subr.mxu0 0.0
    %2708 = vmatpush1.msra.mxu0 %v2441
    %2709 = vmatprep.subr.mxu0 0.0
    %2710 = vmatpush1.msra.mxu0 %v2442
    %2711 = vmatprep.subr.mxu0 0.0
    %2712 = vmatpush1.msra.mxu0 %v2443
    %2713 = vmatprep.subr.mxu0 0.0
    %2714 = vmatpush1.msra.mxu0 %v2444
    %2715 = vmatprep.subr.mxu0 0.0
    %2716 = vmatpush1.msra.mxu0 %v2445
    %2717 = vmatprep.subr.mxu0 0.0
    %2718 = vmatpush1.msra.mxu0 %v2446
    %2719 = vmatprep.subr.mxu0 0.0
    %2720 = vmatpush1.msra.mxu0 %v2447
    %2721 = vmatprep.subr.mxu0 0.0
    %2722 = vmatpush1.msra.mxu0 %v2448
    %2723 = vmatprep.subr.mxu0 0.0
    %2724 = vmatpush1.msra.mxu0 %v2449
    %2725 = vmatprep.subr.mxu0 0.0
    %2726 = vmatpush1.msra.mxu0 %v2450
    %2727 = vmatprep.subr.mxu0 0.0
    %2728 = vmatpush1.msra.mxu0 %v2451
    %2729 = vmatprep.subr.mxu0 0.0
    %2730 = vmatpush1.msra.mxu0 %v2452
    %2731 = vmatprep.subr.mxu0 0.0
    %2732 = vmatpush1.msra.mxu0 %v2453
    %2733 = vmatprep.subr.mxu0 0.0
    %2734 = vmatpush1.msra.mxu0 %v2454
    %2735 = vmatprep.subr.mxu0 0.0
    %2736 = vmatpush1.msra.mxu0 %v2455
    %2737 = vmatprep.subr.mxu0 0.0
    %2738 = vmatpush1.msra.mxu0 %v2456
    %2739 = vmatprep.subr.mxu0 0.0
    %2740 = vmatpush1.msra.mxu0 %v2457
    %2741 = vmatprep.subr.mxu0 0.0
    %2742 = vmatpush1.msra.mxu0 %v2458
    %2743 = vmatprep.subr.mxu0 0.0
    %2744 = vmatpush1.msra.mxu0 %v2459
    %2745 = vmatprep.subr.mxu0 0.0
    %2746 = vmatpush1.msra.mxu0 %v2460
    %2747 = vmatprep.subr.mxu0 0.0
    %2748 = vmatpush1.msra.mxu0 %v2461
    %2749 = vmatprep.subr.mxu0 0.0
    %2750 = vmatpush1.msra.mxu0 %v2462
    %2751 = vmatprep.subr.mxu0 0.0
    %2752 = vmatpush1.msra.mxu0 %v2463
    %2753 = vmatprep.subr.mxu0 0.0
    %2754 = vmatpush1.msra.mxu0 %v2464
    %2755 = vmatprep.subr.mxu0 0.0
    %2756 = vmatpush1.msra.mxu0 %v2465
    %2757 = vmatprep.subr.mxu0 0.0
    %2758 = vmatpush1.msra.mxu0 %v2466
    %2759 = vmatprep.subr.mxu0 0.0
    %2760 = vmatpush1.msra.mxu0 %v2467
    %2761 = vmatprep.subr.mxu0 0.0
    %2762 = vmatpush1.msra.mxu0 %v2468
    %2763 = vmatprep.subr.mxu0 0.0
    %2764 = vmatpush1.msra.mxu0 %v2469
    %2765 = vmatprep.mubr.f32.mxu0 %v2407
    %2766 = vmatmul.mubr.f32.gmra.mrb[0].mxu0 %v2406
    %v2767 = vpop.f32.mrb[0].mxu0
    %v2768 = vadd.f32 %v2699, %v2767
    %v2769 = vpop.f32.mrb[0].mxu0
    %2770 = vmatprep.mubr.f32.mxu0 %v2423
    %2771 = vmatmul.mubr.f32.gmra.mrb[0].mxu0 %v2422
    %v2772 = vpop.f32.mrb[0].mxu0
    %v2773 = vadd.f32 %v2699, %v2772
    %v2774 = vpop.f32.mrb[0].mxu0
    %2775 = vdwg.mxu0
    %2776 = vmatprep.subr.mxu0 0.0
    %2777 = vmatpush1.msra.mxu0 %v2470
    %2778 = vmatprep.subr.mxu0 0.0
    %2779 = vmatpush1.msra.mxu0 %v2471
    %2780 = vmatprep.subr.mxu0 0.0
    %2781 = vmatpush1.msra.mxu0 %v2472
    %2782 = vmatprep.subr.mxu0 0.0
    %2783 = vmatpush1.msra.mxu0 %v2473
    %2784 = vmatprep.subr.mxu0 0.0
    %2785 = vmatpush1.msra.mxu0 %v2474
    %2786 = vmatprep.subr.mxu0 0.0
    %2787 = vmatpush1.msra.mxu0 %v2475
    %2788 = vmatprep.subr.mxu0 0.0
    %2789 = vmatpush1.msra.mxu0 %v2476
    %2790 = vmatprep.subr.mxu0 0.0
    %2791 = vmatpush1.msra.mxu0 %v2477
    %2792 = vmatprep.subr.mxu0 0.0
    %2793 = vmatpush1.msra.mxu0 %v2478
    %2794 = vmatprep.subr.mxu0 0.0
    %2795 = vmatpush1.msra.mxu0 %v2479
    %2796 = vmatprep.subr.mxu0 0.0
    %2797 = vmatpush1.msra.mxu0 %v2480
    %2798 = vmatprep.subr.mxu0 0.0
    %2799 = vmatpush1.msra.mxu0 %v2481
    %2800 = vmatprep.subr.mxu0 0.0
    %2801 = vmatpush1.msra.mxu0 %v2482
    %2802 = vmatprep.subr.mxu0 0.0
    %2803 = vmatpush1.msra.mxu0 %v2483
    %2804 = vmatprep.subr.mxu0 0.0
    %2805 = vmatpush1.msra.mxu0 %v2484
    %2806 = vmatprep.subr.mxu0 0.0
    %2807 = vmatpush1.msra.mxu0 %v2485
    %2808 = vmatprep.subr.mxu0 0.0
    %2809 = vmatpush1.msra.mxu0 %v2486
    %2810 = vmatprep.subr.mxu0 0.0
    %2811 = vmatpush1.msra.mxu0 %v2487
    %2812 = vmatprep.subr.mxu0 0.0
    %2813 = vmatpush1.msra.mxu0 %v2488
    %2814 = vmatprep.subr.mxu0 0.0
    %2815 = vmatpush1.msra.mxu0 %v2489
    %2816 = vmatprep.subr.mxu0 0.0
    %2817 = vmatpush1.msra.mxu0 %v2490
    %2818 = vmatprep.subr.mxu0 0.0
    %2819 = vmatpush1.msra.mxu0 %v2491
    %2820 = vmatprep.subr.mxu0 0.0
    %2821 = vmatpush1.msra.mxu0 %v2492
    %2822 = vmatprep.subr.mxu0 0.0
    %2823 = vmatpush1.msra.mxu0 %v2493
    %2824 = vmatprep.subr.mxu0 0.0
    %2825 = vmatpush1.msra.mxu0 %v2494
    %2826 = vmatprep.subr.mxu0 0.0
    %2827 = vmatpush1.msra.mxu0 %v2495
    %2828 = vmatprep.subr.mxu0 0.0
    %2829 = vmatpush1.msra.mxu0 %v2496
    %2830 = vmatprep.subr.mxu0 0.0
    %2831 = vmatpush1.msra.mxu0 %v2497
    %2832 = vmatprep.subr.mxu0 0.0
    %2833 = vmatpush1.msra.mxu0 %v2498
    %2834 = vmatprep.subr.mxu0 0.0
    %2835 = vmatpush1.msra.mxu0 %v2499
    %2836 = vmatprep.subr.mxu0 0.0
    %2837 = vmatpush1.msra.mxu0 %v2500
    %2838 = vmatprep.subr.mxu0 0.0
    %2839 = vmatpush1.msra.mxu0 %v2501
    %2840 = vmatprep.mubr.f32.mxu0 %v2409
    %2841 = vmatmul.mubr.f32.gmra.mrb[0].mxu0 %v2408
    %v2842 = vpop.f32.mrb[0].mxu0
    %v2843 = vadd.f32 %v2768, %v2842
    %v2844 = vpop.f32.mrb[0].mxu0
    %2845 = vmatprep.mubr.f32.mxu0 %v2425
    %2846 = vmatmul.mubr.f32.gmra.mrb[0].mxu0 %v2424
    %v2847 = vpop.f32.mrb[0].mxu0
    %v2848 = vadd.f32 %v2773, %v2847
    %v2849 = vpop.f32.mrb[0].mxu0
    %2850 = vdwg.mxu0
    %2851 = vmatprep.subr.mxu0 0.0
    %2852 = vmatpush1.msra.mxu0 %v2502
    %2853 = vmatprep.subr.mxu0 0.0
    %2854 = vmatpush1.msra.mxu0 %v2503
    %2855 = vmatprep.subr.mxu0 0.0
    %2856 = vmatpush1.msra.mxu0 %v2504
    %2857 = vmatprep.subr.mxu0 0.0
    %2858 = vmatpush1.msra.mxu0 %v2505
    %2859 = vmatprep.subr.mxu0 0.0
    %2860 = vmatpush1.msra.mxu0 %v2506
    %2861 = vmatprep.subr.mxu0 0.0
    %2862 = vmatpush1.msra.mxu0 %v2507
    %2863 = vmatprep.subr.mxu0 0.0
    %2864 = vmatpush1.msra.mxu0 %v2508
    %2865 = vmatprep.subr.mxu0 0.0
    %2866 = vmatpush1.msra.mxu0 %v2509
    %2867 = vmatprep.subr.mxu0 0.0
    %2868 = vmatpush1.msra.mxu0 %v2510
    %2869 = vmatprep.subr.mxu0 0.0
    %2870 = vmatpush1.msra.mxu0 %v2511
    %2871 = vmatprep.subr.mxu0 0.0
    %2872 = vmatpush1.msra.mxu0 %v2512
    %2873 = vmatprep.subr.mxu0 0.0
    %2874 = vmatpush1.msra.mxu0 %v2513
    %2875 = vmatprep.subr.mxu0 0.0
    %2876 = vmatpush1.msra.mxu0 %v2514
    %2877 = vmatprep.subr.mxu0 0.0
    %2878 = vmatpush1.msra.mxu0 %v2515
    %2879 = vmatprep.subr.mxu0 0.0
    %2880 = vmatpush1.msra.mxu0 %v2516
    %2881 = vmatprep.subr.mxu0 0.0
    %2882 = vmatpush1.msra.mxu0 %v2517
    %2883 = vmatprep.subr.mxu0 0.0
    %2884 = vmatpush1.msra.mxu0 %v2518
    %2885 = vmatprep.subr.mxu0 0.0
    %2886 = vmatpush1.msra.mxu0 %v2519
    %2887 = vmatprep.subr.mxu0 0.0
    %2888 = vmatpush1.msra.mxu0 %v2520
    %2889 = vmatprep.subr.mxu0 0.0
    %2890 = vmatpush1.msra.mxu0 %v2521
    %2891 = vmatprep.subr.mxu0 0.0
    %2892 = vmatpush1.msra.mxu0 %v2522
    %2893 = vmatprep.subr.mxu0 0.0
    %2894 = vmatpush1.msra.mxu0 %v2523
    %2895 = vmatprep.subr.mxu0 0.0
    %2896 = vmatpush1.msra.mxu0 %v2524
    %2897 = vmatprep.subr.mxu0 0.0
    %2898 = vmatpush1.msra.mxu0 %v2525
    %2899 = vmatprep.subr.mxu0 0.0
    %2900 = vmatpush1.msra.mxu0 %v2526
    %2901 = vmatprep.subr.mxu0 0.0
    %2902 = vmatpush1.msra.mxu0 %v2527
    %2903 = vmatprep.subr.mxu0 0.0
    %2904 = vmatpush1.msra.mxu0 %v2528
    %2905 = vmatprep.subr.mxu0 0.0
    %2906 = vmatpush1.msra.mxu0 %v2529
    %2907 = vmatprep.subr.mxu0 0.0
    %2908 = vmatpush1.msra.mxu0 %v2530
    %2909 = vmatprep.subr.mxu0 0.0
    %2910 = vmatpush1.msra.mxu0 %v2531
    %2911 = vmatprep.subr.mxu0 0.0
    %2912 = vmatpush1.msra.mxu0 %v2532
    %2913 = vmatprep.subr.mxu0 0.0
    %2914 = vmatpush1.msra.mxu0 %v2533
    %2915 = vmatprep.mubr.f32.mxu0 %v2411
    %2916 = vmatmul.mubr.f32.gmra.mrb[0].mxu0 %v2410
    %v2917 = vpop.f32.mrb[0].mxu0
    %v2918 = vadd.f32 %v2843, %v2917
    %v2919 = vpop.f32.mrb[0].mxu0
    %2920 = vmatprep.mubr.f32.mxu0 %v2427
    %2921 = vmatmul.mubr.f32.gmra.mrb[0].mxu0 %v2426
    %v2922 = vpop.f32.mrb[0].mxu0
    %v2923 = vadd.f32 %v2848, %v2922
    %v2924 = vpop.f32.mrb[0].mxu0
    %2925 = vdwg.mxu0
    %2926 = vmatprep.subr.mxu0 0.0
    %2927 = vmatpush1.msra.mxu0 %v2534
    %2928 = vmatprep.subr.mxu0 0.0
    %2929 = vmatpush1.msra.mxu0 %v2535
    %2930 = vmatprep.subr.mxu0 0.0
    %2931 = vmatpush1.msra.mxu0 %v2536
    %2932 = vmatprep.subr.mxu0 0.0
    %2933 = vmatpush1.msra.mxu0 %v2537
    %2934 = vmatprep.subr.mxu0 0.0
    %2935 = vmatpush1.msra.mxu0 %v2538
    %2936 = vmatprep.subr.mxu0 0.0
    %2937 = vmatpush1.msra.mxu0 %v2539
    %2938 = vmatprep.subr.mxu0 0.0
    %2939 = vmatpush1.msra.mxu0 %v2540
    %2940 = vmatprep.subr.mxu0 0.0
    %2941 = vmatpush1.msra.mxu0 %v2541
    %2942 = vmatprep.subr.mxu0 0.0
    %2943 = vmatpush1.msra.mxu0 %v2542
    %2944 = vmatprep.subr.mxu0 0.0
    %2945 = vmatpush1.msra.mxu0 %v2543
    %2946 = vmatprep.subr.mxu0 0.0
    %2947 = vmatpush1.msra.mxu0 %v2544
    %2948 = vmatprep.subr.mxu0 0.0
    %2949 = vmatpush1.msra.mxu0 %v2545
    %2950 = vmatprep.subr.mxu0 0.0
    %2951 = vmatpush1.msra.mxu0 %v2546
    %2952 = vmatprep.subr.mxu0 0.0
    %2953 = vmatpush1.msra.mxu0 %v2547
    %2954 = vmatprep.subr.mxu0 0.0
    %2955 = vmatpush1.msra.mxu0 %v2548
    %2956 = vmatprep.subr.mxu0 0.0
    %2957 = vmatpush1.msra.mxu0 %v2549
    %2958 = vmatprep.subr.mxu0 0.0
    %2959 = vmatpush1.msra.mxu0 %v2550
    %2960 = vmatprep.subr.mxu0 0.0
    %2961 = vmatpush1.msra.mxu0 %v2551
    %2962 = vmatprep.subr.mxu0 0.0
    %2963 = vmatpush1.msra.mxu0 %v2552
    %2964 = vmatprep.subr.mxu0 0.0
    %2965 = vmatpush1.msra.mxu0 %v2553
    %2966 = vmatprep.subr.mxu0 0.0
    %2967 = vmatpush1.msra.mxu0 %v2554
    %2968 = vmatprep.subr.mxu0 0.0
    %2969 = vmatpush1.msra.mxu0 %v2555
    %2970 = vmatprep.subr.mxu0 0.0
    %2971 = vmatpush1.msra.mxu0 %v2556
    %2972 = vmatprep.subr.mxu0 0.0
    %2973 = vmatpush1.msra.mxu0 %v2557
    %2974 = vmatprep.subr.mxu0 0.0
    %2975 = vmatpush1.msra.mxu0 %v2558
    %2976 = vmatprep.subr.mxu0 0.0
    %2977 = vmatpush1.msra.mxu0 %v2559
    %2978 = vmatprep.subr.mxu0 0.0
    %2979 = vmatpush1.msra.mxu0 %v2560
    %2980 = vmatprep.subr.mxu0 0.0
    %2981 = vmatpush1.msra.mxu0 %v2561
    %2982 = vmatprep.subr.mxu0 0.0
    %2983 = vmatpush1.msra.mxu0 %v2562
    %2984 = vmatprep.subr.mxu0 0.0
    %2985 = vmatpush1.msra.mxu0 %v2563
    %2986 = vmatprep.subr.mxu0 0.0
    %2987 = vmatpush1.msra.mxu0 %v2564
    %2988 = vmatprep.subr.mxu0 0.0
    %2989 = vmatpush1.msra.mxu0 %v2565
    %2990 = vmatprep.mubr.f32.mxu0 %v2413
    %2991 = vmatmul.mubr.f32.gmra.mrb[0].mxu0 %v2412
    %v2992 = vpop.f32.mrb[0].mxu0
    %v2993 = vadd.f32 %v2918, %v2992
    %v2994 = vpop.f32.mrb[0].mxu0
    %2995 = vmatprep.mubr.f32.mxu0 %v2429
    %2996 = vmatmul.mubr.f32.gmra.mrb[0].mxu0 %v2428
    %v2997 = vpop.f32.mrb[0].mxu0
    %v2998 = vadd.f32 %v2923, %v2997
    %v2999 = vpop.f32.mrb[0].mxu0
    %3000 = vdwg.mxu0
    %3001 = vmatprep.subr.mxu0 0.0
    %3002 = vmatpush1.msra.mxu0 %v2566
    %3003 = vmatprep.subr.mxu0 0.0
    %3004 = vmatpush1.msra.mxu0 %v2567
    %3005 = vmatprep.subr.mxu0 0.0
    %3006 = vmatpush1.msra.mxu0 %v2568
    %3007 = vmatprep.subr.mxu0 0.0
    %3008 = vmatpush1.msra.mxu0 %v2569
    %3009 = vmatprep.subr.mxu0 0.0
    %3010 = vmatpush1.msra.mxu0 %v2570
    %3011 = vmatprep.subr.mxu0 0.0
    %3012 = vmatpush1.msra.mxu0 %v2571
    %3013 = vmatprep.subr.mxu0 0.0
    %3014 = vmatpush1.msra.mxu0 %v2572
    %3015 = vmatprep.subr.mxu0 0.0
    %3016 = vmatpush1.msra.mxu0 %v2573
    %3017 = vmatprep.subr.mxu0 0.0
    %3018 = vmatpush1.msra.mxu0 %v2574
    %3019 = vmatprep.subr.mxu0 0.0
    %3020 = vmatpush1.msra.mxu0 %v2575
    %3021 = vmatprep.subr.mxu0 0.0
    %3022 = vmatpush1.msra.mxu0 %v2576
    %3023 = vmatprep.subr.mxu0 0.0
    %3024 = vmatpush1.msra.mxu0 %v2577
    %3025 = vmatprep.subr.mxu0 0.0
    %3026 = vmatpush1.msra.mxu0 %v2578
    %3027 = vmatprep.subr.mxu0 0.0
    %3028 = vmatpush1.msra.mxu0 %v2579
    %3029 = vmatprep.subr.mxu0 0.0
    %3030 = vmatpush1.msra.mxu0 %v2580
    %3031 = vmatprep.subr.mxu0 0.0
    %3032 = vmatpush1.msra.mxu0 %v2581
    %3033 = vmatprep.subr.mxu0 0.0
    %3034 = vmatpush1.msra.mxu0 %v2582
    %3035 = vmatprep.subr.mxu0 0.0
    %3036 = vmatpush1.msra.mxu0 %v2583
    %3037 = vmatprep.subr.mxu0 0.0
    %3038 = vmatpush1.msra.mxu0 %v2584
    %3039 = vmatprep.subr.mxu0 0.0
    %3040 = vmatpush1.msra.mxu0 %v2585
    %3041 = vmatprep.subr.mxu0 0.0
    %3042 = vmatpush1.msra.mxu0 %v2586
    %3043 = vmatprep.subr.mxu0 0.0
    %3044 = vmatpush1.msra.mxu0 %v2587
    %3045 = vmatprep.subr.mxu0 0.0
    %3046 = vmatpush1.msra.mxu0 %v2588
    %3047 = vmatprep.subr.mxu0 0.0
    %3048 = vmatpush1.msra.mxu0 %v2589
    %3049 = vmatprep.subr.mxu0 0.0
    %3050 = vmatpush1.msra.mxu0 %v2590
    %3051 = vmatprep.subr.mxu0 0.0
    %3052 = vmatpush1.msra.mxu0 %v2591
    %3053 = vmatprep.subr.mxu0 0.0
    %3054 = vmatpush1.msra.mxu0 %v2592
    %3055 = vmatprep.subr.mxu0 0.0
    %3056 = vmatpush1.msra.mxu0 %v2593
    %3057 = vmatprep.subr.mxu0 0.0
    %3058 = vmatpush1.msra.mxu0 %v2594
    %3059 = vmatprep.subr.mxu0 0.0
    %3060 = vmatpush1.msra.mxu0 %v2595
    %3061 = vmatprep.subr.mxu0 0.0
    %3062 = vmatpush1.msra.mxu0 %v2596
    %3063 = vmatprep.subr.mxu0 0.0
    %3064 = vmatpush1.msra.mxu0 %v2597
    %3065 = vmatprep.mubr.f32.mxu0 %v2415
    %3066 = vmatmul.mubr.f32.gmra.mrb[0].mxu0 %v2414
    %v3067 = vpop.f32.mrb[0].mxu0
    %v3068 = vadd.f32 %v2993, %v3067
    %v3069 = vpop.f32.mrb[0].mxu0
    %3070 = vmatprep.mubr.f32.mxu0 %v2431
    %3071 = vmatmul.mubr.f32.gmra.mrb[0].mxu0 %v2430
    %v3072 = vpop.f32.mrb[0].mxu0
    %v3073 = vadd.f32 %v2998, %v3072
    %v3074 = vpop.f32.mrb[0].mxu0
    %3075 = vdwg.mxu0
    %3076 = vmatprep.subr.mxu0 0.0
    %3077 = vmatpush1.msra.mxu0 %v2598
    %3078 = vmatprep.subr.mxu0 0.0
    %3079 = vmatpush1.msra.mxu0 %v2599
    %3080 = vmatprep.subr.mxu0 0.0
    %3081 = vmatpush1.msra.mxu0 %v2600
    %3082 = vmatprep.subr.mxu0 0.0
    %3083 = vmatpush1.msra.mxu0 %v2601
    %3084 = vmatprep.subr.mxu0 0.0
    %3085 = vmatpush1.msra.mxu0 %v2602
    %3086 = vmatprep.subr.mxu0 0.0
    %3087 = vmatpush1.msra.mxu0 %v2603
    %3088 = vmatprep.subr.mxu0 0.0
    %3089 = vmatpush1.msra.mxu0 %v2604
    %3090 = vmatprep.subr.mxu0 0.0
    %3091 = vmatpush1.msra.mxu0 %v2605
    %3092 = vmatprep.subr.mxu0 0.0
    %3093 = vmatpush1.msra.mxu0 %v2606
    %3094 = vmatprep.subr.mxu0 0.0
    %3095 = vmatpush1.msra.mxu0 %v2607
    %3096 = vmatprep.subr.mxu0 0.0
    %3097 = vmatpush1.msra.mxu0 %v2608
    %3098 = vmatprep.subr.mxu0 0.0
    %3099 = vmatpush1.msra.mxu0 %v2609
    %3100 = vmatprep.subr.mxu0 0.0
    %3101 = vmatpush1.msra.mxu0 %v2610
    %3102 = vmatprep.subr.mxu0 0.0
    %3103 = vmatpush1.msra.mxu0 %v2611
    %3104 = vmatprep.subr.mxu0 0.0
    %3105 = vmatpush1.msra.mxu0 %v2612
    %3106 = vmatprep.subr.mxu0 0.0
    %3107 = vmatpush1.msra.mxu0 %v2613
    %3108 = vmatprep.subr.mxu0 0.0
    %3109 = vmatpush1.msra.mxu0 %v2614
    %3110 = vmatprep.subr.mxu0 0.0
    %3111 = vmatpush1.msra.mxu0 %v2615
    %3112 = vmatprep.subr.mxu0 0.0
    %3113 = vmatpush1.msra.mxu0 %v2616
    %3114 = vmatprep.subr.mxu0 0.0
    %3115 = vmatpush1.msra.mxu0 %v2617
    %3116 = vmatprep.subr.mxu0 0.0
    %3117 = vmatpush1.msra.mxu0 %v2618
    %3118 = vmatprep.subr.mxu0 0.0
    %3119 = vmatpush1.msra.mxu0 %v2619
    %3120 = vmatprep.subr.mxu0 0.0
    %3121 = vmatpush1.msra.mxu0 %v2620
    %3122 = vmatprep.subr.mxu0 0.0
    %3123 = vmatpush1.msra.mxu0 %v2621
    %3124 = vmatprep.subr.mxu0 0.0
    %3125 = vmatpush1.msra.mxu0 %v2622
    %3126 = vmatprep.subr.mxu0 0.0
    %3127 = vmatpush1.msra.mxu0 %v2623
    %3128 = vmatprep.subr.mxu0 0.0
    %3129 = vmatpush1.msra.mxu0 %v2624
    %3130 = vmatprep.subr.mxu0 0.0
    %3131 = vmatpush1.msra.mxu0 %v2625
    %3132 = vmatprep.subr.mxu0 0.0
    %3133 = vmatpush1.msra.mxu0 %v2626
    %3134 = vmatprep.subr.mxu0 0.0
    %3135 = vmatpush1.msra.mxu0 %v2627
    %3136 = vmatprep.subr.mxu0 0.0
    %3137 = vmatpush1.msra.mxu0 %v2628
    %3138 = vmatprep.subr.mxu0 0.0
    %3139 = vmatpush1.msra.mxu0 %v2629
    %3140 = vmatprep.mubr.f32.mxu0 %v2417
    %3141 = vmatmul.mubr.f32.gmra.mrb[0].mxu0 %v2416
    %v3142 = vpop.f32.mrb[0].mxu0
    %v3143 = vadd.f32 %v3068, %v3142
    %v3144 = vpop.f32.mrb[0].mxu0
    %3145 = vmatprep.mubr.f32.mxu0 %v2433
    %3146 = vmatmul.mubr.f32.gmra.mrb[0].mxu0 %v2432
    %v3147 = vpop.f32.mrb[0].mxu0
    %v3148 = vadd.f32 %v3073, %v3147
    %v3149 = vpop.f32.mrb[0].mxu0
    %3150 = vdwg.mxu0
    %3151 = vmatprep.subr.mxu0 0.0
    %3152 = vmatpush1.msra.mxu0 %v2630
    %3153 = vmatprep.subr.mxu0 0.0
    %3154 = vmatpush1.msra.mxu0 %v2631
    %3155 = vmatprep.subr.mxu0 0.0
    %3156 = vmatpush1.msra.mxu0 %v2632
    %3157 = vmatprep.subr.mxu0 0.0
    %3158 = vmatpush1.msra.mxu0 %v2633
    %3159 = vmatprep.subr.mxu0 0.0
    %3160 = vmatpush1.msra.mxu0 %v2634
    %3161 = vmatprep.subr.mxu0 0.0
    %3162 = vmatpush1.msra.mxu0 %v2635
    %3163 = vmatprep.subr.mxu0 0.0
    %3164 = vmatpush1.msra.mxu0 %v2636
    %3165 = vmatprep.subr.mxu0 0.0
    %3166 = vmatpush1.msra.mxu0 %v2637
    %3167 = vmatprep.subr.mxu0 0.0
    %3168 = vmatpush1.msra.mxu0 %v2638
    %3169 = vmatprep.subr.mxu0 0.0
    %3170 = vmatpush1.msra.mxu0 %v2639
    %3171 = vmatprep.subr.mxu0 0.0
    %3172 = vmatpush1.msra.mxu0 %v2640
    %3173 = vmatprep.subr.mxu0 0.0
    %3174 = vmatpush1.msra.mxu0 %v2641
    %3175 = vmatprep.subr.mxu0 0.0
    %3176 = vmatpush1.msra.mxu0 %v2642
    %3177 = vmatprep.subr.mxu0 0.0
    %3178 = vmatpush1.msra.mxu0 %v2643
    %3179 = vmatprep.subr.mxu0 0.0
    %3180 = vmatpush1.msra.mxu0 %v2644
    %3181 = vmatprep.subr.mxu0 0.0
    %3182 = vmatpush1.msra.mxu0 %v2645
    %3183 = vmatprep.subr.mxu0 0.0
    %3184 = vmatpush1.msra.mxu0 %v2646
    %3185 = vmatprep.subr.mxu0 0.0
    %3186 = vmatpush1.msra.mxu0 %v2647
    %3187 = vmatprep.subr.mxu0 0.0
    %3188 = vmatpush1.msra.mxu0 %v2648
    %3189 = vmatprep.subr.mxu0 0.0
    %3190 = vmatpush1.msra.mxu0 %v2649
    %3191 = vmatprep.subr.mxu0 0.0
    %3192 = vmatpush1.msra.mxu0 %v2650
    %3193 = vmatprep.subr.mxu0 0.0
    %3194 = vmatpush1.msra.mxu0 %v2651
    %3195 = vmatprep.subr.mxu0 0.0
    %3196 = vmatpush1.msra.mxu0 %v2652
    %3197 = vmatprep.subr.mxu0 0.0
    %3198 = vmatpush1.msra.mxu0 %v2653
    %3199 = vmatprep.subr.mxu0 0.0
    %3200 = vmatpush1.msra.mxu0 %v2654
    %3201 = vmatprep.subr.mxu0 0.0
    %3202 = vmatpush1.msra.mxu0 %v2655
    %3203 = vmatprep.subr.mxu0 0.0
    %3204 = vmatpush1.msra.mxu0 %v2656
    %3205 = vmatprep.subr.mxu0 0.0
    %3206 = vmatpush1.msra.mxu0 %v2657
    %3207 = vmatprep.subr.mxu0 0.0
    %3208 = vmatpush1.msra.mxu0 %v2658
    %3209 = vmatprep.subr.mxu0 0.0
    %3210 = vmatpush1.msra.mxu0 %v2659
    %3211 = vmatprep.subr.mxu0 0.0
    %3212 = vmatpush1.msra.mxu0 %v2660
    %3213 = vmatprep.subr.mxu0 0.0
    %3214 = vmatpush1.msra.mxu0 %v2661
    %3215 = vmatprep.mubr.f32.mxu0 %v2419
    %3216 = vmatmul.mubr.f32.gmra.mrb[0].mxu0 %v2418
    %v3217 = vpop.f32.mrb[0].mxu0
    %v3218 = vadd.f32 %v3143, %v3217
    %v3219 = vpop.f32.mrb[0].mxu0
    %3220 = vmatprep.mubr.f32.mxu0 %v2435
    %3221 = vmatmul.mubr.f32.gmra.mrb[0].mxu0 %v2434
    %v3222 = vpop.f32.mrb[0].mxu0
    %v3223 = vadd.f32 %v3148, %v3222
    %v3224 = vpop.f32.mrb[0].mxu0
    %3225 = vdwg.mxu0
    %3226 = vmatprep.subr.mxu0 0.0
    %3227 = vmatpush1.msra.mxu0 %v2662
    %3228 = vmatprep.subr.mxu0 0.0
    %3229 = vmatpush1.msra.mxu0 %v2663
    %3230 = vmatprep.subr.mxu0 0.0
    %3231 = vmatpush1.msra.mxu0 %v2664
    %3232 = vmatprep.subr.mxu0 0.0
    %3233 = vmatpush1.msra.mxu0 %v2665
    %3234 = vmatprep.subr.mxu0 0.0
    %3235 = vmatpush1.msra.mxu0 %v2666
    %3236 = vmatprep.subr.mxu0 0.0
    %3237 = vmatpush1.msra.mxu0 %v2667
    %3238 = vmatprep.subr.mxu0 0.0
    %3239 = vmatpush1.msra.mxu0 %v2668
    %3240 = vmatprep.subr.mxu0 0.0
    %3241 = vmatpush1.msra.mxu0 %v2669
    %3242 = vmatprep.subr.mxu0 0.0
    %3243 = vmatpush1.msra.mxu0 %v2670
    %3244 = vmatprep.subr.mxu0 0.0
    %3245 = vmatpush1.msra.mxu0 %v2671
    %3246 = vmatprep.subr.mxu0 0.0
    %3247 = vmatpush1.msra.mxu0 %v2672
    %3248 = vmatprep.subr.mxu0 0.0
    %3249 = vmatpush1.msra.mxu0 %v2673
    %3250 = vmatprep.subr.mxu0 0.0
    %3251 = vmatpush1.msra.mxu0 %v2674
    %3252 = vmatprep.subr.mxu0 0.0
    %3253 = vmatpush1.msra.mxu0 %v2675
    %3254 = vmatprep.subr.mxu0 0.0
    %3255 = vmatpush1.msra.mxu0 %v2676
    %3256 = vmatprep.subr.mxu0 0.0
    %3257 = vmatpush1.msra.mxu0 %v2677
    %3258 = vmatprep.subr.mxu0 0.0
    %3259 = vmatpush1.msra.mxu0 %v2678
    %3260 = vmatprep.subr.mxu0 0.0
    %3261 = vmatpush1.msra.mxu0 %v2679
    %3262 = vmatprep.subr.mxu0 0.0
    %3263 = vmatpush1.msra.mxu0 %v2680
    %3264 = vmatprep.subr.mxu0 0.0
    %3265 = vmatpush1.msra.mxu0 %v2681
    %3266 = vmatprep.subr.mxu0 0.0
    %3267 = vmatpush1.msra.mxu0 %v2682
    %3268 = vmatprep.subr.mxu0 0.0
    %3269 = vmatpush1.msra.mxu0 %v2683
    %3270 = vmatprep.subr.mxu0 0.0
    %3271 = vmatpush1.msra.mxu0 %v2684
    %3272 = vmatprep.subr.mxu0 0.0
    %3273 = vmatpush1.msra.mxu0 %v2685
    %3274 = vmatprep.subr.mxu0 0.0
    %3275 = vmatpush1.msra.mxu0 %v2686
    %3276 = vmatprep.subr.mxu0 0.0
    %3277 = vmatpush1.msra.mxu0 %v2687
    %3278 = vmatprep.subr.mxu0 0.0
    %3279 = vmatpush1.msra.mxu0 %v2688
    %3280 = vmatprep.subr.mxu0 0.0
    %3281 = vmatpush1.msra.mxu0 %v2689
    %3282 = vmatprep.subr.mxu0 0.0
    %3283 = vmatpush1.msra.mxu0 %v2690
    %3284 = vmatprep.subr.mxu0 0.0
    %3285 = vmatpush1.msra.mxu0 %v2691
    %3286 = vmatprep.subr.mxu0 0.0
    %3287 = vmatpush1.msra.mxu0 %v2692
    %3288 = vmatprep.subr.mxu0 0.0
    %3289 = vmatpush1.msra.mxu0 %v2693
    %3290 = vmatprep.mubr.f32.mxu0 %v2421
    %3291 = vmatmul.mubr.f32.gmra.mrb[0].mxu0 %v2420
    %v3292 = vpop.f32.mrb[0].mxu0
    %v3293 = vadd.f32 %v3218, %v3292
    %v3294 = vpop.f32.mrb[0].mxu0
    %3295 = vmatprep.mubr.f32.mxu0 %v2437
    %3296 = vmatmul.mubr.f32.gmra.mrb[0].mxu0 %v2436
    %v3297 = vpop.f32.mrb[0].mxu0
    %v3298 = vadd.f32 %v3223, %v3297
    %v3299 = vpop.f32.mrb[0].mxu0
    %3300 = vdwg.mxu0
    %v3301 = vadd.f32 %v1634, %v3293
    %v3302 = vadd.f32 %v1635, %v3298
    %v3303 = vsel %vm64, %v3301, 0.0
    %3304 = vadd.xlane.f32.xlu0 %v3303
    %v3305 = vpop.xlane.xlu0 %3304
    %v3306 = vsel %vm64, %v3302, 0.0
    %3307 = vadd.xlane.f32.xlu0 %v3306
    %v3308 = vpop.xlane.xlu0 %3307
    %v3309 = vmul.f32 %v3305, %v1597
    %v3310 = vmul.f32 %v3308, %v1597
    %v3311 = vsub.f32 %v3301, %v3309
    %v3312 = vsub.f32 %v3302, %v3310
    %v3313 = vmul.f32 %v3311, %v3311
    %v3314 = vmul.f32 %v3312, %v3312
    %v3315 = vsel %vm64, %v3313, 0.0
    %3316 = vadd.xlane.f32.xlu0 %v3315
    %v3317 = vpop.xlane.xlu0 %3316
    %v3318 = vsel %vm64, %v3314, 0.0
    %3319 = vadd.xlane.f32.xlu0 %v3318
    %v3320 = vpop.xlane.xlu0 %3319
    %v3321 = vmul.f32 %v3317, %v1597
    %v3322 = vmul.f32 %v3320, %v1597
    %v3323 = vadd.f32 %v3321, 1e-05
    %v3324 = vadd.f32 %v3322, 1e-05
    %v3325 = vrsqrt.pop %v3323
    %v3326 = vrsqrt.pop %v3324
    %v3327 = vmul.f32 %v3311, %v3325
    %v3328 = vmul.f32 %v3312, %v3326
    %v3329 = vld [vmem:[%s11] sm:$0x1]
    %v3331 = vlaneseq
    %v3332 = vshrl.u32 %v3331, 7
    %v3333 = vsub.s32 0, %v3332
    %v3334 = vrot.slane %v3329, %v3333
    %v3336 = vmul.f32 %v3327, %v3334
    %v3337 = vmul.f32 %v3328, %v3334
    %v3338 = vld [vmem:[%s12] sm:$0x1]
    %v3340 = vlaneseq
    %v3341 = vshrl.u32 %v3340, 7
    %v3342 = vsub.s32 0, %v3341
    %v3343 = vrot.slane %v3338, %v3342
    %v3345 = vadd.f32 %v3336, %v3343
    %v3346 = vadd.f32 %v3337, %v3343
    %v3347 = vld [vmem:[%s13] sm:$0xff]
    %v3348 = vld [vmem:[%s13 + $0x8] sm:$0xff]
    %v3349 = vld [vmem:[%s13 + $0x10] sm:$0xff]
    %v3350 = vld [vmem:[%s13 + $0x18] sm:$0xff]
    %v3351 = vld [vmem:[%s14] sm:$0x1]
    %v3353 = vlaneseq
    %v3354 = vshrl.u32 %v3353, 7
    %v3355 = vsub.s32 0, %v3354
    %v3356 = vrot.slane %v3351, %v3355
    %v3359 = vsel %vm64, %v3345, 0
    %v3362 = vsel %vm64, %v3346, 0
    %3364 = vmatprep.subr.mxu0 0.0
    %3365 = vmatpush1.msra.mxu0 %v3347
    %3366 = vmatprep.subr.mxu0 0.0
    %3367 = vmatpush1.msra.mxu0 %v3348
    %3368 = vmatprep.subr.mxu0 0.0
    %3369 = vmatpush1.msra.mxu0 %v3349
    %3370 = vmatprep.subr.mxu0 0.0
    %3371 = vmatpush1.msra.mxu0 %v3350
    %3372 = vmatprep.subr.mxu0 0.0
    %3373 = vmatpush1.msra.mxu0 0.0
    %3374 = vmatprep.subr.mxu0 0.0
    %3375 = vmatpush1.msra.mxu0 0.0
    %3376 = vmatprep.subr.mxu0 0.0
    %3377 = vmatpush1.msra.mxu0 0.0
    %3378 = vmatprep.subr.mxu0 0.0
    %3379 = vmatpush1.msra.mxu0 0.0
    %3380 = vmatprep.subr.mxu0 0.0
    %3381 = vmatpush1.msra.mxu0 0.0
    %3382 = vmatprep.subr.mxu0 0.0
    %3383 = vmatpush1.msra.mxu0 0.0
    %3384 = vmatprep.subr.mxu0 0.0
    %3385 = vmatpush1.msra.mxu0 0.0
    %3386 = vmatprep.subr.mxu0 0.0
    %3387 = vmatpush1.msra.mxu0 0.0
    %3388 = vmatprep.subr.mxu0 0.0
    %3389 = vmatpush1.msra.mxu0 0.0
    %3390 = vmatprep.subr.mxu0 0.0
    %3391 = vmatpush1.msra.mxu0 0.0
    %3392 = vmatprep.subr.mxu0 0.0
    %3393 = vmatpush1.msra.mxu0 0.0
    %3394 = vmatprep.subr.mxu0 0.0
    %3395 = vmatpush1.msra.mxu0 0.0
    %3396 = vmatprep.subr.mxu0 0.0
    %3397 = vmatpush1.msra.mxu0 0.0
    %3398 = vmatprep.subr.mxu0 0.0
    %3399 = vmatpush1.msra.mxu0 0.0
    %3400 = vmatprep.subr.mxu0 0.0
    %3401 = vmatpush1.msra.mxu0 0.0
    %3402 = vmatprep.subr.mxu0 0.0
    %3403 = vmatpush1.msra.mxu0 0.0
    %3404 = vmatprep.subr.mxu0 0.0
    %3405 = vmatpush1.msra.mxu0 0.0
    %3406 = vmatprep.subr.mxu0 0.0
    %3407 = vmatpush1.msra.mxu0 0.0
    %3408 = vmatprep.subr.mxu0 0.0
    %3409 = vmatpush1.msra.mxu0 0.0
    %3410 = vmatprep.subr.mxu0 0.0
    %3411 = vmatpush1.msra.mxu0 0.0
    %3412 = vmatprep.subr.mxu0 0.0
    %3413 = vmatpush1.msra.mxu0 0.0
    %3414 = vmatprep.subr.mxu0 0.0
    %3415 = vmatpush1.msra.mxu0 0.0
    %3416 = vmatprep.subr.mxu0 0.0
    %3417 = vmatpush1.msra.mxu0 0.0
    %3418 = vmatprep.subr.mxu0 0.0
    %3419 = vmatpush1.msra.mxu0 0.0
    %3420 = vmatprep.subr.mxu0 0.0
    %3421 = vmatpush1.msra.mxu0 0.0
    %3422 = vmatprep.subr.mxu0 0.0
    %3423 = vmatpush1.msra.mxu0 0.0
    %3424 = vmatprep.subr.mxu0 0.0
    %3425 = vmatpush1.msra.mxu0 0.0
    %3426 = vmatprep.subr.mxu0 0.0
    %3427 = vmatpush1.msra.mxu0 0.0
    %3428 = vmatprep.mubr.f32.mxu0 0.0
    %3429 = vmatmul.mubr.f32.gmra.mrb[0].mxu0 %v3359
    %v3430 = vpop.f32.mrb[0].mxu0
    %v3431 = vadd.f32 %v3356, %v3430
    %v3432 = vpop.f32.mrb[0].mxu0
    %3433 = vmatprep.mubr.f32.mxu0 0.0
    %3434 = vmatmul.mubr.f32.gmra.mrb[0].mxu0 %v3362
    %v3435 = vpop.f32.mrb[0].mxu0
    %v3436 = vadd.f32 %v3356, %v3435
    %v3437 = vpop.f32.mrb[0].mxu0
    %3438 = vdwg.mxu0
    %3439 = vst [vmem:[#allocation2] sm:$0xff] %v3431
    %3440 = vst [vmem:[#allocation2 + $0x8] sm:$0xff] %v3436
    // Predicated region
    $region62: #{tpu_custom_call.1} parent=1 // pred_check
      _
    $region63: #{tpu_custom_call.1} parent=1 // pred_check_branch
      %3442 = sbr.rel (0) target = $region65
    $region64: #{tpu_custom_call.1} parent=1 // pred_region
      %s3444 = ssub.s32 256, 256
      %3445 = vsyncadd [#allocation3], %s3444
      %s3446 = sshll.u32 [#allocation2], 4
      %s3447 = int_to_ptr.vmem [resolvable:$true] %s3446
      %3452 = dma.vmem_to_hbm [thread:$0]  %s3447, 256, %s15, [#allocation3], 128, 128, 8
    $region65: #{tpu_custom_call.1} parent=1 // pred_fallthru
      _
    // Predicated region
    $region66: #{tpu_custom_call.1} parent=1 // pred_check
      _
    $region67: #{tpu_custom_call.1} parent=1 // pred_check_branch
      %3454 = sbr.rel (0) target = $region69
    $region68: #{tpu_custom_call.1} parent=1 // pred_region
      %3455 = dma.done [#allocation3], 256
    $region69: #{tpu_custom_call.1} parent=1 // pred_fallthru
      _
    %3456 = vsyncpa [#allocation3], 1

</llo_original>
